<compile_context>
chip_gen: v6e
topology: v6e:2x2x1
jax: 0.10.0
libtpu: 0.0.40
codegen_flags: <defaults>
</compile_context>

<pallas_src>
import math

import jax
import jax.numpy as jnp
from jax.experimental import pallas as pl
from jax.experimental.pallas import tpu as pltpu

KH = 5                                      # DEFAULT_KERNEL_HEIGHT
EDGES = [26.0 / 45.0, 34.0 / 45.0, 1.0]     # EDGES_DEFAULT
STRIDES = [1, 2, 4]                         # STRIDES_DEFAULT
KWIDTHS = [KH // 2 * 2 * s + 1 for s in STRIDES]   # [5, 9, 17]


# ---------------------------------------------------------------------------
# geometry helpers (host side, trace-time)
# ---------------------------------------------------------------------------

def _strip_windows(H):
    """List of (conv_idx, row0, row1) into the lat-padded input, in module output order:
    [outer-N, mid-N, center, mid-S, outer-S].  Mirrors the PyTorch f2idx arithmetic."""
    hpad = KH // 2

    def f2idx(f, d):
        return H // 2 + hpad + int(d == 1) + d * int(H // 2 * f)

    north, south = [], []
    for i in (2, 1):                                   # dir = -1, reversed order
        a, b = sorted([f2idx(EDGES[i], -1), f2idx(EDGES[i - 1], -1)])
        north.append((i, a - hpad, b + hpad))
    for i in (1, 2):                                   # dir = +1
        a, b = sorted([f2idx(EDGES[i], 1), f2idx(EDGES[i - 1], 1)])
        south.append((i, a - hpad, b + hpad))
    center = (0, f2idx(EDGES[0], -1) - hpad, f2idx(EDGES[0], 1) + hpad)
    return north + [center] + south


def _pick_tiw(W, Cout):
    """Input columns per width tile (multiple of the coarsest stride, divides W).
    Prefer the smallest tile whose center output block is 128-lane aligned and whose
    coarsest strip's output block is still >= 128 lanes (lane-dense stores); otherwise
    fall back to one full-width tile (all blocks equal the full arrays -> always legal)."""
    smax = STRIDES[-1]
    for tiw in range(smax, W, smax):
        if W % tiw:
            continue
        if (tiw * Cout) % 128 == 0 and (tiw // smax) * Cout >= 128:
            return tiw
    return W


def _banded_weight(w_pt, stride, tiw):
    """PyTorch Conv2d weight (Cout, Cin, KH, KW) -> banded block-Toeplitz matrix of shape
    (KH*band*Cin, (tiw//stride)*Cout) matching the kernel's KH-folded lane-dense LHS,
    where band = tiw - stride + KW input columns per width tile (O(tile), independent of W)."""
    cout, cin, kh, kw = (int(d) for d in w_pt.shape)
    tw = tiw // stride
    band = tiw - stride + kw
    wk = jnp.transpose(w_pt, (2, 3, 1, 0))                  # (KH, KW, Cin, Cout)
    cols = []
    for wo in range(tw):
        top = wo * stride
        cols.append(jnp.pad(wk, ((0, 0), (top, band - kw - top), (0, 0), (0, 0))))
    wmat = jnp.stack(cols, axis=3)                          # (KH, band, Cin, tw, Cout)
    return wmat.reshape(kh * band * cin, tw * cout)


# ---------------------------------------------------------------------------
# kernel
# ---------------------------------------------------------------------------

def _make_kernel(cin, row_info):
    """row_info[ci] = (row_starts, h_out, off, band).  Refs: win, w0..w2, b0..b2, o0..o2.
    Per conv: build the KH-folded LHS (static sublane/lane slices of the resident window
    block, concatenated along K), stack the N/S hemisphere strips along M, and issue a
    single f32-accumulated bf16 MXU matmul straight into the lane-dense output block."""

    def _lhs(win_ref, r0, h_out, off, band):
        c0, c1 = off * cin, (off + band) * cin
        parts = [win_ref[r0 + ky:r0 + ky + h_out, c0:c1] for ky in range(KH)]
        return jnp.concatenate(parts, axis=-1)              # (h_out, KH*band*cin)

    def kernel(win_ref, w0, w1, w2, b0, b1, b2, o0, o1, o2):
        wrefs, brefs, orefs = (w0, w1, w2), (b0, b1, b2), (o0, o1, o2)
        for ci in range(len(STRIDES)):
            starts, h_out, off, band = row_info[ci]
            blocks = [_lhs(win_ref, r0, h_out, off, band) for r0 in starts]
            lhs = blocks[0] if len(blocks) == 1 else jnp.concatenate(blocks, axis=0)
            acc = jnp.dot(lhs, wrefs[ci][...], preferred_element_type=jnp.float32)
            orefs[ci][...] = acc + brefs[ci][...]

    return kernel


# ---------------------------------------------------------------------------
# wrapper
# ---------------------------------------------------------------------------

def to_harebrained2d_pallas(x, weights, biases, *, tiw=None):
    """x: (B, Cin, H, W) NCHW.  weights[i]: (Cout, Cin, KH, KWIDTHS[i]) (PyTorch Conv2d
    layout).  biases[i]: (Cout,).  Returns the 5 NCHW strip outputs of ToHarebrained2d."""
    B, Cin, H, W = (int(d) for d in x.shape)
    Cout = int(weights[0].shape[0])
    hpad = KH // 2
    p_max = KWIDTHS[-1] // 2
    for s in STRIDES:
        assert W % s == 0, "Needs to be a divisor, also thank the Babylonians"
    assert (H - 1) % 2 == 0, f"Height must be odd, got {H}"
    assert W >= p_max, f"Width must be >= {p_max} for the circular halo"

    if tiw is None:
        tiw = _pick_tiw(W, Cout)
    assert W % tiw == 0 and tiw % STRIDES[-1] == 0, (W, tiw)
    nwt = W // tiw                         # width tiles (extra parallel grid axis)
    Hp, WIN = H + 2 * hpad, tiw + 2 * p_max

    # ---- strip geometry (row windows into the lat-padded tensor) ----
    oN, mN, ctr, mS, oS = _strip_windows(H)
    h_o = (oN[2] - oN[1]) - (KH - 1)
    h_m = (mN[2] - mN[1]) - (KH - 1)
    h_c = (ctr[2] - ctr[1]) - (KH - 1)
    starts_per_conv = {0: (ctr[1],), 1: (mN[1], mS[1]), 2: (oN[1], oS[1])}
    houts = {0: h_c, 1: h_m, 2: h_o}
    row_info = {}
    for ci, s in enumerate(STRIDES):
        kw = KWIDTHS[ci]
        row_info[ci] = (starts_per_conv[ci], houts[ci], p_max - kw // 2, tiw - s + kw)

    # ---- single lane-dense, lat+lon padded, width-windowed bf16 input ----
    # (one HBM pass; replaces the previous 5 overlapping per-strip padded copies)
    x_nhwc = jnp.transpose(x, (0, 2, 3, 1)).astype(jnp.bfloat16)
    xlat = jnp.pad(x_nhwc, ((0, 0), (hpad, hpad), (0, 0), (0, 0)))           # zero lat pad
    xlon = jnp.concatenate([xlat[:, :, W - p_max:, :], xlat, xlat[:, :, :p_max, :]], axis=2)
    win = jnp.stack([xlon[:, :, t * tiw:t * tiw + WIN, :] for t in range(nwt)], axis=1)
    win = win.reshape(B, nwt, Hp, WIN * Cin)

    # ---- grid-invariant banded Toeplitz weights / tiled biases ----
    tws = [_banded_weight(weights[ci], STRIDES[ci], tiw).astype(jnp.bfloat16)
           for ci in range(len(STRIDES))]
    bts = [jnp.tile(biases[ci].astype(jnp.float32), (tiw // STRIDES[ci],)).reshape(1, -1)
           for ci in range(len(STRIDES))]

    out_meta = [(h_c, W // STRIDES[0], tiw // STRIDES[0]),
                (2 * h_m, W // STRIDES[1], tiw // STRIDES[1]),
                (2 * h_o, W // STRIDES[2], tiw // STRIDES[2])]
    out_shape = tuple(jax.ShapeDtypeStruct((B, rows, w_out * Cout), jnp.float32)
                      for rows, w_out, _ in out_meta)
    out_specs = tuple(pl.BlockSpec((None, rows, tw_ * Cout), lambda b, t: (b, 0, t))
                      for rows, _, tw_ in out_meta)
    win_spec = pl.BlockSpec((None, None, Hp, WIN * Cin), lambda b, t: (b, t, 0, 0))
    kernel = _make_kernel(Cin, row_info)

    # ---- VMEM budget (sized so the same tiling also fits v7x's 64 MiB physical VMEM) ----
    def _nbytes(shape, dt):
        return math.prod(int(d) for d in shape) * jnp.dtype(dt).itemsize

    def _vmem_need(wbuf):
        n = 2 * _nbytes((Hp, WIN * Cin), jnp.bfloat16)                       # window, 2-buf
        n += sum(wbuf * _nbytes(w_.shape, jnp.bfloat16) for w_ in tws)       # weights
        n += sum(wbuf * _nbytes(b_.shape, jnp.float32) for b_ in bts)        # biases
        n += sum(2 * _nbytes((rows, tw_ * Cout), jnp.float32)
                 for rows, _, tw_ in out_meta)                               # outputs, 2-buf
        return n

    kind = jax.devices()[0].device_kind.lower()
    cap = (48 if "7" in kind else 100) * 2 ** 20      # v7x: 64 MiB phys; v5e/v6e: 128 MiB

    def _run(single_buffer_weights):
        need = _vmem_need(1 if single_buffer_weights else 2)
        assert need <= cap, (need, cap, "width tile too large for this chip's VMEM")
        extra = dict(pipeline_mode=pl.Buffered(1)) if single_buffer_weights else {}
        w_specs = [pl.BlockSpec(tuple(int(d) for d in w_.shape), lambda b, t: (0, 0), **extra)
                   for w_ in tws]
        b_specs = [pl.BlockSpec(tuple(int(d) for d in b_.shape), lambda b, t: (0, 0), **extra)
                   for b_ in bts]
        return pl.pallas_call(
            kernel,
            out_shape=out_shape,
            grid=(B, nwt),
            in_specs=[win_spec] + w_specs + b_specs,
            out_specs=out_specs,
            compiler_params=pltpu.CompilerParams(
                dimension_semantics=("parallel", "parallel"),
                vmem_limit_bytes=int(min(max(32 * 2 ** 20, 2 * need), cap))),
        )(win, *tws, *bts)

    try:
        outs = _run(True)
    except Exception:
        # pl.Buffered(1) (single-buffered grid-invariant weights) is not available in every
        # jax version; fall back to default double buffering (only costs ~2x weight VMEM).
        outs = _run(False)

    # ---- split merged buffers back into the module's 5 NCHW strips ----
    def _to_nchw(o, w_out):
        return jnp.transpose(o.reshape(B, int(o.shape[1]), w_out, Cout), (0, 3, 1, 2))

    oc = _to_nchw(outs[0], W // STRIDES[0])
    om = _to_nchw(outs[1], W // STRIDES[1])
    oo = _to_nchw(outs[2], W // STRIDES[2])
    # module output order: [outer-N, mid-N, center, mid-S, outer-S]
    return [oo[:, :, :h_o, :], om[:, :, :h_m, :], oc, om[:, :, h_m:, :], oo[:, :, h_o:, :]]


# ---------------------------------------------------------------------------
# pure-JAX reference mirroring the PyTorch module
# ---------------------------------------------------------------------------

def to_harebrained2d_reference(x, weights, biases):
    B, Cin, H, W = (int(d) for d in x.shape)
    hpad = KH // 2
    xp = jnp.pad(x.astype(jnp.float32), ((0, 0), (0, 0), (hpad, hpad), (0, 0)))

    def conv(rows_nchw, ci):
        s, kw = STRIDES[ci], KWIDTHS[ci]
        p = kw // 2
        rows = jnp.concatenate([rows_nchw[..., -p:], rows_nchw, rows_nchw[..., :p]], axis=-1)
        y = jax.lax.conv_general_dilated(
            rows, weights[ci].astype(jnp.float32),
            window_strides=(1, s), padding="VALID",
            dimension_numbers=("NCHW", "OIHW", "NCHW"))
        return y + biases[ci].astype(jnp.float32)[None, :, None, None]

    return [conv(xp[:, :, r0:r1, :], ci) for (ci, r0, r1) in _strip_windows(H)]


# ---------------------------------------------------------------------------

if __name__ == "__main__":
    def _check(B, Cin, Cout, H, W, seed=0):
        keys = jax.random.split(jax.random.PRNGKey(seed), 8)
        x = jax.random.normal(keys[0], (B, Cin, H, W), jnp.float32)
        weights = [0.1 * jax.random.normal(keys[1 + i], (Cout, Cin, KH, KWIDTHS[i]),
                                           jnp.float32) for i in range(3)]
        biases = [0.1 * jax.random.normal(keys[4 + i], (Cout,), jnp.float32) for i in range(3)]

        outs = to_harebrained2d_pallas(x, weights, biases)
        outs = [jax.block_until_ready(o) for o in outs]
        refs = to_harebrained2d_reference(x, weights, biases)

        assert len(outs) == 5
        assert sum(int(o.shape[2]) for o in outs) == H
        for o, r in zip(outs, refs):
            assert o.shape == r.shape, (o.shape, r.shape)
            # bf16 MXU inputs with f32 accumulation -> tolerance sized for bf16 rounding
            if not jnp.allclose(o, r, atol=5e-2, rtol=5e-2):
                err = float(jnp.max(jnp.abs(o - r)))
                raise SystemExit(f"Pallas / reference mismatch, max abs err = {err}")

    # single width tile: every block equals the full array (always-legal layout)
    _check(B=2, Cin=4, Cout=8, H=17, W=16)
    # two width tiles (nwt=2): exercises the banded-Toeplitz / halo / multi-tile path with
    # 128-lane-aligned output blocks on every strip
    _check(B=2, Cin=4, Cout=8, H=17, W=128, seed=1)
    print("KERNEL_OK")
</pallas_src>

<mosaic_0001>
module attributes {stable_mosaic.version = 11 : i64} {
  func.func @kernel(%arg0: i32, %arg1: i32, %arg2: memref<1x1x21x128xbf16, #tpu.memory_space<vmem>>, %arg3: memref<400x128xbf16, #tpu.memory_space<vmem>>, %arg4: memref<460x64xbf16, #tpu.memory_space<vmem>>, %arg5: memref<580x32xbf16, #tpu.memory_space<vmem>>, %arg6: memref<1x128xf32, #tpu.memory_space<vmem>>, %arg7: memref<1x64xf32, #tpu.memory_space<vmem>>, %arg8: memref<1x32xf32, #tpu.memory_space<vmem>>, %arg9: memref<1x9x128xf32, #tpu.memory_space<vmem>>, %arg10: memref<1x4x64xf32, #tpu.memory_space<vmem>>, %arg11: memref<1x4x32xf32, #tpu.memory_space<vmem>>) attributes {dimension_semantics = [#tpu.dimension_semantics<parallel>, #tpu.dimension_semantics<parallel>], iteration_bounds = array<i64: 2, 1>, scalar_prefetch = 0 : i64, scratch_operands = 0 : i64, tpu.core_type = #tpu.core_type<tc>, window_params = [{transform_indices = @transform_0, window_bounds = array<i64: 1, 1, 21, 128>}, {pipeline_mode = #tpu.pipeline_mode<synchronous>, transform_indices = @transform_1, window_bounds = array<i64: 400, 128>}, {pipeline_mode = #tpu.pipeline_mode<synchronous>, transform_indices = @transform_2, window_bounds = array<i64: 460, 64>}, {pipeline_mode = #tpu.pipeline_mode<synchronous>, transform_indices = @transform_3, window_bounds = array<i64: 580, 32>}, {pipeline_mode = #tpu.pipeline_mode<synchronous>, transform_indices = @transform_4, window_bounds = array<i64: 1, 128>}, {pipeline_mode = #tpu.pipeline_mode<synchronous>, transform_indices = @transform_5, window_bounds = array<i64: 1, 64>}, {pipeline_mode = #tpu.pipeline_mode<synchronous>, transform_indices = @transform_6, window_bounds = array<i64: 1, 32>}, {transform_indices = @transform_7, window_bounds = array<i64: 1, 9, 128>}, {transform_indices = @transform_8, window_bounds = array<i64: 1, 4, 64>}, {transform_indices = @transform_9, window_bounds = array<i64: 1, 4, 32>}]} {
    %c0 = arith.constant 0 : index
    %c0_0 = arith.constant 0 : index
    %c4 = arith.constant 4 : index
    %c24 = arith.constant 24 : index
    %0 = vector.load %arg2[%c0, %c0_0, %c4, %c24] : memref<1x1x21x128xbf16, #tpu.memory_space<vmem>>, vector<1x1x9x80xbf16>
    %1 = vector.shape_cast %0 : vector<1x1x9x80xbf16> to vector<9x80xbf16>
    %c0_1 = arith.constant 0 : index
    %c0_2 = arith.constant 0 : index
    %c5 = arith.constant 5 : index
    %c24_3 = arith.constant 24 : index
    %2 = vector.load %arg2[%c0_1, %c0_2, %c5, %c24_3] : memref<1x1x21x128xbf16, #tpu.memory_space<vmem>>, vector<1x1x9x80xbf16>
    %3 = vector.shape_cast %2 : vector<1x1x9x80xbf16> to vector<9x80xbf16>
    %c0_4 = arith.constant 0 : index
    %c0_5 = arith.constant 0 : index
    %c6 = arith.constant 6 : index
    %c24_6 = arith.constant 24 : index
    %4 = vector.load %arg2[%c0_4, %c0_5, %c6, %c24_6] : memref<1x1x21x128xbf16, #tpu.memory_space<vmem>>, vector<1x1x9x80xbf16>
    %5 = vector.shape_cast %4 : vector<1x1x9x80xbf16> to vector<9x80xbf16>
    %c0_7 = arith.constant 0 : index
    %c0_8 = arith.constant 0 : index
    %c7 = arith.constant 7 : index
    %c24_9 = arith.constant 24 : index
    %6 = vector.load %arg2[%c0_7, %c0_8, %c7, %c24_9] : memref<1x1x21x128xbf16, #tpu.memory_space<vmem>>, vector<1x1x9x80xbf16>
    %7 = vector.shape_cast %6 : vector<1x1x9x80xbf16> to vector<9x80xbf16>
    %c0_10 = arith.constant 0 : index
    %c0_11 = arith.constant 0 : index
    %c8 = arith.constant 8 : index
    %c24_12 = arith.constant 24 : index
    %8 = vector.load %arg2[%c0_10, %c0_11, %c8, %c24_12] : memref<1x1x21x128xbf16, #tpu.memory_space<vmem>>, vector<1x1x9x80xbf16>
    %9 = vector.shape_cast %8 : vector<1x1x9x80xbf16> to vector<9x80xbf16>
    %10 = tpu.concatenate %1, %3, %5, %7, %9 in 1 : vector<9x80xbf16>, vector<9x80xbf16>, vector<9x80xbf16>, vector<9x80xbf16>, vector<9x80xbf16> -> vector<9x400xbf16>
    %c0_13 = arith.constant 0 : index
    %c0_14 = arith.constant 0 : index
    %11 = vector.load %arg3[%c0_13, %c0_14] : memref<400x128xbf16, #tpu.memory_space<vmem>>, vector<400x128xbf16>
    %cst = arith.constant dense<0.000000e+00> : vector<9x128xf32>
    %12 = tpu.matmul %10, %11, %cst {dimension_numbers = #tpu.dot_dimension_numbers<[1], [0], [0], [1], [0, 0, 1, 1], [], []>} : vector<9x400xbf16>, vector<400x128xbf16>, vector<9x128xf32> -> vector<9x128xf32>
    %c0_15 = arith.constant 0 : index
    %c0_16 = arith.constant 0 : index
    %13 = vector.load %arg6[%c0_15, %c0_16] : memref<1x128xf32, #tpu.memory_space<vmem>>, vector<1x128xf32>
    %14 = vector.broadcast %13 : vector<1x128xf32> to vector<9x128xf32>
    %15 = arith.addf %12, %14 : vector<9x128xf32>
    %c0_17 = arith.constant 0 : index
    %c0_18 = arith.constant 0 : index
    %c0_19 = arith.constant 0 : index
    %16 = vector.load %arg9[%c0_17, %c0_18, %c0_19] : memref<1x9x128xf32, #tpu.memory_space<vmem>>, vector<1x9x128xf32>
    %17 = vector.shape_cast %16 : vector<1x9x128xf32> to vector<9x128xf32>
    %18 = vector.shape_cast %15 : vector<9x128xf32> to vector<1x9x128xf32>
    tpu.vector_store %arg9[%c0_17, %c0_18, %c0_19], %18 {strides = array<i32>} : memref<1x9x128xf32, #tpu.memory_space<vmem>>, vector<1x9x128xf32>,
    %c0_20 = arith.constant 0 : index
    %c0_21 = arith.constant 0 : index
    %c2 = arith.constant 2 : index
    %c16 = arith.constant 16 : index
    %19 = vector.load %arg2[%c0_20, %c0_21, %c2, %c16] : memref<1x1x21x128xbf16, #tpu.memory_space<vmem>>, vector<1x1x2x92xbf16>
    %20 = vector.shape_cast %19 : vector<1x1x2x92xbf16> to vector<2x92xbf16>
    %c0_22 = arith.constant 0 : index
    %c0_23 = arith.constant 0 : index
    %c3 = arith.constant 3 : index
    %c16_24 = arith.constant 16 : index
    %21 = vector.load %arg2[%c0_22, %c0_23, %c3, %c16_24] : memref<1x1x21x128xbf16, #tpu.memory_space<vmem>>, vector<1x1x2x92xbf16>
    %22 = vector.shape_cast %21 : vector<1x1x2x92xbf16> to vector<2x92xbf16>
    %c0_25 = arith.constant 0 : index
    %c0_26 = arith.constant 0 : index
    %c4_27 = arith.constant 4 : index
    %c16_28 = arith.constant 16 : index
    %23 = vector.load %arg2[%c0_25, %c0_26, %c4_27, %c16_28] : memref<1x1x21x128xbf16, #tpu.memory_space<vmem>>, vector<1x1x2x92xbf16>
    %24 = vector.shape_cast %23 : vector<1x1x2x92xbf16> to vector<2x92xbf16>
    %c0_29 = arith.constant 0 : index
    %c0_30 = arith.constant 0 : index
    %c5_31 = arith.constant 5 : index
    %c16_32 = arith.constant 16 : index
    %25 = vector.load %arg2[%c0_29, %c0_30, %c5_31, %c16_32] : memref<1x1x21x128xbf16, #tpu.memory_space<vmem>>, vector<1x1x2x92xbf16>
    %26 = vector.shape_cast %25 : vector<1x1x2x92xbf16> to vector<2x92xbf16>
    %c0_33 = arith.constant 0 : index
    %c0_34 = arith.constant 0 : index
    %c6_35 = arith.constant 6 : index
    %c16_36 = arith.constant 16 : index
    %27 = vector.load %arg2[%c0_33, %c0_34, %c6_35, %c16_36] : memref<1x1x21x128xbf16, #tpu.memory_space<vmem>>, vector<1x1x2x92xbf16>
    %28 = vector.shape_cast %27 : vector<1x1x2x92xbf16> to vector<2x92xbf16>
    %29 = tpu.concatenate %20, %22, %24, %26, %28 in 1 : vector<2x92xbf16>, vector<2x92xbf16>, vector<2x92xbf16>, vector<2x92xbf16>, vector<2x92xbf16> -> vector<2x460xbf16>
    %c0_37 = arith.constant 0 : index
    %c0_38 = arith.constant 0 : index
    %c13 = arith.constant 13 : index
    %c16_39 = arith.constant 16 : index
    %30 = vector.load %arg2[%c0_37, %c0_38, %c13, %c16_39] : memref<1x1x21x128xbf16, #tpu.memory_space<vmem>>, vector<1x1x2x92xbf16>
    %31 = vector.shape_cast %30 : vector<1x1x2x92xbf16> to vector<2x92xbf16>
    %c0_40 = arith.constant 0 : index
    %c0_41 = arith.constant 0 : index
    %c14 = arith.constant 14 : index
    %c16_42 = arith.constant 16 : index
    %32 = vector.load %arg2[%c0_40, %c0_41, %c14, %c16_42] : memref<1x1x21x128xbf16, #tpu.memory_space<vmem>>, vector<1x1x2x92xbf16>
    %33 = vector.shape_cast %32 : vector<1x1x2x92xbf16> to vector<2x92xbf16>
    %c0_43 = arith.constant 0 : index
    %c0_44 = arith.constant 0 : index
    %c15 = arith.constant 15 : index
    %c16_45 = arith.constant 16 : index
    %34 = vector.load %arg2[%c0_43, %c0_44, %c15, %c16_45] : memref<1x1x21x128xbf16, #tpu.memory_space<vmem>>, vector<1x1x2x92xbf16>
    %35 = vector.shape_cast %34 : vector<1x1x2x92xbf16> to vector<2x92xbf16>
    %c0_46 = arith.constant 0 : index
    %c0_47 = arith.constant 0 : index
    %c16_48 = arith.constant 16 : index
    %c16_49 = arith.constant 16 : index
    %36 = vector.load %arg2[%c0_46, %c0_47, %c16_48, %c16_49] : memref<1x1x21x128xbf16, #tpu.memory_space<vmem>>, vector<1x1x2x92xbf16>
    %37 = vector.shape_cast %36 : vector<1x1x2x92xbf16> to vector<2x92xbf16>
    %c0_50 = arith.constant 0 : index
    %c0_51 = arith.constant 0 : index
    %c17 = arith.constant 17 : index
    %c16_52 = arith.constant 16 : index
    %38 = vector.load %arg2[%c0_50, %c0_51, %c17, %c16_52] : memref<1x1x21x128xbf16, #tpu.memory_space<vmem>>, vector<1x1x2x92xbf16>
    %39 = vector.shape_cast %38 : vector<1x1x2x92xbf16> to vector<2x92xbf16>
    %40 = tpu.concatenate %31, %33, %35, %37, %39 in 1 : vector<2x92xbf16>, vector<2x92xbf16>, vector<2x92xbf16>, vector<2x92xbf16>, vector<2x92xbf16> -> vector<2x460xbf16>
    %41 = tpu.concatenate %29, %40 in 0 : vector<2x460xbf16>, vector<2x460xbf16> -> vector<4x460xbf16>
    %c0_53 = arith.constant 0 : index
    %c0_54 = arith.constant 0 : index
    %42 = vector.load %arg4[%c0_53, %c0_54] : memref<460x64xbf16, #tpu.memory_space<vmem>>, vector<460x64xbf16>
    %cst_55 = arith.constant dense<0.000000e+00> : vector<4x64xf32>
    %43 = tpu.matmul %41, %42, %cst_55 {dimension_numbers = #tpu.dot_dimension_numbers<[1], [0], [0], [1], [0, 0, 1, 1], [], []>} : vector<4x460xbf16>, vector<460x64xbf16>, vector<4x64xf32> -> vector<4x64xf32>
    %c0_56 = arith.constant 0 : index
    %c0_57 = arith.constant 0 : index
    %44 = vector.load %arg7[%c0_56, %c0_57] : memref<1x64xf32, #tpu.memory_space<vmem>>, vector<1x64xf32>
    %45 = vector.broadcast %44 : vector<1x64xf32> to vector<4x64xf32>
    %46 = arith.addf %43, %45 : vector<4x64xf32>
    %c0_58 = arith.constant 0 : index
    %c0_59 = arith.constant 0 : index
    %c0_60 = arith.constant 0 : index
    %47 = vector.load %arg10[%c0_58, %c0_59, %c0_60] : memref<1x4x64xf32, #tpu.memory_space<vmem>>, vector<1x4x64xf32>
    %48 = vector.shape_cast %47 : vector<1x4x64xf32> to vector<4x64xf32>
    %49 = vector.shape_cast %46 : vector<4x64xf32> to vector<1x4x64xf32>
    tpu.vector_store %arg10[%c0_58, %c0_59, %c0_60], %49 {strides = array<i32>} : memref<1x4x64xf32, #tpu.memory_space<vmem>>, vector<1x4x64xf32>,
    %c0_61 = arith.constant 0 : index
    %c0_62 = arith.constant 0 : index
    %c0_63 = arith.constant 0 : index
    %c0_64 = arith.constant 0 : index
    %50 = vector.load %arg2[%c0_61, %c0_62, %c0_63, %c0_64] : memref<1x1x21x128xbf16, #tpu.memory_space<vmem>>, vector<1x1x2x116xbf16>
    %51 = vector.shape_cast %50 : vector<1x1x2x116xbf16> to vector<2x116xbf16>
    %c0_65 = arith.constant 0 : index
    %c0_66 = arith.constant 0 : index
    %c1 = arith.constant 1 : index
    %c0_67 = arith.constant 0 : index
    %52 = vector.load %arg2[%c0_65, %c0_66, %c1, %c0_67] : memref<1x1x21x128xbf16, #tpu.memory_space<vmem>>, vector<1x1x2x116xbf16>
    %53 = vector.shape_cast %52 : vector<1x1x2x116xbf16> to vector<2x116xbf16>
    %c0_68 = arith.constant 0 : index
    %c0_69 = arith.constant 0 : index
    %c2_70 = arith.constant 2 : index
    %c0_71 = arith.constant 0 : index
    %54 = vector.load %arg2[%c0_68, %c0_69, %c2_70, %c0_71] : memref<1x1x21x128xbf16, #tpu.memory_space<vmem>>, vector<1x1x2x116xbf16>
    %55 = vector.shape_cast %54 : vector<1x1x2x116xbf16> to vector<2x116xbf16>
    %c0_72 = arith.constant 0 : index
    %c0_73 = arith.constant 0 : index
    %c3_74 = arith.constant 3 : index
    %c0_75 = arith.constant 0 : index
    %56 = vector.load %arg2[%c0_72, %c0_73, %c3_74, %c0_75] : memref<1x1x21x128xbf16, #tpu.memory_space<vmem>>, vector<1x1x2x116xbf16>
    %57 = vector.shape_cast %56 : vector<1x1x2x116xbf16> to vector<2x116xbf16>
    %c0_76 = arith.constant 0 : index
    %c0_77 = arith.constant 0 : index
    %c4_78 = arith.constant 4 : index
    %c0_79 = arith.constant 0 : index
    %58 = vector.load %arg2[%c0_76, %c0_77, %c4_78, %c0_79] : memref<1x1x21x128xbf16, #tpu.memory_space<vmem>>, vector<1x1x2x116xbf16>
    %59 = vector.shape_cast %58 : vector<1x1x2x116xbf16> to vector<2x116xbf16>
    %60 = tpu.concatenate %51, %53, %55, %57, %59 in 1 : vector<2x116xbf16>, vector<2x116xbf16>, vector<2x116xbf16>, vector<2x116xbf16>, vector<2x116xbf16> -> vector<2x580xbf16>
    %c0_80 = arith.constant 0 : index
    %c0_81 = arith.constant 0 : index
    %c15_82 = arith.constant 15 : index
    %c0_83 = arith.constant 0 : index
    %61 = vector.load %arg2[%c0_80, %c0_81, %c15_82, %c0_83] : memref<1x1x21x128xbf16, #tpu.memory_space<vmem>>, vector<1x1x2x116xbf16>
    %62 = vector.shape_cast %61 : vector<1x1x2x116xbf16> to vector<2x116xbf16>
    %c0_84 = arith.constant 0 : index
    %c0_85 = arith.constant 0 : index
    %c16_86 = arith.constant 16 : index
    %c0_87 = arith.constant 0 : index
    %63 = vector.load %arg2[%c0_84, %c0_85, %c16_86, %c0_87] : memref<1x1x21x128xbf16, #tpu.memory_space<vmem>>, vector<1x1x2x116xbf16>
    %64 = vector.shape_cast %63 : vector<1x1x2x116xbf16> to vector<2x116xbf16>
    %c0_88 = arith.constant 0 : index
    %c0_89 = arith.constant 0 : index
    %c17_90 = arith.constant 17 : index
    %c0_91 = arith.constant 0 : index
    %65 = vector.load %arg2[%c0_88, %c0_89, %c17_90, %c0_91] : memref<1x1x21x128xbf16, #tpu.memory_space<vmem>>, vector<1x1x2x116xbf16>
    %66 = vector.shape_cast %65 : vector<1x1x2x116xbf16> to vector<2x116xbf16>
    %c0_92 = arith.constant 0 : index
    %c0_93 = arith.constant 0 : index
    %c18 = arith.constant 18 : index
    %c0_94 = arith.constant 0 : index
    %67 = vector.load %arg2[%c0_92, %c0_93, %c18, %c0_94] : memref<1x1x21x128xbf16, #tpu.memory_space<vmem>>, vector<1x1x2x116xbf16>
    %68 = vector.shape_cast %67 : vector<1x1x2x116xbf16> to vector<2x116xbf16>
    %c0_95 = arith.constant 0 : index
    %c0_96 = arith.constant 0 : index
    %c19 = arith.constant 19 : index
    %c0_97 = arith.constant 0 : index
    %69 = vector.load %arg2[%c0_95, %c0_96, %c19, %c0_97] : memref<1x1x21x128xbf16, #tpu.memory_space<vmem>>, vector<1x1x2x116xbf16>
    %70 = vector.shape_cast %69 : vector<1x1x2x116xbf16> to vector<2x116xbf16>
    %71 = tpu.concatenate %62, %64, %66, %68, %70 in 1 : vector<2x116xbf16>, vector<2x116xbf16>, vector<2x116xbf16>, vector<2x116xbf16>, vector<2x116xbf16> -> vector<2x580xbf16>
    %72 = tpu.concatenate %60, %71 in 0 : vector<2x580xbf16>, vector<2x580xbf16> -> vector<4x580xbf16>
    %c0_98 = arith.constant 0 : index
    %c0_99 = arith.constant 0 : index
    %73 = vector.load %arg5[%c0_98, %c0_99] : memref<580x32xbf16, #tpu.memory_space<vmem>>, vector<580x32xbf16>
    %cst_100 = arith.constant dense<0.000000e+00> : vector<4x32xf32>
    %74 = tpu.matmul %72, %73, %cst_100 {dimension_numbers = #tpu.dot_dimension_numbers<[1], [0], [0], [1], [0, 0, 1, 1], [], []>} : vector<4x580xbf16>, vector<580x32xbf16>, vector<4x32xf32> -> vector<4x32xf32>
    %c0_101 = arith.constant 0 : index
    %c0_102 = arith.constant 0 : index
    %75 = vector.load %arg8[%c0_101, %c0_102] : memref<1x32xf32, #tpu.memory_space<vmem>>, vector<1x32xf32>
    %76 = vector.broadcast %75 : vector<1x32xf32> to vector<4x32xf32>
    %77 = arith.addf %74, %76 : vector<4x32xf32>
    %c0_103 = arith.constant 0 : index
    %c0_104 = arith.constant 0 : index
    %c0_105 = arith.constant 0 : index
    %78 = vector.load %arg11[%c0_103, %c0_104, %c0_105] : memref<1x4x32xf32, #tpu.memory_space<vmem>>, vector<1x4x32xf32>
    %79 = vector.shape_cast %78 : vector<1x4x32xf32> to vector<4x32xf32>
    %80 = vector.shape_cast %77 : vector<4x32xf32> to vector<1x4x32xf32>
    tpu.vector_store %arg11[%c0_103, %c0_104, %c0_105], %80 {strides = array<i32>} : memref<1x4x32xf32, #tpu.memory_space<vmem>>, vector<1x4x32xf32>,
    return
  }
  func.func @transform_0(%arg0: i32, %arg1: i32) -> (i32, i32, i32, i32) {
    %c0_i32 = arith.constant 0 : i32
    %c0_i32_0 = arith.constant 0 : i32
    %c0_i32_1 = arith.constant 0 : i32
    return %arg0, %arg1, %c0_i32, %c0_i32_0 : i32, i32, i32, i32
  }
  func.func @transform_1(%arg0: i32, %arg1: i32) -> (i32, i32) {
    %c0_i32 = arith.constant 0 : i32
    %c0_i32_0 = arith.constant 0 : i32
    %c0_i32_1 = arith.constant 0 : i32
    return %c0_i32, %c0_i32_0 : i32, i32
  }
  func.func @transform_2(%arg0: i32, %arg1: i32) -> (i32, i32) {
    %c0_i32 = arith.constant 0 : i32
    %c0_i32_0 = arith.constant 0 : i32
    %c0_i32_1 = arith.constant 0 : i32
    return %c0_i32, %c0_i32_0 : i32, i32
  }
  func.func @transform_3(%arg0: i32, %arg1: i32) -> (i32, i32) {
    %c0_i32 = arith.constant 0 : i32
    %c0_i32_0 = arith.constant 0 : i32
    %c0_i32_1 = arith.constant 0 : i32
    return %c0_i32, %c0_i32_0 : i32, i32
  }
  func.func @transform_4(%arg0: i32, %arg1: i32) -> (i32, i32) {
    %c0_i32 = arith.constant 0 : i32
    %c0_i32_0 = arith.constant 0 : i32
    %c0_i32_1 = arith.constant 0 : i32
    return %c0_i32, %c0_i32_0 : i32, i32
  }
  func.func @transform_5(%arg0: i32, %arg1: i32) -> (i32, i32) {
    %c0_i32 = arith.constant 0 : i32
    %c0_i32_0 = arith.constant 0 : i32
    %c0_i32_1 = arith.constant 0 : i32
    return %c0_i32, %c0_i32_0 : i32, i32
  }
  func.func @transform_6(%arg0: i32, %arg1: i32) -> (i32, i32) {
    %c0_i32 = arith.constant 0 : i32
    %c0_i32_0 = arith.constant 0 : i32
    %c0_i32_1 = arith.constant 0 : i32
    return %c0_i32, %c0_i32_0 : i32, i32
  }
  func.func @transform_7(%arg0: i32, %arg1: i32) -> (i32, i32, i32) {
    %c0_i32 = arith.constant 0 : i32
    %c0_i32_0 = arith.constant 0 : i32
    return %arg0, %c0_i32, %arg1 : i32, i32, i32
  }
  func.func @transform_8(%arg0: i32, %arg1: i32) -> (i32, i32, i32) {
    %c0_i32 = arith.constant 0 : i32
    %c0_i32_0 = arith.constant 0 : i32
    return %arg0, %c0_i32, %arg1 : i32, i32, i32
  }
  func.func @transform_9(%arg0: i32, %arg1: i32) -> (i32, i32, i32) {
    %c0_i32 = arith.constant 0 : i32
    %c0_i32_0 = arith.constant 0 : i32
    return %arg0, %c0_i32, %arg1 : i32, i32, i32
  }
}

module attributes {stable_mosaic.version = 11 : i64} {
  func.func @kernel(%arg0: i32, %arg1: i32, %arg2: memref<1x1x21x128xbf16, #tpu.memory_space<vmem>>, %arg3: memref<400x128xbf16, #tpu.memory_space<vmem>>, %arg4: memref<460x64xbf16, #tpu.memory_space<vmem>>, %arg5: memref<580x32xbf16, #tpu.memory_space<vmem>>, %arg6: memref<1x128xf32, #tpu.memory_space<vmem>>, %arg7: memref<1x64xf32, #tpu.memory_space<vmem>>, %arg8: memref<1x32xf32, #tpu.memory_space<vmem>>, %arg9: memref<1x9x128xf32, #tpu.memory_space<vmem>>, %arg10: memref<1x4x64xf32, #tpu.memory_space<vmem>>, %arg11: memref<1x4x32xf32, #tpu.memory_space<vmem>>) attributes {dimension_semantics = [#tpu.dimension_semantics<parallel>, #tpu.dimension_semantics<parallel>], iteration_bounds = array<i64: 2, 1>, scalar_prefetch = 0 : i64, scratch_operands = 0 : i64, tpu.core_type = #tpu.core_type<tc>, window_params = [{transform_indices = @transform_0, window_bounds = array<i64: 1, 1, 21, 128>}, {pipeline_mode = #tpu.pipeline_mode<synchronous>, transform_indices = @transform_1, window_bounds = array<i64: 400, 128>}, {pipeline_mode = #tpu.pipeline_mode<synchronous>, transform_indices = @transform_2, window_bounds = array<i64: 460, 64>}, {pipeline_mode = #tpu.pipeline_mode<synchronous>, transform_indices = @transform_3, window_bounds = array<i64: 580, 32>}, {pipeline_mode = #tpu.pipeline_mode<synchronous>, transform_indices = @transform_4, window_bounds = array<i64: 1, 128>}, {pipeline_mode = #tpu.pipeline_mode<synchronous>, transform_indices = @transform_5, window_bounds = array<i64: 1, 64>}, {pipeline_mode = #tpu.pipeline_mode<synchronous>, transform_indices = @transform_6, window_bounds = array<i64: 1, 32>}, {transform_indices = @transform_7, window_bounds = array<i64: 1, 9, 128>}, {transform_indices = @transform_8, window_bounds = array<i64: 1, 4, 64>}, {transform_indices = @transform_9, window_bounds = array<i64: 1, 4, 32>}]} {
    %c0 = arith.constant 0 : index
    %c0_0 = arith.constant 0 : index
    %c4 = arith.constant 4 : index
    %c24 = arith.constant 24 : index
    %0 = vector.load %arg2[%c0, %c0_0, %c4, %c24] : memref<1x1x21x128xbf16, #tpu.memory_space<vmem>>, vector<1x1x9x80xbf16>
    %1 = vector.shape_cast %0 : vector<1x1x9x80xbf16> to vector<9x80xbf16>
    %c0_1 = arith.constant 0 : index
    %c0_2 = arith.constant 0 : index
    %c5 = arith.constant 5 : index
    %c24_3 = arith.constant 24 : index
    %2 = vector.load %arg2[%c0_1, %c0_2, %c5, %c24_3] : memref<1x1x21x128xbf16, #tpu.memory_space<vmem>>, vector<1x1x9x80xbf16>
    %3 = vector.shape_cast %2 : vector<1x1x9x80xbf16> to vector<9x80xbf16>
    %c0_4 = arith.constant 0 : index
    %c0_5 = arith.constant 0 : index
    %c6 = arith.constant 6 : index
    %c24_6 = arith.constant 24 : index
    %4 = vector.load %arg2[%c0_4, %c0_5, %c6, %c24_6] : memref<1x1x21x128xbf16, #tpu.memory_space<vmem>>, vector<1x1x9x80xbf16>
    %5 = vector.shape_cast %4 : vector<1x1x9x80xbf16> to vector<9x80xbf16>
    %c0_7 = arith.constant 0 : index
    %c0_8 = arith.constant 0 : index
    %c7 = arith.constant 7 : index
    %c24_9 = arith.constant 24 : index
    %6 = vector.load %arg2[%c0_7, %c0_8, %c7, %c24_9] : memref<1x1x21x128xbf16, #tpu.memory_space<vmem>>, vector<1x1x9x80xbf16>
    %7 = vector.shape_cast %6 : vector<1x1x9x80xbf16> to vector<9x80xbf16>
    %c0_10 = arith.constant 0 : index
    %c0_11 = arith.constant 0 : index
    %c8 = arith.constant 8 : index
    %c24_12 = arith.constant 24 : index
    %8 = vector.load %arg2[%c0_10, %c0_11, %c8, %c24_12] : memref<1x1x21x128xbf16, #tpu.memory_space<vmem>>, vector<1x1x9x80xbf16>
    %9 = vector.shape_cast %8 : vector<1x1x9x80xbf16> to vector<9x80xbf16>
    %10 = tpu.concatenate %1, %3, %5, %7, %9 in 1 : vector<9x80xbf16>, vector<9x80xbf16>, vector<9x80xbf16>, vector<9x80xbf16>, vector<9x80xbf16> -> vector<9x400xbf16>
    %c0_13 = arith.constant 0 : index
    %c0_14 = arith.constant 0 : index
    %11 = vector.load %arg3[%c0_13, %c0_14] : memref<400x128xbf16, #tpu.memory_space<vmem>>, vector<400x128xbf16>
    %cst = arith.constant dense<0.000000e+00> : vector<9x128xf32>
    %12 = tpu.matmul %10, %11, %cst {dimension_numbers = #tpu.dot_dimension_numbers<[1], [0], [0], [1], [0, 0, 1, 1], [], []>} : vector<9x400xbf16>, vector<400x128xbf16>, vector<9x128xf32> -> vector<9x128xf32>
    %c0_15 = arith.constant 0 : index
    %c0_16 = arith.constant 0 : index
    %13 = vector.load %arg6[%c0_15, %c0_16] : memref<1x128xf32, #tpu.memory_space<vmem>>, vector<1x128xf32>
    %14 = vector.broadcast %13 : vector<1x128xf32> to vector<9x128xf32>
    %15 = arith.addf %12, %14 : vector<9x128xf32>
    %c0_17 = arith.constant 0 : index
    %c0_18 = arith.constant 0 : index
    %c0_19 = arith.constant 0 : index
    %16 = vector.load %arg9[%c0_17, %c0_18, %c0_19] : memref<1x9x128xf32, #tpu.memory_space<vmem>>, vector<1x9x128xf32>
    %17 = vector.shape_cast %16 : vector<1x9x128xf32> to vector<9x128xf32>
    %18 = vector.shape_cast %15 : vector<9x128xf32> to vector<1x9x128xf32>
    tpu.vector_store %arg9[%c0_17, %c0_18, %c0_19], %18 {strides = array<i32>} : memref<1x9x128xf32, #tpu.memory_space<vmem>>, vector<1x9x128xf32>,
    %c0_20 = arith.constant 0 : index
    %c0_21 = arith.constant 0 : index
    %c2 = arith.constant 2 : index
    %c16 = arith.constant 16 : index
    %19 = vector.load %arg2[%c0_20, %c0_21, %c2, %c16] : memref<1x1x21x128xbf16, #tpu.memory_space<vmem>>, vector<1x1x2x92xbf16>
    %20 = vector.shape_cast %19 : vector<1x1x2x92xbf16> to vector<2x92xbf16>
    %c0_22 = arith.constant 0 : index
    %c0_23 = arith.constant 0 : index
    %c3 = arith.constant 3 : index
    %c16_24 = arith.constant 16 : index
    %21 = vector.load %arg2[%c0_22, %c0_23, %c3, %c16_24] : memref<1x1x21x128xbf16, #tpu.memory_space<vmem>>, vector<1x1x2x92xbf16>
    %22 = vector.shape_cast %21 : vector<1x1x2x92xbf16> to vector<2x92xbf16>
    %c0_25 = arith.constant 0 : index
    %c0_26 = arith.constant 0 : index
    %c4_27 = arith.constant 4 : index
    %c16_28 = arith.constant 16 : index
    %23 = vector.load %arg2[%c0_25, %c0_26, %c4_27, %c16_28] : memref<1x1x21x128xbf16, #tpu.memory_space<vmem>>, vector<1x1x2x92xbf16>
    %24 = vector.shape_cast %23 : vector<1x1x2x92xbf16> to vector<2x92xbf16>
    %c0_29 = arith.constant 0 : index
    %c0_30 = arith.constant 0 : index
    %c5_31 = arith.constant 5 : index
    %c16_32 = arith.constant 16 : index
    %25 = vector.load %arg2[%c0_29, %c0_30, %c5_31, %c16_32] : memref<1x1x21x128xbf16, #tpu.memory_space<vmem>>, vector<1x1x2x92xbf16>
    %26 = vector.shape_cast %25 : vector<1x1x2x92xbf16> to vector<2x92xbf16>
    %c0_33 = arith.constant 0 : index
    %c0_34 = arith.constant 0 : index
    %c6_35 = arith.constant 6 : index
    %c16_36 = arith.constant 16 : index
    %27 = vector.load %arg2[%c0_33, %c0_34, %c6_35, %c16_36] : memref<1x1x21x128xbf16, #tpu.memory_space<vmem>>, vector<1x1x2x92xbf16>
    %28 = vector.shape_cast %27 : vector<1x1x2x92xbf16> to vector<2x92xbf16>
    %29 = tpu.concatenate %20, %22, %24, %26, %28 in 1 : vector<2x92xbf16>, vector<2x92xbf16>, vector<2x92xbf16>, vector<2x92xbf16>, vector<2x92xbf16> -> vector<2x460xbf16>
    %c0_37 = arith.constant 0 : index
    %c0_38 = arith.constant 0 : index
    %c13 = arith.constant 13 : index
    %c16_39 = arith.constant 16 : index
    %30 = vector.load %arg2[%c0_37, %c0_38, %c13, %c16_39] : memref<1x1x21x128xbf16, #tpu.memory_space<vmem>>, vector<1x1x2x92xbf16>
    %31 = vector.shape_cast %30 : vector<1x1x2x92xbf16> to vector<2x92xbf16>
    %c0_40 = arith.constant 0 : index
    %c0_41 = arith.constant 0 : index
    %c14 = arith.constant 14 : index
    %c16_42 = arith.constant 16 : index
    %32 = vector.load %arg2[%c0_40, %c0_41, %c14, %c16_42] : memref<1x1x21x128xbf16, #tpu.memory_space<vmem>>, vector<1x1x2x92xbf16>
    %33 = vector.shape_cast %32 : vector<1x1x2x92xbf16> to vector<2x92xbf16>
    %c0_43 = arith.constant 0 : index
    %c0_44 = arith.constant 0 : index
    %c15 = arith.constant 15 : index
    %c16_45 = arith.constant 16 : index
    %34 = vector.load %arg2[%c0_43, %c0_44, %c15, %c16_45] : memref<1x1x21x128xbf16, #tpu.memory_space<vmem>>, vector<1x1x2x92xbf16>
    %35 = vector.shape_cast %34 : vector<1x1x2x92xbf16> to vector<2x92xbf16>
    %c0_46 = arith.constant 0 : index
    %c0_47 = arith.constant 0 : index
    %c16_48 = arith.constant 16 : index
    %c16_49 = arith.constant 16 : index
    %36 = vector.load %arg2[%c0_46, %c0_47, %c16_48, %c16_49] : memref<1x1x21x128xbf16, #tpu.memory_space<vmem>>, vector<1x1x2x92xbf16>
    %37 = vector.shape_cast %36 : vector<1x1x2x92xbf16> to vector<2x92xbf16>
    %c0_50 = arith.constant 0 : index
    %c0_51 = arith.constant 0 : index
    %c17 = arith.constant 17 : index
    %c16_52 = arith.constant 16 : index
    %38 = vector.load %arg2[%c0_50, %c0_51, %c17, %c16_52] : memref<1x1x21x128xbf16, #tpu.memory_space<vmem>>, vector<1x1x2x92xbf16>
    %39 = vector.shape_cast %38 : vector<1x1x2x92xbf16> to vector<2x92xbf16>
    %40 = tpu.concatenate %31, %33, %35, %37, %39 in 1 : vector<2x92xbf16>, vector<2x92xbf16>, vector<2x92xbf16>, vector<2x92xbf16>, vector<2x92xbf16> -> vector<2x460xbf16>
    %41 = tpu.concatenate %29, %40 in 0 : vector<2x460xbf16>, vector<2x460xbf16> -> vector<4x460xbf16>
    %c0_53 = arith.constant 0 : index
    %c0_54 = arith.constant 0 : index
    %42 = vector.load %arg4[%c0_53, %c0_54] : memref<460x64xbf16, #tpu.memory_space<vmem>>, vector<460x64xbf16>
    %cst_55 = arith.constant dense<0.000000e+00> : vector<4x64xf32>
    %43 = tpu.matmul %41, %42, %cst_55 {dimension_numbers = #tpu.dot_dimension_numbers<[1], [0], [0], [1], [0, 0, 1, 1], [], []>} : vector<4x460xbf16>, vector<460x64xbf16>, vector<4x64xf32> -> vector<4x64xf32>
    %c0_56 = arith.constant 0 : index
    %c0_57 = arith.constant 0 : index
    %44 = vector.load %arg7[%c0_56, %c0_57] : memref<1x64xf32, #tpu.memory_space<vmem>>, vector<1x64xf32>
    %45 = vector.broadcast %44 : vector<1x64xf32> to vector<4x64xf32>
    %46 = arith.addf %43, %45 : vector<4x64xf32>
    %c0_58 = arith.constant 0 : index
    %c0_59 = arith.constant 0 : index
    %c0_60 = arith.constant 0 : index
    %47 = vector.load %arg10[%c0_58, %c0_59, %c0_60] : memref<1x4x64xf32, #tpu.memory_space<vmem>>, vector<1x4x64xf32>
    %48 = vector.shape_cast %47 : vector<1x4x64xf32> to vector<4x64xf32>
    %49 = vector.shape_cast %46 : vector<4x64xf32> to vector<1x4x64xf32>
    tpu.vector_store %arg10[%c0_58, %c0_59, %c0_60], %49 {strides = array<i32>} : memref<1x4x64xf32, #tpu.memory_space<vmem>>, vector<1x4x64xf32>,
    %c0_61 = arith.constant 0 : index
    %c0_62 = arith.constant 0 : index
    %c0_63 = arith.constant 0 : index
    %c0_64 = arith.constant 0 : index
    %50 = vector.load %arg2[%c0_61, %c0_62, %c0_63, %c0_64] : memref<1x1x21x128xbf16, #tpu.memory_space<vmem>>, vector<1x1x2x116xbf16>
    %51 = vector.shape_cast %50 : vector<1x1x2x116xbf16> to vector<2x116xbf16>
    %c0_65 = arith.constant 0 : index
    %c0_66 = arith.constant 0 : index
    %c1 = arith.constant 1 : index
    %c0_67 = arith.constant 0 : index
    %52 = vector.load %arg2[%c0_65, %c0_66, %c1, %c0_67] : memref<1x1x21x128xbf16, #tpu.memory_space<vmem>>, vector<1x1x2x116xbf16>
    %53 = vector.shape_cast %52 : vector<1x1x2x116xbf16> to vector<2x116xbf16>
    %c0_68 = arith.constant 0 : index
    %c0_69 = arith.constant 0 : index
    %c2_70 = arith.constant 2 : index
    %c0_71 = arith.constant 0 : index
    %54 = vector.load %arg2[%c0_68, %c0_69, %c2_70, %c0_71] : memref<1x1x21x128xbf16, #tpu.memory_space<vmem>>, vector<1x1x2x116xbf16>
    %55 = vector.shape_cast %54 : vector<1x1x2x116xbf16> to vector<2x116xbf16>
    %c0_72 = arith.constant 0 : index
    %c0_73 = arith.constant 0 : index
    %c3_74 = arith.constant 3 : index
    %c0_75 = arith.constant 0 : index
    %56 = vector.load %arg2[%c0_72, %c0_73, %c3_74, %c0_75] : memref<1x1x21x128xbf16, #tpu.memory_space<vmem>>, vector<1x1x2x116xbf16>
    %57 = vector.shape_cast %56 : vector<1x1x2x116xbf16> to vector<2x116xbf16>
    %c0_76 = arith.constant 0 : index
    %c0_77 = arith.constant 0 : index
    %c4_78 = arith.constant 4 : index
    %c0_79 = arith.constant 0 : index
    %58 = vector.load %arg2[%c0_76, %c0_77, %c4_78, %c0_79] : memref<1x1x21x128xbf16, #tpu.memory_space<vmem>>, vector<1x1x2x116xbf16>
    %59 = vector.shape_cast %58 : vector<1x1x2x116xbf16> to vector<2x116xbf16>
    %60 = tpu.concatenate %51, %53, %55, %57, %59 in 1 : vector<2x116xbf16>, vector<2x116xbf16>, vector<2x116xbf16>, vector<2x116xbf16>, vector<2x116xbf16> -> vector<2x580xbf16>
    %c0_80 = arith.constant 0 : index
    %c0_81 = arith.constant 0 : index
    %c15_82 = arith.constant 15 : index
    %c0_83 = arith.constant 0 : index
    %61 = vector.load %arg2[%c0_80, %c0_81, %c15_82, %c0_83] : memref<1x1x21x128xbf16, #tpu.memory_space<vmem>>, vector<1x1x2x116xbf16>
    %62 = vector.shape_cast %61 : vector<1x1x2x116xbf16> to vector<2x116xbf16>
    %c0_84 = arith.constant 0 : index
    %c0_85 = arith.constant 0 : index
    %c16_86 = arith.constant 16 : index
    %c0_87 = arith.constant 0 : index
    %63 = vector.load %arg2[%c0_84, %c0_85, %c16_86, %c0_87] : memref<1x1x21x128xbf16, #tpu.memory_space<vmem>>, vector<1x1x2x116xbf16>
    %64 = vector.shape_cast %63 : vector<1x1x2x116xbf16> to vector<2x116xbf16>
    %c0_88 = arith.constant 0 : index
    %c0_89 = arith.constant 0 : index
    %c17_90 = arith.constant 17 : index
    %c0_91 = arith.constant 0 : index
    %65 = vector.load %arg2[%c0_88, %c0_89, %c17_90, %c0_91] : memref<1x1x21x128xbf16, #tpu.memory_space<vmem>>, vector<1x1x2x116xbf16>
    %66 = vector.shape_cast %65 : vector<1x1x2x116xbf16> to vector<2x116xbf16>
    %c0_92 = arith.constant 0 : index
    %c0_93 = arith.constant 0 : index
    %c18 = arith.constant 18 : index
    %c0_94 = arith.constant 0 : index
    %67 = vector.load %arg2[%c0_92, %c0_93, %c18, %c0_94] : memref<1x1x21x128xbf16, #tpu.memory_space<vmem>>, vector<1x1x2x116xbf16>
    %68 = vector.shape_cast %67 : vector<1x1x2x116xbf16> to vector<2x116xbf16>
    %c0_95 = arith.constant 0 : index
    %c0_96 = arith.constant 0 : index
    %c19 = arith.constant 19 : index
    %c0_97 = arith.constant 0 : index
    %69 = vector.load %arg2[%c0_95, %c0_96, %c19, %c0_97] : memref<1x1x21x128xbf16, #tpu.memory_space<vmem>>, vector<1x1x2x116xbf16>
    %70 = vector.shape_cast %69 : vector<1x1x2x116xbf16> to vector<2x116xbf16>
    %71 = tpu.concatenate %62, %64, %66, %68, %70 in 1 : vector<2x116xbf16>, vector<2x116xbf16>, vector<2x116xbf16>, vector<2x116xbf16>, vector<2x116xbf16> -> vector<2x580xbf16>
    %72 = tpu.concatenate %60, %71 in 0 : vector<2x580xbf16>, vector<2x580xbf16> -> vector<4x580xbf16>
    %c0_98 = arith.constant 0 : index
    %c0_99 = arith.constant 0 : index
    %73 = vector.load %arg5[%c0_98, %c0_99] : memref<580x32xbf16, #tpu.memory_space<vmem>>, vector<580x32xbf16>
    %cst_100 = arith.constant dense<0.000000e+00> : vector<4x32xf32>
    %74 = tpu.matmul %72, %73, %cst_100 {dimension_numbers = #tpu.dot_dimension_numbers<[1], [0], [0], [1], [0, 0, 1, 1], [], []>} : vector<4x580xbf16>, vector<580x32xbf16>, vector<4x32xf32> -> vector<4x32xf32>
    %c0_101 = arith.constant 0 : index
    %c0_102 = arith.constant 0 : index
    %75 = vector.load %arg8[%c0_101, %c0_102] : memref<1x32xf32, #tpu.memory_space<vmem>>, vector<1x32xf32>
    %76 = vector.broadcast %75 : vector<1x32xf32> to vector<4x32xf32>
    %77 = arith.addf %74, %76 : vector<4x32xf32>
    %c0_103 = arith.constant 0 : index
    %c0_104 = arith.constant 0 : index
    %c0_105 = arith.constant 0 : index
    %78 = vector.load %arg11[%c0_103, %c0_104, %c0_105] : memref<1x4x32xf32, #tpu.memory_space<vmem>>, vector<1x4x32xf32>
    %79 = vector.shape_cast %78 : vector<1x4x32xf32> to vector<4x32xf32>
    %80 = vector.shape_cast %77 : vector<4x32xf32> to vector<1x4x32xf32>
    tpu.vector_store %arg11[%c0_103, %c0_104, %c0_105], %80 {strides = array<i32>} : memref<1x4x32xf32, #tpu.memory_space<vmem>>, vector<1x4x32xf32>,
    return
  }
  func.func @transform_0(%arg0: i32, %arg1: i32) -> (i32, i32, i32, i32) {
    %c0_i32 = arith.constant 0 : i32
    %c0_i32_0 = arith.constant 0 : i32
    %c0_i32_1 = arith.constant 0 : i32
    return %arg0, %arg1, %c0_i32, %c0_i32_0 : i32, i32, i32, i32
  }
  func.func @transform_1(%arg0: i32, %arg1: i32) -> (i32, i32) {
    %c0_i32 = arith.constant 0 : i32
    %c0_i32_0 = arith.constant 0 : i32
    %c0_i32_1 = arith.constant 0 : i32
    return %c0_i32, %c0_i32_0 : i32, i32
  }
  func.func @transform_2(%arg0: i32, %arg1: i32) -> (i32, i32) {
    %c0_i32 = arith.constant 0 : i32
    %c0_i32_0 = arith.constant 0 : i32
    %c0_i32_1 = arith.constant 0 : i32
    return %c0_i32, %c0_i32_0 : i32, i32
  }
  func.func @transform_3(%arg0: i32, %arg1: i32) -> (i32, i32) {
    %c0_i32 = arith.constant 0 : i32
    %c0_i32_0 = arith.constant 0 : i32
    %c0_i32_1 = arith.constant 0 : i32
    return %c0_i32, %c0_i32_0 : i32, i32
  }
  func.func @transform_4(%arg0: i32, %arg1: i32) -> (i32, i32) {
    %c0_i32 = arith.constant 0 : i32
    %c0_i32_0 = arith.constant 0 : i32
    %c0_i32_1 = arith.constant 0 : i32
    return %c0_i32, %c0_i32_0 : i32, i32
  }
  func.func @transform_5(%arg0: i32, %arg1: i32) -> (i32, i32) {
    %c0_i32 = arith.constant 0 : i32
    %c0_i32_0 = arith.constant 0 : i32
    %c0_i32_1 = arith.constant 0 : i32
    return %c0_i32, %c0_i32_0 : i32, i32
  }
  func.func @transform_6(%arg0: i32, %arg1: i32) -> (i32, i32) {
    %c0_i32 = arith.constant 0 : i32
    %c0_i32_0 = arith.constant 0 : i32
    %c0_i32_1 = arith.constant 0 : i32
    return %c0_i32, %c0_i32_0 : i32, i32
  }
  func.func @transform_7(%arg0: i32, %arg1: i32) -> (i32, i32, i32) {
    %c0_i32 = arith.constant 0 : i32
    %c0_i32_0 = arith.constant 0 : i32
    return %arg0, %c0_i32, %arg1 : i32, i32, i32
  }
  func.func @transform_8(%arg0: i32, %arg1: i32) -> (i32, i32, i32) {
    %c0_i32 = arith.constant 0 : i32
    %c0_i32_0 = arith.constant 0 : i32
    return %arg0, %c0_i32, %arg1 : i32, i32, i32
  }
  func.func @transform_9(%arg0: i32, %arg1: i32) -> (i32, i32, i32) {
    %c0_i32 = arith.constant 0 : i32
    %c0_i32_0 = arith.constant 0 : i32
    return %arg0, %c0_i32, %arg1 : i32, i32, i32
  }
}

</mosaic_0001>

<llo_original>
// kernel: tpu_custom_call.1
$region0: #{tpu_custom_call.1}
  #allocation0 [shape = 'u32[]', space=smem, size = 0x4, offset = 0x4, fixed_abs, tag = 'smem constant byte address 0x4 - core index']
  #allocation1 [shape = 'u32[144,128]{1,0:T(1,128)}', space=vmem, size = 0x12000, scoped, tag = 'internal scratch']
  %s0 = inlined_call_operand.vmem [shape: bf16[2,1,21,128], index: 0, kind: input, shape index: {}]
  %s1 = inlined_call_operand.vmem [shape: bf16[400,128], index: 1, kind: input, shape index: {}]
  %s2 = inlined_call_operand.vmem [shape: bf16[460,64], index: 2, kind: input, shape index: {}]
  %s3 = inlined_call_operand.vmem [shape: bf16[580,32], index: 3, kind: input, shape index: {}]
  %s4 = inlined_call_operand.vmem [shape: f32[1,128], index: 4, kind: input, shape index: {}]
  %s5 = inlined_call_operand.vmem [shape: f32[1,64], index: 5, kind: input, shape index: {}]
  %s6 = inlined_call_operand.vmem [shape: f32[1,32], index: 6, kind: input, shape index: {}]
  %s7 = inlined_call_operand.vmem [shape: f32[2,9,128], index: 7, kind: output, shape index: {0}]
  %s8 = inlined_call_operand.hbm [shape: f32[2,4,64], index: 8, kind: output, shape index: {1}]
  %s9 = inlined_call_operand.hbm [shape: f32[2,4,32], index: 9, kind: output, shape index: {2}]
  %10 = xla_tuple %s7, %s8, %s9
  %s11 = sld [smem:[#allocation0]]
  $region77: #{tpu_custom_call.1} parent=0
    _
  %s13 = ssub.s32 1, %s11
  %s14 = scalar_select 0, %s13, %s11
  $region1: #{tpu_custom_call.1} parent=0
    #allocation2 [shape = 'u8[4096]{0}', space=vmem, size = 0x1000, scoped, tag = 'output window, operand 1']
    #allocation3 [shape = 's32[2]{0}', space=sflag, size = 0x8, scoped, tag = 'scoped memory for tpu_custom_call.1']
    #allocation4 [shape = 'u8[4096]{0}', space=vmem, size = 0x1000, scoped, tag = 'output window, operand 2']
    #allocation5 [shape = 's32[2]{0}', space=sflag, size = 0x8, scoped, tag = 'scoped memory for tpu_custom_call.1']
    %15 = vsyncpa [#allocation3], 0
    %s16 = scalar_lea.sflag [#allocation3], 1
    %17 = vsyncpa %s16, 0
    %18 = vsyncpa [#allocation5], 0
    %s19 = scalar_lea.sflag [#allocation5], 1
    %20 = vsyncpa %s19, 0
    loop: start=0, step=1, limit=4
    $region2: #{tpu_custom_call.1} parent=1 // loop_pre_header
      _
    $region3: #{tpu_custom_call.1} parent=1 // loop_header
      %s22 = sphi 0, %s26
      %p23 = scmp.ge.s32.totalorder %s22, 4
      %s29 = sphi 0, %s41
      %s30 = sphi 0, %s37
      %s31 = sphi 0, %s29
      %s32 = sphi 0, %s30
      %s33 = sphi 0, %s31
      %s34 = sphi 0, %s32
      %s46 = sphi 0, %s48
      %s49 = sphi 0, %s46
      %s50 = sphi 0, %s49
      %s66 = sphi 0, %s50
      %s70 = sphi 0, %s70
      %s72 = sphi 0, %s70
      %s73 = sphi 0, %s72
      %s87 = sphi 0, %s73
      %s91 = sphi 0, %s91
      %s93 = sphi 0, %s91
      %s94 = sphi 0, %s93
      %s108 = sphi 0, %s94
      %s112 = sphi 0, %s112
      %s114 = sphi 0, %s112
      %s115 = sphi 0, %s114
      %s129 = sphi 0, %s115
      %s133 = sphi 0, %s133
      %s135 = sphi 0, %s133
      %s136 = sphi 0, %s135
      %s150 = sphi 0, %s136
      %s154 = sphi 0, %s154
      %s156 = sphi 0, %s154
      %s157 = sphi 0, %s156
      %s171 = sphi 0, %s157
      %s175 = sphi 0, %s175
      %s177 = sphi 0, %s175
      %s178 = sphi 0, %s177
      %s192 = sphi 0, %s178
      %s200 = sphi 0, %s202
      %s203 = sphi 0, %s200
      %s204 = sphi 0, %s203
      %s220 = sphi 0, %s204
      %s228 = sphi 0, %s230
      %s231 = sphi 0, %s228
      %s232 = sphi 0, %s231
      %s248 = sphi 0, %s232
      %s256 = sphi 0, %s258
      %s259 = sphi 0, %s256
      %s260 = sphi 0, %s259
      %s276 = sphi 0, %s260
    $region4: #{tpu_custom_call.1} parent=1 // loop_header_branch
      %25 = sbr.rel (%p23) target = $region8
    $region5: #{tpu_custom_call.1} parent=1 // loop_body
      %s27 = ssub.s32 %s22, 1
      %s28 = ssub.s32 %s22, 2
      %s35 = sadd.s32 1, %s30
      %p36 = scmp.ge.s32.totalorder %s35, 1
      %s37 = scalar_select %p36, 0, %s35
      %s38 = sadd.s32 1, %s29
      %s39 = scalar_select %p36, %s38, %s29
      %p40 = scmp.ge.s32.totalorder %s39, 2
      %s41 = scalar_select %p40, 0, %s39
      %s42 = ssub.s32 %s29, %s41
      %s43 = ssub.s32 %s30, %s37
      %s44 = sor.u32 %s42, %s43
      %p45 = scmp.eq.s32.totalorder %s44, 0
      %s47 = sadd.s32 %s46, 1
      %s48 = scalar_select %p45, %s46, %s47
      %p51 = pneg %p45
      %p52 = scmp.eq.s32.totalorder %s22, 1
      %p53 = por %p51, %p52
      %p54 = scmp.ne.s32.totalorder %s46, %s49
      %p55 = scmp.eq.s32.totalorder %s22, 0
      %p56 = por %p54, %p55
      %p57 = scmp.ne.s32.totalorder %s46, %s49
      %p58 = scmp.eq.s32.totalorder %s27, 1
      %p59 = por %p57, %p58
      %p60 = scmp.ne.s32.totalorder %s49, %s50
      %p61 = scmp.eq.s32.totalorder %s27, 0
      %p62 = por %p60, %p61
      %p63 = scmp.ne.s32.totalorder %s49, %s50
      %p64 = scmp.eq.s32.totalorder %s28, 1
      %p65 = por %p63, %p64
      %p67 = scmp.ne.s32.totalorder %s50, %s66
      %p68 = scmp.eq.s32.totalorder %s28, 0
      %p69 = por %p67, %p68
      %s71 = sadd.s32 %s70, 1
      %p74 = scmp.eq.s32.totalorder %s22, 1
      %p75 = scmp.ne.s32.totalorder %s70, %s72
      %p76 = scmp.eq.s32.totalorder %s22, 0
      %p77 = por %p75, %p76
      %p78 = scmp.ne.s32.totalorder %s70, %s72
      %p79 = scmp.eq.s32.totalorder %s27, 1
      %p80 = por %p78, %p79
      %p81 = scmp.ne.s32.totalorder %s72, %s73
      %p82 = scmp.eq.s32.totalorder %s27, 0
      %p83 = por %p81, %p82
      %p84 = scmp.ne.s32.totalorder %s72, %s73
      %p85 = scmp.eq.s32.totalorder %s28, 1
      %p86 = por %p84, %p85
      %p88 = scmp.ne.s32.totalorder %s73, %s87
      %p89 = scmp.eq.s32.totalorder %s28, 0
      %p90 = por %p88, %p89
      %s92 = sadd.s32 %s91, 1
      %p95 = scmp.eq.s32.totalorder %s22, 1
      %p96 = scmp.ne.s32.totalorder %s91, %s93
      %p97 = scmp.eq.s32.totalorder %s22, 0
      %p98 = por %p96, %p97
      %p99 = scmp.ne.s32.totalorder %s91, %s93
      %p100 = scmp.eq.s32.totalorder %s27, 1
      %p101 = por %p99, %p100
      %p102 = scmp.ne.s32.totalorder %s93, %s94
      %p103 = scmp.eq.s32.totalorder %s27, 0
      %p104 = por %p102, %p103
      %p105 = scmp.ne.s32.totalorder %s93, %s94
      %p106 = scmp.eq.s32.totalorder %s28, 1
      %p107 = por %p105, %p106
      %p109 = scmp.ne.s32.totalorder %s94, %s108
      %p110 = scmp.eq.s32.totalorder %s28, 0
      %p111 = por %p109, %p110
      %s113 = sadd.s32 %s112, 1
      %p116 = scmp.eq.s32.totalorder %s22, 1
      %p117 = scmp.ne.s32.totalorder %s112, %s114
      %p118 = scmp.eq.s32.totalorder %s22, 0
      %p119 = por %p117, %p118
      %p120 = scmp.ne.s32.totalorder %s112, %s114
      %p121 = scmp.eq.s32.totalorder %s27, 1
      %p122 = por %p120, %p121
      %p123 = scmp.ne.s32.totalorder %s114, %s115
      %p124 = scmp.eq.s32.totalorder %s27, 0
      %p125 = por %p123, %p124
      %p126 = scmp.ne.s32.totalorder %s114, %s115
      %p127 = scmp.eq.s32.totalorder %s28, 1
      %p128 = por %p126, %p127
      %p130 = scmp.ne.s32.totalorder %s115, %s129
      %p131 = scmp.eq.s32.totalorder %s28, 0
      %p132 = por %p130, %p131
      %s134 = sadd.s32 %s133, 1
      %p137 = scmp.eq.s32.totalorder %s22, 1
      %p138 = scmp.ne.s32.totalorder %s133, %s135
      %p139 = scmp.eq.s32.totalorder %s22, 0
      %p140 = por %p138, %p139
      %p141 = scmp.ne.s32.totalorder %s133, %s135
      %p142 = scmp.eq.s32.totalorder %s27, 1
      %p143 = por %p141, %p142
      %p144 = scmp.ne.s32.totalorder %s135, %s136
      %p145 = scmp.eq.s32.totalorder %s27, 0
      %p146 = por %p144, %p145
      %p147 = scmp.ne.s32.totalorder %s135, %s136
      %p148 = scmp.eq.s32.totalorder %s28, 1
      %p149 = por %p147, %p148
      %p151 = scmp.ne.s32.totalorder %s136, %s150
      %p152 = scmp.eq.s32.totalorder %s28, 0
      %p153 = por %p151, %p152
      %s155 = sadd.s32 %s154, 1
      %p158 = scmp.eq.s32.totalorder %s22, 1
      %p159 = scmp.ne.s32.totalorder %s154, %s156
      %p160 = scmp.eq.s32.totalorder %s22, 0
      %p161 = por %p159, %p160
      %p162 = scmp.ne.s32.totalorder %s154, %s156
      %p163 = scmp.eq.s32.totalorder %s27, 1
      %p164 = por %p162, %p163
      %p165 = scmp.ne.s32.totalorder %s156, %s157
      %p166 = scmp.eq.s32.totalorder %s27, 0
      %p167 = por %p165, %p166
      %p168 = scmp.ne.s32.totalorder %s156, %s157
      %p169 = scmp.eq.s32.totalorder %s28, 1
      %p170 = por %p168, %p169
      %p172 = scmp.ne.s32.totalorder %s157, %s171
      %p173 = scmp.eq.s32.totalorder %s28, 0
      %p174 = por %p172, %p173
      %s176 = sadd.s32 %s175, 1
      %p179 = scmp.eq.s32.totalorder %s22, 1
      %p180 = scmp.ne.s32.totalorder %s175, %s177
      %p181 = scmp.eq.s32.totalorder %s22, 0
      %p182 = por %p180, %p181
      %p183 = scmp.ne.s32.totalorder %s175, %s177
      %p184 = scmp.eq.s32.totalorder %s27, 1
      %p185 = por %p183, %p184
      %p186 = scmp.ne.s32.totalorder %s177, %s178
      %p187 = scmp.eq.s32.totalorder %s27, 0
      %p188 = por %p186, %p187
      %p189 = scmp.ne.s32.totalorder %s177, %s178
      %p190 = scmp.eq.s32.totalorder %s28, 1
      %p191 = por %p189, %p190
      %p193 = scmp.ne.s32.totalorder %s178, %s192
      %p194 = scmp.eq.s32.totalorder %s28, 0
      %p195 = por %p193, %p194
      %s196 = ssub.s32 %s29, %s41
      %s197 = ssub.s32 %s30, %s37
      %s198 = sor.u32 %s196, %s197
      %p199 = scmp.eq.s32.totalorder %s198, 0
      %s201 = sadd.s32 %s200, 1
      %s202 = scalar_select %p199, %s200, %s201
      %p205 = pneg %p199
      %p206 = scmp.eq.s32.totalorder %s22, 1
      %p207 = por %p205, %p206
      %p208 = scmp.ne.s32.totalorder %s200, %s203
      %p209 = scmp.eq.s32.totalorder %s22, 0
      %p210 = por %p208, %p209
      %p211 = scmp.ne.s32.totalorder %s200, %s203
      %p212 = scmp.eq.s32.totalorder %s27, 1
      %p213 = por %p211, %p212
      %p214 = scmp.ne.s32.totalorder %s203, %s204
      %p215 = scmp.eq.s32.totalorder %s27, 0
      %p216 = por %p214, %p215
      %p217 = scmp.ne.s32.totalorder %s203, %s204
      %p218 = scmp.eq.s32.totalorder %s28, 1
      %p219 = por %p217, %p218
      %p221 = scmp.ne.s32.totalorder %s204, %s220
      %p222 = scmp.eq.s32.totalorder %s28, 0
      %p223 = por %p221, %p222
      %s224 = ssub.s32 %s29, %s41
      %s225 = ssub.s32 %s30, %s37
      %s226 = sor.u32 %s224, %s225
      %p227 = scmp.eq.s32.totalorder %s226, 0
      %s229 = sadd.s32 %s228, 1
      %s230 = scalar_select %p227, %s228, %s229
      %p233 = pneg %p227
      %p234 = scmp.eq.s32.totalorder %s22, 1
      %p235 = por %p233, %p234
      %p236 = scmp.ne.s32.totalorder %s228, %s231
      %p237 = scmp.eq.s32.totalorder %s22, 0
      %p238 = por %p236, %p237
      %p239 = scmp.ne.s32.totalorder %s228, %s231
      %p240 = scmp.eq.s32.totalorder %s27, 1
      %p241 = por %p239, %p240
      %p242 = scmp.ne.s32.totalorder %s231, %s232
      %p243 = scmp.eq.s32.totalorder %s27, 0
      %p244 = por %p242, %p243
      %p245 = scmp.ne.s32.totalorder %s231, %s232
      %p246 = scmp.eq.s32.totalorder %s28, 1
      %p247 = por %p245, %p246
      %p249 = scmp.ne.s32.totalorder %s232, %s248
      %p250 = scmp.eq.s32.totalorder %s28, 0
      %p251 = por %p249, %p250
      %s252 = ssub.s32 %s29, %s41
      %s253 = ssub.s32 %s30, %s37
      %s254 = sor.u32 %s252, %s253
      %p255 = scmp.eq.s32.totalorder %s254, 0
      %s257 = sadd.s32 %s256, 1
      %s258 = scalar_select %p255, %s256, %s257
      %p261 = pneg %p255
      %p262 = scmp.eq.s32.totalorder %s22, 1
      %p263 = por %p261, %p262
      %p264 = scmp.ne.s32.totalorder %s256, %s259
      %p265 = scmp.eq.s32.totalorder %s22, 0
      %p266 = por %p264, %p265
      %p267 = scmp.ne.s32.totalorder %s256, %s259
      %p268 = scmp.eq.s32.totalorder %s27, 1
      %p269 = por %p267, %p268
      %p270 = scmp.ne.s32.totalorder %s259, %s260
      %p271 = scmp.eq.s32.totalorder %s27, 0
      %p272 = por %p270, %p271
      %p273 = scmp.ne.s32.totalorder %s259, %s260
      %p274 = scmp.eq.s32.totalorder %s28, 1
      %p275 = por %p273, %p274
      %p277 = scmp.ne.s32.totalorder %s260, %s276
      %p278 = scmp.eq.s32.totalorder %s28, 0
      %p279 = por %p277, %p278
      %p280 = scmp.le.s32.totalorder 1, %s22
      %p281 = scmp.lt.s32.totalorder %s22, 3
      %p282 = pnand %p280, %p281
      %p283 = pneg %p282
      // Predicated region
      $region9: #{tpu_custom_call.1} parent=5 // pred_check
        _
      $region10: #{tpu_custom_call.1} parent=5 // pred_check_branch
        %285 = sbr.rel (%p282) target = $region12
      $region11: #{tpu_custom_call.1} parent=5 // pred_region
        %s286 = ssub.s32 %s22, 1
        // Predicated region
        $region13: #{tpu_custom_call.1} parent=11 // pred_check
          %p287 = pneg %p83
        $region14: #{tpu_custom_call.1} parent=11 // pred_check_branch
          %289 = sbr.rel (%p287) target = $region16
        $region15: #{tpu_custom_call.1} parent=11 // pred_region
          _
        $region16: #{tpu_custom_call.1} parent=11 // pred_fallthru
          _
        // Predicated region
        $region17: #{tpu_custom_call.1} parent=11 // pred_check
          %p290 = pneg %p104
        $region18: #{tpu_custom_call.1} parent=11 // pred_check_branch
          %292 = sbr.rel (%p290) target = $region20
        $region19: #{tpu_custom_call.1} parent=11 // pred_region
          _
        $region20: #{tpu_custom_call.1} parent=11 // pred_fallthru
          _
        // Predicated region
        $region21: #{tpu_custom_call.1} parent=11 // pred_check
          %p293 = pneg %p125
        $region22: #{tpu_custom_call.1} parent=11 // pred_check_branch
          %295 = sbr.rel (%p293) target = $region24
        $region23: #{tpu_custom_call.1} parent=11 // pred_region
          _
        $region24: #{tpu_custom_call.1} parent=11 // pred_fallthru
          _
        // Predicated region
        $region25: #{tpu_custom_call.1} parent=11 // pred_check
          %p296 = pneg %p146
        $region26: #{tpu_custom_call.1} parent=11 // pred_check_branch
          %298 = sbr.rel (%p296) target = $region28
        $region27: #{tpu_custom_call.1} parent=11 // pred_region
          _
        $region28: #{tpu_custom_call.1} parent=11 // pred_fallthru
          _
        // Predicated region
        $region29: #{tpu_custom_call.1} parent=11 // pred_check
          %p299 = pneg %p167
        $region30: #{tpu_custom_call.1} parent=11 // pred_check_branch
          %301 = sbr.rel (%p299) target = $region32
        $region31: #{tpu_custom_call.1} parent=11 // pred_region
          _
        $region32: #{tpu_custom_call.1} parent=11 // pred_fallthru
          _
        // Predicated region
        $region33: #{tpu_custom_call.1} parent=11 // pred_check
          %p302 = pneg %p188
        $region34: #{tpu_custom_call.1} parent=11 // pred_check_branch
          %304 = sbr.rel (%p302) target = $region36
        $region35: #{tpu_custom_call.1} parent=11 // pred_region
          _
        $region36: #{tpu_custom_call.1} parent=11 // pred_fallthru
          _
      $region12: #{tpu_custom_call.1} parent=5 // pred_fallthru
        _
      %p305 = scmp.lt.s32.totalorder %s22, 2
      // Predicated region
      $region37: #{tpu_custom_call.1} parent=5 // pred_check
        %p306 = pneg %p305
      $region38: #{tpu_custom_call.1} parent=5 // pred_check_branch
        %308 = sbr.rel (%p306) target = $region40
      $region39: #{tpu_custom_call.1} parent=5 // pred_region
        // Predicated region
        $region41: #{tpu_custom_call.1} parent=39 // pred_check
          %p309 = pneg %p56
        $region42: #{tpu_custom_call.1} parent=39 // pred_check_branch
          %311 = sbr.rel (%p309) target = $region44
        $region43: #{tpu_custom_call.1} parent=39 // pred_region
          %p312 = scmp.lt.s32.totalorder %s29, 1
          %s313 = scalar_select %p312, %s29, 1
          %p314 = scmp.lt.s32.totalorder %s30, 0
          %s315 = scalar_select %p314, %s30, 0
          %s316 = smul.addr %s315, 3
          %s317 = smul.addr %s313, 3
          %s318 = sadd.s32 %s316, %s317
          %s319 = smul.addr %s318, 4
          %s320 = scalar_lea.vmem %s0, %s319
        $region44: #{tpu_custom_call.1} parent=39 // pred_fallthru
          _
      $region40: #{tpu_custom_call.1} parent=5 // pred_fallthru
        _
      %p321 = scmp.le.s32.totalorder 1, %s22
      %p322 = scmp.lt.s32.totalorder %s22, 3
      %p323 = pnand %p321, %p322
      %p324 = pneg %p323
      // Predicated region
      $region45: #{tpu_custom_call.1} parent=5 // pred_check
        _
      $region46: #{tpu_custom_call.1} parent=5 // pred_check_branch
        %326 = sbr.rel (%p323) target = $region48
      $region47: #{tpu_custom_call.1} parent=5 // pred_region
        %s327 = ssub.s32 %s22, 1
        %p328 = scmp.lt.s32.totalorder %s31, 1
        %s329 = scalar_select %p328, %s31, 1
        %p330 = scmp.lt.s32.totalorder %s32, 0
        %s331 = scalar_select %p330, %s32, 0
        %s332 = smul.addr %s331, 3
        %s333 = smul.addr %s329, 3
        %s334 = sadd.s32 %s332, %s333
        %s335 = smul.addr %s334, 4
        %s336 = scalar_lea.vmem %s0, %s335
        %p337 = pneg %p62
        %p338 = pneg %p59
        %p339 = pneg %p83
        %p340 = pneg %p80
        %p341 = pneg %p104
        %p342 = pneg %p101
        %p343 = pneg %p125
        %p344 = pneg %p122
        %p345 = pneg %p146
        %p346 = pneg %p143
        %p347 = pneg %p167
        %p348 = pneg %p164
        %p349 = pneg %p188
        %p350 = pneg %p185
        %p351 = pneg %p216
        %p352 = pneg %p213
        %p353 = scmp.lt.s32.totalorder %s31, 1
        %s354 = scalar_select %p353, %s31, 1
        %p355 = scmp.lt.s32.totalorder %s32, 0
        %s356 = scalar_select %p355, %s32, 0
        %s357 = smul.addr %s354, 2
        %s358 = sadd.s32 %s356, %s357
        %s359 = smul.addr %s358, 8
        %s360 = scalar_lea.vmem %s7, %s359
        %p361 = pneg %p244
        %p362 = pneg %p241
        %s363 = sand.u32 %s231, 1
        %s364 = scalar_lea.sflag [#allocation3], %s363
        %s365 = sand.u32 %s231, 1
        %s366 = smul.addr %s365, 4
        %s367 = scalar_lea.vmem [#allocation2], %s366
        %p368 = pneg %p272
        %p369 = pneg %p269
        %s370 = sand.u32 %s259, 1
        %s371 = scalar_lea.sflag [#allocation5], %s370
        %s372 = sand.u32 %s259, 1
        %s373 = smul.addr %s372, 4
        %s374 = scalar_lea.vmem [#allocation4], %s373
        %p375 = scmp.lt.s32.totalorder %s31, 1
        %s376 = scalar_select %p375, %s31, 1
        %p377 = scmp.lt.s32.totalorder %s32, 0
        %s378 = scalar_select %p377, %s32, 0
        %s379 = smul.addr %s378, 3
        %s380 = smul.addr %s376, 3
        %s381 = sadd.s32 %s379, %s380
        %s382 = smul.addr %s381, 4
        %s383 = scalar_lea.vmem %s0, %s382
        %p384 = scmp.lt.s32.totalorder %s31, 1
        %s385 = scalar_select %p384, %s31, 1
        %p386 = scmp.lt.s32.totalorder %s32, 0
        %s387 = scalar_select %p386, %s32, 0
        %s388 = smul.addr %s385, 2
        %s389 = sadd.s32 %s387, %s388
        %s390 = smul.addr %s389, 8
        %s391 = scalar_lea.vmem %s7, %s390
        %v393 = vld [vmem:[%s383] sm:$0xc]
        %v394 = vld [vmem:[%s383 + $0x4] sm:$0x7]
        %v395 = vld [vmem:[%s383] sm:$0x8]
        %v396 = vld [vmem:[%s383 + $0x4] sm:$0xf]
        %v397 = vld [vmem:[%s383 + $0x8] sm:$0x1]
        %v400 = vunpack.c.l.b16 %v393
        %v401 = vunpack.c.l.b16 %v394
        %v402 = vpack.c.b16 %v401, %v400
        %403 = vrot.lane.b32.xlu0 %v402, 104
        %v404 = vpop.permute.xlu0 %403
        %v406 = vshrl.u32 %v402, 16
        %v408 = vshll.u32 %v402, 16
        %v410 = vrot.slane %v408, 1
        %v411 = vor.u32 %v406, %v410
        %412 = vrot.lane.b32.xlu0 %v411, 56
        %v413 = vpop.permute.xlu0 %412
        %v416 = vunpack.c.l.b16 %v395
        %v417 = vunpack.c.l.b16 %v396
        %v418 = vpack.c.b16 %v417, %v416
        %v419 = vrot.slane %v418, 1
        %420 = vrot.lane.b32.xlu0 %v419, 8
        %v421 = vpop.permute.xlu0 %420
        %v423 = vshrl.u32 %v418, 16
        %v425 = vrot.slane %v423, 1
        %v426 = vshll.u32 %v418, 16
        %v428 = vrot.slane %v426, 2
        %v429 = vor.u32 %v425, %v428
        %430 = vrot.lane.b32.xlu0 %v429, 88
        %v431 = vpop.permute.xlu0 %430
        %v433 = vunpack.c.l.b16 %v397
        %v434 = vpack.c.b16 %v433, %v417
        %v435 = vrot.slane %v434, 6
        %436 = vrot.lane.b32.xlu0 %v435, 40
        %v437 = vpop.permute.xlu0 %436
        %vm438 = vcmask 654336
        %v441 = vsel %vm438, %v404, %v413
        %vm442 = vcmask 261120
        %v444 = vsel %vm442, %v413, %v421
        %vm445 = vcmask 916480
        %v447 = vsel %vm445, %v444, %v431
        %vm448 = vcmask 523264
        %v450 = vsel %vm448, %v431, %v437
        %v451 = vld [vmem:[%s1] sm:$0xf]
        %v452 = vld [vmem:[%s1 + $0x4] sm:$0xf]
        %v453 = vld [vmem:[%s1 + $0x8] sm:$0xf]
        %v454 = vld [vmem:[%s1 + $0xc] sm:$0xf]
        %v455 = vld [vmem:[%s1 + $0x10] sm:$0xf]
        %v456 = vld [vmem:[%s1 + $0x14] sm:$0xf]
        %v457 = vld [vmem:[%s1 + $0x18] sm:$0xf]
        %v458 = vld [vmem:[%s1 + $0x1c] sm:$0xf]
        %v459 = vld [vmem:[%s1 + $0x20] sm:$0xf]
        %v460 = vld [vmem:[%s1 + $0x24] sm:$0xf]
        %v461 = vld [vmem:[%s1 + $0x28] sm:$0xf]
        %v462 = vld [vmem:[%s1 + $0x2c] sm:$0xf]
        %v463 = vld [vmem:[%s1 + $0x30] sm:$0xf]
        %v464 = vld [vmem:[%s1 + $0x34] sm:$0xf]
        %v465 = vld [vmem:[%s1 + $0x38] sm:$0xf]
        %v466 = vld [vmem:[%s1 + $0x3c] sm:$0xf]
        %v467 = vld [vmem:[%s1 + $0x40] sm:$0xf]
        %v468 = vld [vmem:[%s1 + $0x44] sm:$0xf]
        %v469 = vld [vmem:[%s1 + $0x48] sm:$0xf]
        %v470 = vld [vmem:[%s1 + $0x4c] sm:$0xf]
        %v471 = vld [vmem:[%s1 + $0x50] sm:$0xf]
        %v472 = vld [vmem:[%s1 + $0x54] sm:$0xf]
        %v473 = vld [vmem:[%s1 + $0x58] sm:$0xf]
        %v474 = vld [vmem:[%s1 + $0x5c] sm:$0xf]
        %v475 = vld [vmem:[%s1 + $0x60] sm:$0xf]
        %v476 = vld [vmem:[%s1 + $0x64] sm:$0xf]
        %v477 = vld [vmem:[%s1 + $0x68] sm:$0xf]
        %v478 = vld [vmem:[%s1 + $0x6c] sm:$0xf]
        %v479 = vld [vmem:[%s1 + $0x70] sm:$0xf]
        %v480 = vld [vmem:[%s1 + $0x74] sm:$0xf]
        %v481 = vld [vmem:[%s1 + $0x78] sm:$0xf]
        %v482 = vld [vmem:[%s1 + $0x7c] sm:$0xf]
        %v483 = vld [vmem:[%s1 + $0x80] sm:$0xf]
        %v484 = vld [vmem:[%s1 + $0x84] sm:$0xf]
        %v485 = vld [vmem:[%s1 + $0x88] sm:$0xf]
        %v486 = vld [vmem:[%s1 + $0x8c] sm:$0xf]
        %v487 = vld [vmem:[%s1 + $0x90] sm:$0xf]
        %v488 = vld [vmem:[%s1 + $0x94] sm:$0xf]
        %v489 = vld [vmem:[%s1 + $0x98] sm:$0xf]
        %v490 = vld [vmem:[%s1 + $0x9c] sm:$0xf]
        %v491 = vld [vmem:[%s1 + $0xa0] sm:$0xf]
        %v492 = vld [vmem:[%s1 + $0xa4] sm:$0xf]
        %v493 = vld [vmem:[%s1 + $0xa8] sm:$0xf]
        %v494 = vld [vmem:[%s1 + $0xac] sm:$0xf]
        %v495 = vld [vmem:[%s1 + $0xb0] sm:$0xf]
        %v496 = vld [vmem:[%s1 + $0xb4] sm:$0xf]
        %v497 = vld [vmem:[%s1 + $0xb8] sm:$0xf]
        %v498 = vld [vmem:[%s1 + $0xbc] sm:$0xf]
        %v499 = vld [vmem:[%s1 + $0xc0] sm:$0xf]
        %v500 = vld [vmem:[%s1 + $0xc4] sm:$0xf]
        %v501 = vld [vmem:[%s4] sm:$0x1]
        %v503 = vlaneseq
        %v504 = vshrl.u32 %v503, 7
        %v505 = vsub.s32 0, %v504
        %v506 = vrot.slane %v501, %v505
        %v511 = vrot.slane %v441, 2
        %v512 = vrot.slane %v447, 2
        %v513 = vrot.slane %v450, 2
        %v514 = vrot.slane %v437, 2
        %v568 = vunpack.c.l.b16 %v451
        %v569 = vunpack.c.l.b16 %v452
        %v570 = vunpack.c.l.b16 %v453
        %v571 = vunpack.c.l.b16 %v454
        %v572 = vunpack.c.l.b16 %v455
        %v573 = vunpack.c.l.b16 %v456
        %v574 = vunpack.c.l.b16 %v457
        %v575 = vunpack.c.l.b16 %v458
        %v576 = vunpack.c.l.b16 %v459
        %v577 = vunpack.c.l.b16 %v460
        %v578 = vunpack.c.l.b16 %v461
        %v579 = vunpack.c.l.b16 %v462
        %v580 = vunpack.c.l.b16 %v463
        %v581 = vunpack.c.l.b16 %v464
        %v582 = vunpack.c.l.b16 %v465
        %v583 = vunpack.c.l.b16 %v466
        %v584 = vunpack.c.l.b16 %v467
        %v585 = vunpack.c.l.b16 %v468
        %v586 = vunpack.c.l.b16 %v469
        %v587 = vunpack.c.l.b16 %v470
        %v588 = vunpack.c.l.b16 %v471
        %v589 = vunpack.c.l.b16 %v472
        %v590 = vunpack.c.l.b16 %v473
        %v591 = vunpack.c.l.b16 %v474
        %v592 = vunpack.c.l.b16 %v475
        %v593 = vunpack.c.l.b16 %v476
        %v594 = vunpack.c.l.b16 %v477
        %v595 = vunpack.c.l.b16 %v478
        %v596 = vunpack.c.l.b16 %v479
        %v597 = vunpack.c.l.b16 %v480
        %v598 = vunpack.c.l.b16 %v481
        %v599 = vunpack.c.l.b16 %v482
        %v600 = vunpack.c.l.b16 %v483
        %v601 = vunpack.c.l.b16 %v484
        %v602 = vunpack.c.l.b16 %v485
        %v603 = vunpack.c.l.b16 %v486
        %v604 = vunpack.c.l.b16 %v487
        %v605 = vunpack.c.l.b16 %v488
        %v606 = vunpack.c.l.b16 %v489
        %v607 = vunpack.c.l.b16 %v490
        %v608 = vunpack.c.l.b16 %v491
        %v609 = vunpack.c.l.b16 %v492
        %v610 = vunpack.c.l.b16 %v493
        %v611 = vunpack.c.l.b16 %v494
        %v612 = vunpack.c.l.b16 %v495
        %v613 = vunpack.c.l.b16 %v496
        %v614 = vunpack.c.l.b16 %v497
        %v615 = vunpack.c.l.b16 %v498
        %v616 = vunpack.c.l.b16 %v499
        %v617 = vunpack.c.l.b16 %v500
        %v618 = vpack.c.b16 %v569, %v568
        %v619 = vpack.c.b16 %v571, %v570
        %v620 = vpack.c.b16 %v573, %v572
        %v621 = vpack.c.b16 %v575, %v574
        %v622 = vpack.c.b16 %v577, %v576
        %v623 = vpack.c.b16 %v579, %v578
        %v624 = vpack.c.b16 %v581, %v580
        %v625 = vpack.c.b16 %v583, %v582
        %v626 = vpack.c.b16 %v585, %v584
        %v627 = vpack.c.b16 %v587, %v586
        %v628 = vpack.c.b16 %v589, %v588
        %v629 = vpack.c.b16 %v591, %v590
        %v630 = vpack.c.b16 %v593, %v592
        %v631 = vpack.c.b16 %v595, %v594
        %v632 = vpack.c.b16 %v597, %v596
        %v633 = vpack.c.b16 %v599, %v598
        %v634 = vpack.c.b16 %v601, %v600
        %v635 = vpack.c.b16 %v603, %v602
        %v636 = vpack.c.b16 %v605, %v604
        %v637 = vpack.c.b16 %v607, %v606
        %v638 = vpack.c.b16 %v609, %v608
        %v639 = vpack.c.b16 %v611, %v610
        %v640 = vpack.c.b16 %v613, %v612
        %v641 = vpack.c.b16 %v615, %v614
        %v642 = vpack.c.b16 %v617, %v616
        %vm668 = vcmask 130048
        %v670 = vsel %vm668, %v514, 0
        %672 = vmatprep.subr.bf16.mxu0 0
        %673 = vmatpush1.bf16.msra.mxu0 %v625
        %674 = vmatprep.subr.bf16.mxu0 0
        %675 = vmatpush1.bf16.msra.mxu0 %v624
        %676 = vmatprep.subr.bf16.mxu0 0
        %677 = vmatpush1.bf16.msra.mxu0 %v623
        %678 = vmatprep.subr.bf16.mxu0 0
        %679 = vmatpush1.bf16.msra.mxu0 %v622
        %680 = vmatprep.subr.bf16.mxu0 0
        %681 = vmatpush1.bf16.msra.mxu0 %v621
        %682 = vmatprep.subr.bf16.mxu0 0
        %683 = vmatpush1.bf16.msra.mxu0 %v620
        %684 = vmatprep.subr.bf16.mxu0 0
        %685 = vmatpush1.bf16.msra.mxu0 %v619
        %686 = vmatprep.subr.bf16.mxu0 0
        %687 = vmatpush1.bf16.msra.mxu0 %v618
        %688 = vmatprep.subr.bf16.mxu0 0
        %689 = vmatpush2.bf16.msra.mxu0 %v633
        %690 = vmatprep.subr.bf16.mxu0 0
        %691 = vmatpush2.bf16.msra.mxu0 %v632
        %692 = vmatprep.subr.bf16.mxu0 0
        %693 = vmatpush2.bf16.msra.mxu0 %v631
        %694 = vmatprep.subr.bf16.mxu0 0
        %695 = vmatpush2.bf16.msra.mxu0 %v630
        %696 = vmatprep.subr.bf16.mxu0 0
        %697 = vmatpush2.bf16.msra.mxu0 %v629
        %698 = vmatprep.subr.bf16.mxu0 0
        %699 = vmatpush2.bf16.msra.mxu0 %v628
        %700 = vmatprep.subr.bf16.mxu0 0
        %701 = vmatpush2.bf16.msra.mxu0 %v627
        %702 = vmatprep.subr.bf16.mxu0 0
        %703 = vmatpush2.bf16.msra.mxu0 %v626
        %704 = vmatprep.mubr.bf16.mxu0 %v512
        %705 = vmatmul.mubr.bf16.gmra.mxu0 %v511
        %v706 = vpop.f32.mrf.mxu0
        %v707 = vadd.f32 %v506, %v706
        %v708 = vpop.f32.mrf.mxu0
        %v709 = vpop.f32.mrf.mxu0
        %v710 = vadd.f32 %v506, %v709
        %v711 = vpop.f32.mrf.mxu0
        %712 = vdwg.mxu0
        %713 = vmatprep.subr.bf16.mxu0 0
        %714 = vmatpush1.bf16.msra.mxu0 %v641
        %715 = vmatprep.subr.bf16.mxu0 0
        %716 = vmatpush1.bf16.msra.mxu0 %v640
        %717 = vmatprep.subr.bf16.mxu0 0
        %718 = vmatpush1.bf16.msra.mxu0 %v639
        %719 = vmatprep.subr.bf16.mxu0 0
        %720 = vmatpush1.bf16.msra.mxu0 %v638
        %721 = vmatprep.subr.bf16.mxu0 0
        %722 = vmatpush1.bf16.msra.mxu0 %v637
        %723 = vmatprep.subr.bf16.mxu0 0
        %724 = vmatpush1.bf16.msra.mxu0 %v636
        %725 = vmatprep.subr.bf16.mxu0 0
        %726 = vmatpush1.bf16.msra.mxu0 %v635
        %727 = vmatprep.subr.bf16.mxu0 0
        %728 = vmatpush1.bf16.msra.mxu0 %v634
        %729 = vmatprep.subr.bf16.mxu0 0
        %730 = vmatpush2.bf16.msra.mxu0 0
        %731 = vmatprep.subr.bf16.mxu0 0
        %732 = vmatpush2.bf16.msra.mxu0 0
        %733 = vmatprep.subr.bf16.mxu0 0
        %734 = vmatpush2.bf16.msra.mxu0 0
        %735 = vmatprep.subr.bf16.mxu0 0
        %736 = vmatpush2.bf16.msra.mxu0 0
        %737 = vmatprep.subr.bf16.mxu0 0
        %738 = vmatpush2.bf16.msra.mxu0 0
        %739 = vmatprep.subr.bf16.mxu0 0
        %740 = vmatpush2.bf16.msra.mxu0 0
        %741 = vmatprep.subr.bf16.mxu0 0
        %742 = vmatpush2.bf16.msra.mxu0 0
        %743 = vmatprep.subr.bf16.mxu0 0
        %744 = vmatpush2.bf16.msra.mxu0 %v642
        %745 = vmatprep.mubr.bf16.mxu0 %v670
        %746 = vmatmul.mubr.bf16.gmra.mxu0 %v513
        %v747 = vpop.f32.mrf.mxu0
        %v748 = vadd.f32 %v707, %v747
        %v749 = vpop.f32.mrf.mxu0
        %v750 = vpop.f32.mrf.mxu0
        %v751 = vadd.f32 %v710, %v750
        %v752 = vpop.f32.mrf.mxu0
        %753 = vdwg.mxu0
        %754 = vst [vmem:[%s391] sm:$0xff] %v748
        %755 = vst [vmem:[%s391 + $0x8] sm:$0x1] %v751
        %v756 = vld [vmem:[%s383] sm:$0x2]
        %v757 = vld [vmem:[%s383] sm:$0x6]
        %v758 = vld [vmem:[%s383] sm:$0x4]
        %v759 = vld [vmem:[%s383] sm:$0xc]
        %v760 = vld [vmem:[%s383] sm:$0x8]
        %v762 = vunpack.c.l.b16 %v756
        %v763 = vpack.c.b16 %v762, %v762
        %764 = vrot.lane.b32.xlu0 %v763, 112
        %v765 = vpop.permute.xlu0 %764
        %v767 = vunpack.c.l.b16 %v757
        %v768 = vpack.c.b16 %v767, %v767
        %v770 = vshrl.u32 %v768, 16
        %v772 = vshll.u32 %v768, 16
        %v774 = vrot.slane %v772, 1
        %v775 = vor.u32 %v770, %v774
        %776 = vrot.lane.b32.xlu0 %v775, 76
        %v777 = vpop.permute.xlu0 %776
        %v779 = vunpack.c.l.b16 %v758
        %v780 = vpack.c.b16 %v779, %v779
        %v781 = vrot.slane %v780, 1
        %782 = vrot.lane.b32.xlu0 %v781, 40
        %v783 = vpop.permute.xlu0 %782
        %v785 = vunpack.c.l.b16 %v759
        %v786 = vpack.c.b16 %v785, %v785
        %v788 = vshrl.u32 %v786, 16
        %v790 = vrot.slane %v788, 1
        %v791 = vshll.u32 %v786, 16
        %v793 = vrot.slane %v791, 2
        %v794 = vor.u32 %v790, %v793
        %795 = vrot.lane.b32.xlu0 %v794, 4
        %v796 = vpop.permute.xlu0 %795
        %v798 = vunpack.c.l.b16 %v760
        %v799 = vpack.c.b16 %v798, %v798
        %v800 = vrot.slane %v799, 2
        %801 = vrot.lane.b32.xlu0 %v800, 96
        %v802 = vpop.permute.xlu0 %801
        %vm803 = vcmask 752640
        %v806 = vsel %vm803, %v765, %v777
        %vm807 = vcmask 457728
        %v809 = vsel %vm807, %v777, %v783
        %vm810 = vcmask 162816
        %v812 = vsel %vm810, %v783, %v796
        %v814 = vsel %vm445, %v812, %v802
        %v815 = vld [vmem:[%s383 + $0x4] sm:$0xc]
        %v816 = vld [vmem:[%s383 + $0x4] sm:$0x8]
        %v817 = vld [vmem:[%s383 + $0x8] sm:$0x1]
        %v818 = vld [vmem:[%s383 + $0x8] sm:$0x3]
        %v820 = vunpack.c.l.b16 %v815
        %v821 = vpack.c.b16 %v820, %v820
        %822 = vrot.lane.b32.xlu0 %v821, 112
        %v823 = vpop.permute.xlu0 %822
        %v825 = vunpack.c.l.b16 %v816
        %v826 = vpack.c.b16 %v825, %v825
        %v828 = vshrl.u32 %v826, 16
        %v830 = vshll.u32 %v826, 16
        %v832 = vrot.slane %v830, 1
        %v833 = vor.u32 %v828, %v832
        %834 = vrot.lane.b32.xlu0 %v833, 76
        %v835 = vpop.permute.xlu0 %834
        %v837 = vunpack.c.l.b16 %v817
        %v838 = vpack.c.b16 %v837, %v825
        %v839 = vrot.slane %v838, 1
        %840 = vrot.lane.b32.xlu0 %v839, 40
        %v841 = vpop.permute.xlu0 %840
        %v842 = vpack.c.b16 %v837, %v837
        %v844 = vshrl.u32 %v842, 16
        %v846 = vrot.slane %v844, 5
        %v847 = vshll.u32 %v842, 16
        %v849 = vrot.slane %v847, 6
        %v850 = vor.u32 %v846, %v849
        %851 = vrot.lane.b32.xlu0 %v850, 4
        %v852 = vpop.permute.xlu0 %851
        %v854 = vunpack.c.l.b16 %v818
        %v855 = vpack.c.b16 %v854, %v854
        %v856 = vrot.slane %v855, 6
        %857 = vrot.lane.b32.xlu0 %v856, 96
        %v858 = vpop.permute.xlu0 %857
        %v861 = vsel %vm803, %v823, %v835
        %v863 = vsel %vm807, %v835, %v841
        %v865 = vsel %vm810, %v841, %v852
        %v867 = vsel %vm445, %v865, %v858
        %v871 = vrot.slane %v806, 1
        %v872 = vrot.slane %v809, 1
        %v873 = vrot.slane %v814, 1
        %v874 = vrot.slane %v802, 1
        %v875 = vshrl.u32 %v861, 16
        %v877 = vrot.slane %v875, 1
        %v878 = vshll.u32 %v861, 16
        %v880 = vrot.slane %v878, 2
        %v881 = vor.u32 %v877, %v880
        %v882 = vshrl.u32 %v863, 16
        %v884 = vrot.slane %v882, 1
        %v885 = vshll.u32 %v863, 16
        %v887 = vrot.slane %v885, 2
        %v888 = vor.u32 %v884, %v887
        %v889 = vshrl.u32 %v867, 16
        %v891 = vrot.slane %v889, 1
        %v892 = vshll.u32 %v867, 16
        %v894 = vrot.slane %v892, 2
        %v895 = vor.u32 %v891, %v894
        %v896 = vshrl.u32 %v858, 16
        %v898 = vrot.slane %v896, 1
        %v899 = vshll.u32 %v858, 16
        %v901 = vrot.slane %v899, 2
        %v902 = vor.u32 %v898, %v901
        %vm903 = vcmask 1040384
        %v906 = vsel %vm903, %v871, %v881
        %v910 = vsel %vm903, %v872, %v888
        %v914 = vsel %vm903, %v873, %v895
        %v918 = vsel %vm903, %v874, %v902
        %v919 = vld [vmem:[%s2] sm:$0xf]
        %v920 = vld [vmem:[%s2 + $0x4] sm:$0xf]
        %v921 = vld [vmem:[%s2 + $0x8] sm:$0xf]
        %v922 = vld [vmem:[%s2 + $0xc] sm:$0xf]
        %v923 = vld [vmem:[%s2 + $0x10] sm:$0xf]
        %v924 = vld [vmem:[%s2 + $0x14] sm:$0xf]
        %v925 = vld [vmem:[%s2 + $0x18] sm:$0xf]
        %v926 = vld [vmem:[%s2 + $0x1c] sm:$0xf]
        %v927 = vld [vmem:[%s2 + $0x20] sm:$0xf]
        %v928 = vld [vmem:[%s2 + $0x24] sm:$0xf]
        %v929 = vld [vmem:[%s2 + $0x28] sm:$0xf]
        %v930 = vld [vmem:[%s2 + $0x2c] sm:$0xf]
        %v931 = vld [vmem:[%s2 + $0x30] sm:$0xf]
        %v932 = vld [vmem:[%s2 + $0x34] sm:$0xf]
        %v933 = vld [vmem:[%s2 + $0x38] sm:$0xf]
        %v934 = vld [vmem:[%s2 + $0x3c] sm:$0xf]
        %v935 = vld [vmem:[%s2 + $0x40] sm:$0xf]
        %v936 = vld [vmem:[%s2 + $0x44] sm:$0xf]
        %v937 = vld [vmem:[%s2 + $0x48] sm:$0xf]
        %v938 = vld [vmem:[%s2 + $0x4c] sm:$0xf]
        %v939 = vld [vmem:[%s2 + $0x50] sm:$0xf]
        %v940 = vld [vmem:[%s2 + $0x54] sm:$0xf]
        %v941 = vld [vmem:[%s2 + $0x58] sm:$0xf]
        %v942 = vld [vmem:[%s2 + $0x5c] sm:$0xf]
        %v943 = vld [vmem:[%s2 + $0x60] sm:$0xf]
        %v944 = vld [vmem:[%s2 + $0x64] sm:$0xf]
        %v945 = vld [vmem:[%s2 + $0x68] sm:$0xf]
        %v946 = vld [vmem:[%s2 + $0x6c] sm:$0xf]
        %v947 = vld [vmem:[%s2 + $0x70] sm:$0xf]
        %v948 = vld [vmem:[%s2 + $0x74] sm:$0xf]
        %v949 = vld [vmem:[%s2 + $0x78] sm:$0xf]
        %v950 = vld [vmem:[%s2 + $0x7c] sm:$0xf]
        %v951 = vld [vmem:[%s2 + $0x80] sm:$0xf]
        %v952 = vld [vmem:[%s2 + $0x84] sm:$0xf]
        %v953 = vld [vmem:[%s2 + $0x88] sm:$0xf]
        %v954 = vld [vmem:[%s2 + $0x8c] sm:$0xf]
        %v955 = vld [vmem:[%s2 + $0x90] sm:$0xf]
        %v956 = vld [vmem:[%s2 + $0x94] sm:$0xf]
        %v957 = vld [vmem:[%s2 + $0x98] sm:$0xf]
        %v958 = vld [vmem:[%s2 + $0x9c] sm:$0xf]
        %v959 = vld [vmem:[%s2 + $0xa0] sm:$0xf]
        %v960 = vld [vmem:[%s2 + $0xa4] sm:$0xf]
        %v961 = vld [vmem:[%s2 + $0xa8] sm:$0xf]
        %v962 = vld [vmem:[%s2 + $0xac] sm:$0xf]
        %v963 = vld [vmem:[%s2 + $0xb0] sm:$0xf]
        %v964 = vld [vmem:[%s2 + $0xb4] sm:$0xf]
        %v965 = vld [vmem:[%s2 + $0xb8] sm:$0xf]
        %v966 = vld [vmem:[%s2 + $0xbc] sm:$0xf]
        %v967 = vld [vmem:[%s2 + $0xc0] sm:$0xf]
        %v968 = vld [vmem:[%s2 + $0xc4] sm:$0xf]
        %v969 = vld [vmem:[%s2 + $0xc8] sm:$0xf]
        %v970 = vld [vmem:[%s2 + $0xcc] sm:$0xf]
        %v971 = vld [vmem:[%s2 + $0xd0] sm:$0xf]
        %v972 = vld [vmem:[%s2 + $0xd4] sm:$0xf]
        %v973 = vld [vmem:[%s2 + $0xd8] sm:$0xf]
        %v974 = vld [vmem:[%s2 + $0xdc] sm:$0xf]
        %v975 = vld [vmem:[%s2 + $0xe0] sm:$0xf]
        %v976 = vld [vmem:[%s2 + $0xe4] sm:$0x3]
        %v977 = vld [vmem:[%s5] sm:$0x1]
        %v979 = vlaneseq
        %v980 = vshrl.u32 %v979, 7
        %v981 = vsub.s32 0, %v980
        %v982 = vrot.slane %v977, %v981
        %v1042 = vunpack.c.l.b16 %v919
        %v1043 = vunpack.c.l.b16 %v920
        %v1044 = vunpack.c.l.b16 %v921
        %v1045 = vunpack.c.l.b16 %v922
        %v1046 = vunpack.c.l.b16 %v923
        %v1047 = vunpack.c.l.b16 %v924
        %v1048 = vunpack.c.l.b16 %v925
        %v1049 = vunpack.c.l.b16 %v926
        %v1050 = vunpack.c.l.b16 %v927
        %v1051 = vunpack.c.l.b16 %v928
        %v1052 = vunpack.c.l.b16 %v929
        %v1053 = vunpack.c.l.b16 %v930
        %v1054 = vunpack.c.l.b16 %v931
        %v1055 = vunpack.c.l.b16 %v932
        %v1056 = vunpack.c.l.b16 %v933
        %v1057 = vunpack.c.l.b16 %v934
        %v1058 = vunpack.c.l.b16 %v935
        %v1059 = vunpack.c.l.b16 %v936
        %v1060 = vunpack.c.l.b16 %v937
        %v1061 = vunpack.c.l.b16 %v938
        %v1062 = vunpack.c.l.b16 %v939
        %v1063 = vunpack.c.l.b16 %v940
        %v1064 = vunpack.c.l.b16 %v941
        %v1065 = vunpack.c.l.b16 %v942
        %v1066 = vunpack.c.l.b16 %v943
        %v1067 = vunpack.c.l.b16 %v944
        %v1068 = vunpack.c.l.b16 %v945
        %v1069 = vunpack.c.l.b16 %v946
        %v1070 = vunpack.c.l.b16 %v947
        %v1071 = vunpack.c.l.b16 %v948
        %v1072 = vunpack.c.l.b16 %v949
        %v1073 = vunpack.c.l.b16 %v950
        %v1074 = vunpack.c.l.b16 %v951
        %v1075 = vunpack.c.l.b16 %v952
        %v1076 = vunpack.c.l.b16 %v953
        %v1077 = vunpack.c.l.b16 %v954
        %v1078 = vunpack.c.l.b16 %v955
        %v1079 = vunpack.c.l.b16 %v956
        %v1080 = vunpack.c.l.b16 %v957
        %v1081 = vunpack.c.l.b16 %v958
        %v1082 = vunpack.c.l.b16 %v959
        %v1083 = vunpack.c.l.b16 %v960
        %v1084 = vunpack.c.l.b16 %v961
        %v1085 = vunpack.c.l.b16 %v962
        %v1086 = vunpack.c.l.b16 %v963
        %v1087 = vunpack.c.l.b16 %v964
        %v1088 = vunpack.c.l.b16 %v965
        %v1089 = vunpack.c.l.b16 %v966
        %v1090 = vunpack.c.l.b16 %v967
        %v1091 = vunpack.c.l.b16 %v968
        %v1092 = vunpack.c.l.b16 %v969
        %v1093 = vunpack.c.l.b16 %v970
        %v1094 = vunpack.c.l.b16 %v971
        %v1095 = vunpack.c.l.b16 %v972
        %v1096 = vunpack.c.l.b16 %v973
        %v1097 = vunpack.c.l.b16 %v974
        %v1098 = vunpack.c.l.b16 %v975
        %v1099 = vunpack.c.l.b16 %v976
        %v1100 = vpack.c.b16 %v1043, %v1042
        %v1101 = vpack.c.b16 %v1045, %v1044
        %v1102 = vpack.c.b16 %v1047, %v1046
        %v1103 = vpack.c.b16 %v1049, %v1048
        %v1104 = vpack.c.b16 %v1051, %v1050
        %v1105 = vpack.c.b16 %v1053, %v1052
        %v1106 = vpack.c.b16 %v1055, %v1054
        %v1107 = vpack.c.b16 %v1057, %v1056
        %v1108 = vpack.c.b16 %v1059, %v1058
        %v1109 = vpack.c.b16 %v1061, %v1060
        %v1110 = vpack.c.b16 %v1063, %v1062
        %v1111 = vpack.c.b16 %v1065, %v1064
        %v1112 = vpack.c.b16 %v1067, %v1066
        %v1113 = vpack.c.b16 %v1069, %v1068
        %v1114 = vpack.c.b16 %v1071, %v1070
        %v1115 = vpack.c.b16 %v1073, %v1072
        %v1116 = vpack.c.b16 %v1075, %v1074
        %v1117 = vpack.c.b16 %v1077, %v1076
        %v1118 = vpack.c.b16 %v1079, %v1078
        %v1119 = vpack.c.b16 %v1081, %v1080
        %v1120 = vpack.c.b16 %v1083, %v1082
        %v1121 = vpack.c.b16 %v1085, %v1084
        %v1122 = vpack.c.b16 %v1087, %v1086
        %v1123 = vpack.c.b16 %v1089, %v1088
        %v1124 = vpack.c.b16 %v1091, %v1090
        %v1125 = vpack.c.b16 %v1093, %v1092
        %v1126 = vpack.c.b16 %v1095, %v1094
        %v1127 = vpack.c.b16 %v1097, %v1096
        %v1128 = vpack.c.b16 %v1099, %v1098
        %vm1157 = vcmask 621568
        %v1158 = vsel %vm1157, %v918, 0
        %vm1160 = vcmask 1045504
        %v1162 = vsel %vm1160, %v1128, 0
        %1164 = vmatprep.subr.bf16.mxu0 0
        %1165 = vmatpush1.bf16.msra.mxu0 %v1107
        %1166 = vmatprep.subr.bf16.mxu0 0
        %1167 = vmatpush1.bf16.msra.mxu0 %v1106
        %1168 = vmatprep.subr.bf16.mxu0 0
        %1169 = vmatpush1.bf16.msra.mxu0 %v1105
        %1170 = vmatprep.subr.bf16.mxu0 0
        %1171 = vmatpush1.bf16.msra.mxu0 %v1104
        %1172 = vmatprep.subr.bf16.mxu0 0
        %1173 = vmatpush1.bf16.msra.mxu0 %v1103
        %1174 = vmatprep.subr.bf16.mxu0 0
        %1175 = vmatpush1.bf16.msra.mxu0 %v1102
        %1176 = vmatprep.subr.bf16.mxu0 0
        %1177 = vmatpush1.bf16.msra.mxu0 %v1101
        %1178 = vmatprep.subr.bf16.mxu0 0
        %1179 = vmatpush1.bf16.msra.mxu0 %v1100
        %1180 = vmatprep.subr.bf16.mxu0 0
        %1181 = vmatpush2.bf16.msra.mxu0 %v1115
        %1182 = vmatprep.subr.bf16.mxu0 0
        %1183 = vmatpush2.bf16.msra.mxu0 %v1114
        %1184 = vmatprep.subr.bf16.mxu0 0
        %1185 = vmatpush2.bf16.msra.mxu0 %v1113
        %1186 = vmatprep.subr.bf16.mxu0 0
        %1187 = vmatpush2.bf16.msra.mxu0 %v1112
        %1188 = vmatprep.subr.bf16.mxu0 0
        %1189 = vmatpush2.bf16.msra.mxu0 %v1111
        %1190 = vmatprep.subr.bf16.mxu0 0
        %1191 = vmatpush2.bf16.msra.mxu0 %v1110
        %1192 = vmatprep.subr.bf16.mxu0 0
        %1193 = vmatpush2.bf16.msra.mxu0 %v1109
        %1194 = vmatprep.subr.bf16.mxu0 0
        %1195 = vmatpush2.bf16.msra.mxu0 %v1108
        %1196 = vmatprep.mubr.bf16.mxu0 %v910
        %1197 = vmatmul.mubr.bf16.gmra.mxu0 %v906
        %v1198 = vpop.f32.mrf.mxu0
        %v1199 = vadd.f32 %v982, %v1198
        %v1200 = vpop.f32.mrf.mxu0
        %v1201 = vpop.f32.mrf.mxu0
        %v1202 = vpop.f32.mrf.mxu0
        %1203 = vdwg.mxu0
        %1204 = vmatprep.subr.bf16.mxu0 0
        %1205 = vmatpush1.bf16.msra.mxu0 %v1123
        %1206 = vmatprep.subr.bf16.mxu0 0
        %1207 = vmatpush1.bf16.msra.mxu0 %v1122
        %1208 = vmatprep.subr.bf16.mxu0 0
        %1209 = vmatpush1.bf16.msra.mxu0 %v1121
        %1210 = vmatprep.subr.bf16.mxu0 0
        %1211 = vmatpush1.bf16.msra.mxu0 %v1120
        %1212 = vmatprep.subr.bf16.mxu0 0
        %1213 = vmatpush1.bf16.msra.mxu0 %v1119
        %1214 = vmatprep.subr.bf16.mxu0 0
        %1215 = vmatpush1.bf16.msra.mxu0 %v1118
        %1216 = vmatprep.subr.bf16.mxu0 0
        %1217 = vmatpush1.bf16.msra.mxu0 %v1117
        %1218 = vmatprep.subr.bf16.mxu0 0
        %1219 = vmatpush1.bf16.msra.mxu0 %v1116
        %1220 = vmatprep.subr.bf16.mxu0 0
        %1221 = vmatpush2.bf16.msra.mxu0 0
        %1222 = vmatprep.subr.bf16.mxu0 0
        %1223 = vmatpush2.bf16.msra.mxu0 0
        %1224 = vmatprep.subr.bf16.mxu0 0
        %1225 = vmatpush2.bf16.msra.mxu0 0
        %1226 = vmatprep.subr.bf16.mxu0 0
        %1227 = vmatpush2.bf16.msra.mxu0 %v1162
        %1228 = vmatprep.subr.bf16.mxu0 0
        %1229 = vmatpush2.bf16.msra.mxu0 %v1127
        %1230 = vmatprep.subr.bf16.mxu0 0
        %1231 = vmatpush2.bf16.msra.mxu0 %v1126
        %1232 = vmatprep.subr.bf16.mxu0 0
        %1233 = vmatpush2.bf16.msra.mxu0 %v1125
        %1234 = vmatprep.subr.bf16.mxu0 0
        %1235 = vmatpush2.bf16.msra.mxu0 %v1124
        %1236 = vmatprep.mubr.bf16.mxu0 %v1158
        %1237 = vmatmul.mubr.bf16.gmra.mxu0 %v914
        %v1238 = vpop.f32.mrf.mxu0
        %v1239 = vadd.f32 %v1199, %v1238
        %v1240 = vpop.f32.mrf.mxu0
        %v1241 = vpop.f32.mrf.mxu0
        %v1242 = vpop.f32.mrf.mxu0
        %1243 = vdwg.mxu0
        %vm1244 = vcmask 519168
        %1245 = vst.msk [vmem:[%s367] sm:$0xf] %vm1244, %v1239
        %v1246 = vld [vmem:[%s383] sm:$0x1]
        %v1247 = vld [vmem:[%s383] sm:$0x3]
        %v1248 = vld [vmem:[%s383] sm:$0x2]
        %v1249 = vld [vmem:[%s383] sm:$0x6]
        %v1250 = vld [vmem:[%s383] sm:$0x4]
        %v1252 = vunpack.c.l.b16 %v1247
        %v1253 = vpack.c.b16 %v1252, %v1252
        %v1255 = vshrl.u32 %v1253, 16
        %v1257 = vshll.u32 %v1253, 16
        %v1259 = vrot.slane %v1257, 1
        %v1260 = vor.u32 %v1255, %v1259
        %1261 = vrot.lane.b32.xlu0 %v1260, 116
        %v1262 = vpop.permute.xlu0 %1261
        %v1264 = vunpack.c.l.b16 %v1248
        %v1265 = vpack.c.b16 %v1264, %v1264
        %v1266 = vrot.slane %v1265, 1
        %1267 = vrot.lane.b32.xlu0 %v1266, 104
        %v1268 = vpop.permute.xlu0 %1267
        %v1270 = vunpack.c.l.b16 %v1249
        %v1271 = vpack.c.b16 %v1270, %v1270
        %v1273 = vshrl.u32 %v1271, 16
        %v1275 = vrot.slane %v1273, 1
        %v1276 = vshll.u32 %v1271, 16
        %v1278 = vrot.slane %v1276, 2
        %v1279 = vor.u32 %v1275, %v1278
        %1280 = vrot.lane.b32.xlu0 %v1279, 92
        %v1281 = vpop.permute.xlu0 %1280
        %v1283 = vunpack.c.l.b16 %v1250
        %v1284 = vpack.c.b16 %v1283, %v1283
        %v1285 = vrot.slane %v1284, 2
        %1286 = vrot.lane.b32.xlu0 %v1285, 80
        %v1287 = vpop.permute.xlu0 %1286
        %vm1288 = vcmask 949248
        %v1291 = vsel %vm1288, %v1246, %v1262
        %vm1292 = vcmask 850944
        %v1294 = vsel %vm1292, %v1262, %v1268
        %v1296 = vsel %vm803, %v1268, %v1281
        %v1298 = vsel %vm438, %v1281, %v1287
        %v1299 = vld [vmem:[%s383 + $0x4] sm:$0x8]
        %v1300 = vld [vmem:[%s383 + $0x8] sm:$0x1]
        %v1301 = vld [vmem:[%s383 + $0x8] sm:$0x3]
        %v1302 = vld [vmem:[%s383 + $0x8] sm:$0x2]
        %v1303 = vld [vmem:[%s383 + $0x8] sm:$0x6]
        %v1306 = vunpack.c.l.b16 %v1299
        %v1307 = vunpack.c.l.b16 %v1300
        %v1308 = vpack.c.b16 %v1307, %v1306
        %v1309 = vpack.c.b16 %v1307, %v1307
        %v1311 = vshrl.u32 %v1309, 16
        %v1313 = vrot.slane %v1311, 4
        %v1314 = vshll.u32 %v1309, 16
        %v1316 = vrot.slane %v1314, 5
        %v1317 = vor.u32 %v1313, %v1316
        %1318 = vrot.lane.b32.xlu0 %v1317, 116
        %v1319 = vpop.permute.xlu0 %1318
        %v1321 = vunpack.c.l.b16 %v1301
        %v1322 = vpack.c.b16 %v1321, %v1321
        %v1323 = vrot.slane %v1322, 5
        %1324 = vrot.lane.b32.xlu0 %v1323, 104
        %v1325 = vpop.permute.xlu0 %1324
        %v1327 = vunpack.c.l.b16 %v1302
        %v1328 = vpack.c.b16 %v1327, %v1327
        %v1330 = vshrl.u32 %v1328, 16
        %v1332 = vrot.slane %v1330, 5
        %v1333 = vshll.u32 %v1328, 16
        %v1335 = vrot.slane %v1333, 6
        %v1336 = vor.u32 %v1332, %v1335
        %1337 = vrot.lane.b32.xlu0 %v1336, 92
        %v1338 = vpop.permute.xlu0 %1337
        %v1340 = vunpack.c.l.b16 %v1303
        %v1341 = vpack.c.b16 %v1340, %v1340
        %v1342 = vrot.slane %v1341, 6
        %1343 = vrot.lane.b32.xlu0 %v1342, 80
        %v1344 = vpop.permute.xlu0 %1343
        %v1347 = vsel %vm1288, %v1308, %v1319
        %v1349 = vsel %vm1292, %v1319, %v1325
        %v1351 = vsel %vm803, %v1325, %v1338
        %v1353 = vsel %vm438, %v1338, %v1344
        %v1354 = vshrl.u32 %v1347, 16
        %v1356 = vrot.slane %v1354, 2
        %v1357 = vshll.u32 %v1347, 16
        %v1359 = vrot.slane %v1357, 3
        %v1360 = vor.u32 %v1356, %v1359
        %v1361 = vshrl.u32 %v1349, 16
        %v1363 = vrot.slane %v1361, 2
        %v1364 = vshll.u32 %v1349, 16
        %v1366 = vrot.slane %v1364, 3
        %v1367 = vor.u32 %v1363, %v1366
        %v1368 = vshrl.u32 %v1351, 16
        %v1370 = vrot.slane %v1368, 2
        %v1371 = vshll.u32 %v1351, 16
        %v1373 = vrot.slane %v1371, 3
        %v1374 = vor.u32 %v1370, %v1373
        %v1375 = vshrl.u32 %v1353, 16
        %v1377 = vrot.slane %v1375, 2
        %v1378 = vshll.u32 %v1353, 16
        %v1380 = vrot.slane %v1378, 3
        %v1381 = vor.u32 %v1377, %v1380
        %v1382 = vshrl.u32 %v1344, 16
        %v1384 = vrot.slane %v1382, 2
        %v1385 = vshll.u32 %v1344, 16
        %v1387 = vrot.slane %v1385, 3
        %v1388 = vor.u32 %v1384, %v1387
        %v1390 = vsel %vm903, %v1291, %v1360
        %v1393 = vsel %vm903, %v1294, %v1367
        %v1396 = vsel %vm903, %v1296, %v1374
        %v1399 = vsel %vm903, %v1298, %v1381
        %v1402 = vsel %vm903, %v1287, %v1388
        %v1403 = vld [vmem:[%s3] sm:$0xf]
        %v1404 = vld [vmem:[%s3 + $0x4] sm:$0xf]
        %v1405 = vld [vmem:[%s3 + $0x8] sm:$0xf]
        %v1406 = vld [vmem:[%s3 + $0xc] sm:$0xf]
        %v1407 = vld [vmem:[%s3 + $0x10] sm:$0xf]
        %v1408 = vld [vmem:[%s3 + $0x14] sm:$0xf]
        %v1409 = vld [vmem:[%s3 + $0x18] sm:$0xf]
        %v1410 = vld [vmem:[%s3 + $0x1c] sm:$0xf]
        %v1411 = vld [vmem:[%s3 + $0x20] sm:$0xf]
        %v1412 = vld [vmem:[%s3 + $0x24] sm:$0xf]
        %v1413 = vld [vmem:[%s3 + $0x28] sm:$0xf]
        %v1414 = vld [vmem:[%s3 + $0x2c] sm:$0xf]
        %v1415 = vld [vmem:[%s3 + $0x30] sm:$0xf]
        %v1416 = vld [vmem:[%s3 + $0x34] sm:$0xf]
        %v1417 = vld [vmem:[%s3 + $0x38] sm:$0xf]
        %v1418 = vld [vmem:[%s3 + $0x3c] sm:$0xf]
        %v1419 = vld [vmem:[%s3 + $0x40] sm:$0xf]
        %v1420 = vld [vmem:[%s3 + $0x44] sm:$0xf]
        %v1421 = vld [vmem:[%s3 + $0x48] sm:$0xf]
        %v1422 = vld [vmem:[%s3 + $0x4c] sm:$0xf]
        %v1423 = vld [vmem:[%s3 + $0x50] sm:$0xf]
        %v1424 = vld [vmem:[%s3 + $0x54] sm:$0xf]
        %v1425 = vld [vmem:[%s3 + $0x58] sm:$0xf]
        %v1426 = vld [vmem:[%s3 + $0x5c] sm:$0xf]
        %v1427 = vld [vmem:[%s3 + $0x60] sm:$0xf]
        %v1428 = vld [vmem:[%s3 + $0x64] sm:$0xf]
        %v1429 = vld [vmem:[%s3 + $0x68] sm:$0xf]
        %v1430 = vld [vmem:[%s3 + $0x6c] sm:$0xf]
        %v1431 = vld [vmem:[%s3 + $0x70] sm:$0xf]
        %v1432 = vld [vmem:[%s3 + $0x74] sm:$0xf]
        %v1433 = vld [vmem:[%s3 + $0x78] sm:$0xf]
        %v1434 = vld [vmem:[%s3 + $0x7c] sm:$0xf]
        %v1435 = vld [vmem:[%s3 + $0x80] sm:$0xf]
        %v1436 = vld [vmem:[%s3 + $0x84] sm:$0xf]
        %v1437 = vld [vmem:[%s3 + $0x88] sm:$0xf]
        %v1438 = vld [vmem:[%s3 + $0x8c] sm:$0xf]
        %v1439 = vld [vmem:[%s3 + $0x90] sm:$0xf]
        %v1440 = vld [vmem:[%s3 + $0x94] sm:$0xf]
        %v1441 = vld [vmem:[%s3 + $0x98] sm:$0xf]
        %v1442 = vld [vmem:[%s3 + $0x9c] sm:$0xf]
        %v1443 = vld [vmem:[%s3 + $0xa0] sm:$0xf]
        %v1444 = vld [vmem:[%s3 + $0xa4] sm:$0xf]
        %v1445 = vld [vmem:[%s3 + $0xa8] sm:$0xf]
        %v1446 = vld [vmem:[%s3 + $0xac] sm:$0xf]
        %v1447 = vld [vmem:[%s3 + $0xb0] sm:$0xf]
        %v1448 = vld [vmem:[%s3 + $0xb4] sm:$0xf]
        %v1449 = vld [vmem:[%s3 + $0xb8] sm:$0xf]
        %v1450 = vld [vmem:[%s3 + $0xbc] sm:$0xf]
        %v1451 = vld [vmem:[%s3 + $0xc0] sm:$0xf]
        %v1452 = vld [vmem:[%s3 + $0xc4] sm:$0xf]
        %v1453 = vld [vmem:[%s3 + $0xc8] sm:$0xf]
        %v1454 = vld [vmem:[%s3 + $0xcc] sm:$0xf]
        %v1455 = vld [vmem:[%s3 + $0xd0] sm:$0xf]
        %v1456 = vld [vmem:[%s3 + $0xd4] sm:$0xf]
        %v1457 = vld [vmem:[%s3 + $0xd8] sm:$0xf]
        %v1458 = vld [vmem:[%s3 + $0xdc] sm:$0xf]
        %v1459 = vld [vmem:[%s3 + $0xe0] sm:$0xf]
        %v1460 = vld [vmem:[%s3 + $0xe4] sm:$0xf]
        %v1461 = vld [vmem:[%s3 + $0xe8] sm:$0xf]
        %v1462 = vld [vmem:[%s3 + $0xec] sm:$0xf]
        %v1463 = vld [vmem:[%s3 + $0xf0] sm:$0xf]
        %v1464 = vld [vmem:[%s3 + $0xf4] sm:$0xf]
        %v1465 = vld [vmem:[%s3 + $0xf8] sm:$0xf]
        %v1466 = vld [vmem:[%s3 + $0xfc] sm:$0xf]
        %v1467 = vld [vmem:[%s3 + $0x100] sm:$0xf]
        %v1468 = vld [vmem:[%s3 + $0x104] sm:$0xf]
        %v1469 = vld [vmem:[%s3 + $0x108] sm:$0xf]
        %v1470 = vld [vmem:[%s3 + $0x10c] sm:$0xf]
        %v1471 = vld [vmem:[%s3 + $0x110] sm:$0xf]
        %v1472 = vld [vmem:[%s3 + $0x114] sm:$0xf]
        %v1473 = vld [vmem:[%s3 + $0x118] sm:$0xf]
        %v1474 = vld [vmem:[%s3 + $0x11c] sm:$0xf]
        %v1475 = vld [vmem:[%s3 + $0x120] sm:$0x3]
        %v1476 = vld [vmem:[%s6] sm:$0x1]
        %v1478 = vlaneseq
        %v1479 = vshrl.u32 %v1478, 7
        %v1480 = vsub.s32 0, %v1479
        %v1481 = vrot.slane %v1476, %v1480
        %v1556 = vunpack.c.l.b16 %v1403
        %v1557 = vunpack.c.l.b16 %v1404
        %v1558 = vunpack.c.l.b16 %v1405
        %v1559 = vunpack.c.l.b16 %v1406
        %v1560 = vunpack.c.l.b16 %v1407
        %v1561 = vunpack.c.l.b16 %v1408
        %v1562 = vunpack.c.l.b16 %v1409
        %v1563 = vunpack.c.l.b16 %v1410
        %v1564 = vunpack.c.l.b16 %v1411
        %v1565 = vunpack.c.l.b16 %v1412
        %v1566 = vunpack.c.l.b16 %v1413
        %v1567 = vunpack.c.l.b16 %v1414
        %v1568 = vunpack.c.l.b16 %v1415
        %v1569 = vunpack.c.l.b16 %v1416
        %v1570 = vunpack.c.l.b16 %v1417
        %v1571 = vunpack.c.l.b16 %v1418
        %v1572 = vunpack.c.l.b16 %v1419
        %v1573 = vunpack.c.l.b16 %v1420
        %v1574 = vunpack.c.l.b16 %v1421
        %v1575 = vunpack.c.l.b16 %v1422
        %v1576 = vunpack.c.l.b16 %v1423
        %v1577 = vunpack.c.l.b16 %v1424
        %v1578 = vunpack.c.l.b16 %v1425
        %v1579 = vunpack.c.l.b16 %v1426
        %v1580 = vunpack.c.l.b16 %v1427
        %v1581 = vunpack.c.l.b16 %v1428
        %v1582 = vunpack.c.l.b16 %v1429
        %v1583 = vunpack.c.l.b16 %v1430
        %v1584 = vunpack.c.l.b16 %v1431
        %v1585 = vunpack.c.l.b16 %v1432
        %v1586 = vunpack.c.l.b16 %v1433
        %v1587 = vunpack.c.l.b16 %v1434
        %v1588 = vunpack.c.l.b16 %v1435
        %v1589 = vunpack.c.l.b16 %v1436
        %v1590 = vunpack.c.l.b16 %v1437
        %v1591 = vunpack.c.l.b16 %v1438
        %v1592 = vunpack.c.l.b16 %v1439
        %v1593 = vunpack.c.l.b16 %v1440
        %v1594 = vunpack.c.l.b16 %v1441
        %v1595 = vunpack.c.l.b16 %v1442
        %v1596 = vunpack.c.l.b16 %v1443
        %v1597 = vunpack.c.l.b16 %v1444
        %v1598 = vunpack.c.l.b16 %v1445
        %v1599 = vunpack.c.l.b16 %v1446
        %v1600 = vunpack.c.l.b16 %v1447
        %v1601 = vunpack.c.l.b16 %v1448
        %v1602 = vunpack.c.l.b16 %v1449
        %v1603 = vunpack.c.l.b16 %v1450
        %v1604 = vunpack.c.l.b16 %v1451
        %v1605 = vunpack.c.l.b16 %v1452
        %v1606 = vunpack.c.l.b16 %v1453
        %v1607 = vunpack.c.l.b16 %v1454
        %v1608 = vunpack.c.l.b16 %v1455
        %v1609 = vunpack.c.l.b16 %v1456
        %v1610 = vunpack.c.l.b16 %v1457
        %v1611 = vunpack.c.l.b16 %v1458
        %v1612 = vunpack.c.l.b16 %v1459
        %v1613 = vunpack.c.l.b16 %v1460
        %v1614 = vunpack.c.l.b16 %v1461
        %v1615 = vunpack.c.l.b16 %v1462
        %v1616 = vunpack.c.l.b16 %v1463
        %v1617 = vunpack.c.l.b16 %v1464
        %v1618 = vunpack.c.l.b16 %v1465
        %v1619 = vunpack.c.l.b16 %v1466
        %v1620 = vunpack.c.l.b16 %v1467
        %v1621 = vunpack.c.l.b16 %v1468
        %v1622 = vunpack.c.l.b16 %v1469
        %v1623 = vunpack.c.l.b16 %v1470
        %v1624 = vunpack.c.l.b16 %v1471
        %v1625 = vunpack.c.l.b16 %v1472
        %v1626 = vunpack.c.l.b16 %v1473
        %v1627 = vunpack.c.l.b16 %v1474
        %v1628 = vunpack.c.l.b16 %v1475
        %v1629 = vpack.c.b16 %v1557, %v1556
        %v1630 = vpack.c.b16 %v1559, %v1558
        %v1631 = vpack.c.b16 %v1561, %v1560
        %v1632 = vpack.c.b16 %v1563, %v1562
        %v1633 = vpack.c.b16 %v1565, %v1564
        %v1634 = vpack.c.b16 %v1567, %v1566
        %v1635 = vpack.c.b16 %v1569, %v1568
        %v1636 = vpack.c.b16 %v1571, %v1570
        %v1637 = vpack.c.b16 %v1573, %v1572
        %v1638 = vpack.c.b16 %v1575, %v1574
        %v1639 = vpack.c.b16 %v1577, %v1576
        %v1640 = vpack.c.b16 %v1579, %v1578
        %v1641 = vpack.c.b16 %v1581, %v1580
        %v1642 = vpack.c.b16 %v1583, %v1582
        %v1643 = vpack.c.b16 %v1585, %v1584
        %v1644 = vpack.c.b16 %v1587, %v1586
        %v1645 = vpack.c.b16 %v1589, %v1588
        %v1646 = vpack.c.b16 %v1591, %v1590
        %v1647 = vpack.c.b16 %v1593, %v1592
        %v1648 = vpack.c.b16 %v1595, %v1594
        %v1649 = vpack.c.b16 %v1597, %v1596
        %v1650 = vpack.c.b16 %v1599, %v1598
        %v1651 = vpack.c.b16 %v1601, %v1600
        %v1652 = vpack.c.b16 %v1603, %v1602
        %v1653 = vpack.c.b16 %v1605, %v1604
        %v1654 = vpack.c.b16 %v1607, %v1606
        %v1655 = vpack.c.b16 %v1609, %v1608
        %v1656 = vpack.c.b16 %v1611, %v1610
        %v1657 = vpack.c.b16 %v1613, %v1612
        %v1658 = vpack.c.b16 %v1615, %v1614
        %v1659 = vpack.c.b16 %v1617, %v1616
        %v1660 = vpack.c.b16 %v1619, %v1618
        %v1661 = vpack.c.b16 %v1621, %v1620
        %v1662 = vpack.c.b16 %v1623, %v1622
        %v1663 = vpack.c.b16 %v1625, %v1624
        %v1664 = vpack.c.b16 %v1627, %v1626
        %v1665 = vpack.c.b16 %v1628, %v1628
        %vm1702 = vcmask 556032
        %v1703 = vsel %vm1702, %v1402, 0
        %vm1705 = vcmask 1041408
        %v1707 = vsel %vm1705, %v1665, 0
        %1709 = vmatprep.subr.bf16.mxu0 0
        %1710 = vmatpush1.bf16.msra.mxu0 %v1636
        %1711 = vmatprep.subr.bf16.mxu0 0
        %1712 = vmatpush1.bf16.msra.mxu0 %v1635
        %1713 = vmatprep.subr.bf16.mxu0 0
        %1714 = vmatpush1.bf16.msra.mxu0 %v1634
        %1715 = vmatprep.subr.bf16.mxu0 0
        %1716 = vmatpush1.bf16.msra.mxu0 %v1633
        %1717 = vmatprep.subr.bf16.mxu0 0
        %1718 = vmatpush1.bf16.msra.mxu0 %v1632
        %1719 = vmatprep.subr.bf16.mxu0 0
        %1720 = vmatpush1.bf16.msra.mxu0 %v1631
        %1721 = vmatprep.subr.bf16.mxu0 0
        %1722 = vmatpush1.bf16.msra.mxu0 %v1630
        %1723 = vmatprep.subr.bf16.mxu0 0
        %1724 = vmatpush1.bf16.msra.mxu0 %v1629
        %1725 = vmatprep.subr.bf16.mxu0 0
        %1726 = vmatpush2.bf16.msra.mxu0 %v1644
        %1727 = vmatprep.subr.bf16.mxu0 0
        %1728 = vmatpush2.bf16.msra.mxu0 %v1643
        %1729 = vmatprep.subr.bf16.mxu0 0
        %1730 = vmatpush2.bf16.msra.mxu0 %v1642
        %1731 = vmatprep.subr.bf16.mxu0 0
        %1732 = vmatpush2.bf16.msra.mxu0 %v1641
        %1733 = vmatprep.subr.bf16.mxu0 0
        %1734 = vmatpush2.bf16.msra.mxu0 %v1640
        %1735 = vmatprep.subr.bf16.mxu0 0
        %1736 = vmatpush2.bf16.msra.mxu0 %v1639
        %1737 = vmatprep.subr.bf16.mxu0 0
        %1738 = vmatpush2.bf16.msra.mxu0 %v1638
        %1739 = vmatprep.subr.bf16.mxu0 0
        %1740 = vmatpush2.bf16.msra.mxu0 %v1637
        %1741 = vmatprep.mubr.bf16.mxu0 %v1393
        %1742 = vmatmul.mubr.bf16.gmra.mxu0 %v1390
        %v1743 = vpop.f32.mrf.mxu0
        %v1744 = vadd.f32 %v1481, %v1743
        %v1745 = vpop.f32.mrf.mxu0
        %v1746 = vpop.f32.mrf.mxu0
        %v1747 = vpop.f32.mrf.mxu0
        %1748 = vdwg.mxu0
        %1749 = vmatprep.subr.bf16.mxu0 0
        %1750 = vmatpush1.bf16.msra.mxu0 %v1652
        %1751 = vmatprep.subr.bf16.mxu0 0
        %1752 = vmatpush1.bf16.msra.mxu0 %v1651
        %1753 = vmatprep.subr.bf16.mxu0 0
        %1754 = vmatpush1.bf16.msra.mxu0 %v1650
        %1755 = vmatprep.subr.bf16.mxu0 0
        %1756 = vmatpush1.bf16.msra.mxu0 %v1649
        %1757 = vmatprep.subr.bf16.mxu0 0
        %1758 = vmatpush1.bf16.msra.mxu0 %v1648
        %1759 = vmatprep.subr.bf16.mxu0 0
        %1760 = vmatpush1.bf16.msra.mxu0 %v1647
        %1761 = vmatprep.subr.bf16.mxu0 0
        %1762 = vmatpush1.bf16.msra.mxu0 %v1646
        %1763 = vmatprep.subr.bf16.mxu0 0
        %1764 = vmatpush1.bf16.msra.mxu0 %v1645
        %1765 = vmatprep.subr.bf16.mxu0 0
        %1766 = vmatpush2.bf16.msra.mxu0 %v1660
        %1767 = vmatprep.subr.bf16.mxu0 0
        %1768 = vmatpush2.bf16.msra.mxu0 %v1659
        %1769 = vmatprep.subr.bf16.mxu0 0
        %1770 = vmatpush2.bf16.msra.mxu0 %v1658
        %1771 = vmatprep.subr.bf16.mxu0 0
        %1772 = vmatpush2.bf16.msra.mxu0 %v1657
        %1773 = vmatprep.subr.bf16.mxu0 0
        %1774 = vmatpush2.bf16.msra.mxu0 %v1656
        %1775 = vmatprep.subr.bf16.mxu0 0
        %1776 = vmatpush2.bf16.msra.mxu0 %v1655
        %1777 = vmatprep.subr.bf16.mxu0 0
        %1778 = vmatpush2.bf16.msra.mxu0 %v1654
        %1779 = vmatprep.subr.bf16.mxu0 0
        %1780 = vmatpush2.bf16.msra.mxu0 %v1653
        %1781 = vmatprep.mubr.bf16.mxu0 %v1399
        %1782 = vmatmul.mubr.bf16.gmra.mxu0 %v1396
        %v1783 = vpop.f32.mrf.mxu0
        %v1784 = vadd.f32 %v1744, %v1783
        %v1785 = vpop.f32.mrf.mxu0
        %v1786 = vpop.f32.mrf.mxu0
        %v1787 = vpop.f32.mrf.mxu0
        %1788 = vdwg.mxu0
        %1789 = vmatprep.subr.bf16.mxu0 0
        %1790 = vmatpush1.bf16.msra.mxu0 0
        %1791 = vmatprep.subr.bf16.mxu0 0
        %1792 = vmatpush1.bf16.msra.mxu0 0
        %1793 = vmatprep.subr.bf16.mxu0 0
        %1794 = vmatpush1.bf16.msra.mxu0 0
        %1795 = vmatprep.subr.bf16.mxu0 0
        %1796 = vmatpush1.bf16.msra.mxu0 %v1707
        %1797 = vmatprep.subr.bf16.mxu0 0
        %1798 = vmatpush1.bf16.msra.mxu0 %v1664
        %1799 = vmatprep.subr.bf16.mxu0 0
        %1800 = vmatpush1.bf16.msra.mxu0 %v1663
        %1801 = vmatprep.subr.bf16.mxu0 0
        %1802 = vmatpush1.bf16.msra.mxu0 %v1662
        %1803 = vmatprep.subr.bf16.mxu0 0
        %1804 = vmatpush1.bf16.msra.mxu0 %v1661
        %1805 = vmatprep.subr.bf16.mxu0 0
        %1806 = vmatpush2.bf16.msra.mxu0 0
        %1807 = vmatprep.subr.bf16.mxu0 0
        %1808 = vmatpush2.bf16.msra.mxu0 0
        %1809 = vmatprep.subr.bf16.mxu0 0
        %1810 = vmatpush2.bf16.msra.mxu0 0
        %1811 = vmatprep.subr.bf16.mxu0 0
        %1812 = vmatpush2.bf16.msra.mxu0 0
        %1813 = vmatprep.subr.bf16.mxu0 0
        %1814 = vmatpush2.bf16.msra.mxu0 0
        %1815 = vmatprep.subr.bf16.mxu0 0
        %1816 = vmatpush2.bf16.msra.mxu0 0
        %1817 = vmatprep.subr.bf16.mxu0 0
        %1818 = vmatpush2.bf16.msra.mxu0 0
        %1819 = vmatprep.subr.bf16.mxu0 0
        %1820 = vmatpush2.bf16.msra.mxu0 0
        %1821 = vmatprep.mubr.bf16.mxu0 0
        %1822 = vmatmul.mubr.bf16.gmra.mxu0 %v1703
        %v1823 = vpop.f32.mrf.mxu0
        %v1824 = vadd.f32 %v1784, %v1823
        %v1825 = vpop.f32.mrf.mxu0
        %v1826 = vpop.f32.mrf.mxu0
        %v1827 = vpop.f32.mrf.mxu0
        %1828 = vdwg.mxu0
        %vm1829 = vcmask 257024
        %1830 = vst.msk [vmem:[%s374] sm:$0xf] %vm1829, %v1824
        %p1831 = scmp.lt.s32.totalorder %s31, 1
        %s1832 = scalar_select %p1831, %s31, 1
        %p1833 = scmp.lt.s32.totalorder %s32, 0
        %s1834 = scalar_select %p1833, %s32, 0
        %s1835 = smul.addr %s1832, 2
        %s1836 = sadd.s32 %s1834, %s1835
        %s1837 = smul.addr %s1836, 8
        %s1838 = scalar_lea.vmem %s7, %s1837
        %s1839 = sand.u32 %s231, 1
        %s1840 = scalar_lea.sflag [#allocation3], %s1839
        %s1841 = sand.u32 %s231, 1
        %s1842 = smul.addr %s1841, 4
        %s1843 = scalar_lea.vmem [#allocation2], %s1842
        %s1844 = sand.u32 %s259, 1
        %s1845 = scalar_lea.sflag [#allocation5], %s1844
        %s1846 = sand.u32 %s259, 1
        %s1847 = smul.addr %s1846, 4
        %s1848 = scalar_lea.vmem [#allocation4], %s1847
        // Predicated region
        $region49: #{tpu_custom_call.1} parent=47 // pred_check
          %p1849 = pneg %p213
        $region50: #{tpu_custom_call.1} parent=47 // pred_check_branch
          %1851 = sbr.rel (%p1849) target = $region52
        $region51: #{tpu_custom_call.1} parent=47 // pred_region
          _
        $region52: #{tpu_custom_call.1} parent=47 // pred_fallthru
          _
        // Predicated region
        $region53: #{tpu_custom_call.1} parent=47 // pred_check
          %p1852 = pneg %p241
        $region54: #{tpu_custom_call.1} parent=47 // pred_check_branch
          %1854 = sbr.rel (%p1852) target = $region56
        $region55: #{tpu_custom_call.1} parent=47 // pred_region
          %s1856 = ssub.s32 64, 64
          %1857 = vsyncadd %s1840, %s1856
          %s1858 = sadd.s32 %s32, %s31
          %s1859 = smul.addr %s1858, 64
          %s1860 = scalar_lea.hbm %s8, %s1859
          %s1862 = sshll.u32 %s1843, 4
          %s1863 = int_to_ptr.vmem [resolvable:$true] %s1862
          %1865 = dma.vmem_to_hbm [thread:$0]  %s1863, 64, %s1860, %s1840
        $region56: #{tpu_custom_call.1} parent=47 // pred_fallthru
          _
        // Predicated region
        $region57: #{tpu_custom_call.1} parent=47 // pred_check
          %p1866 = pneg %p269
        $region58: #{tpu_custom_call.1} parent=47 // pred_check_branch
          %1868 = sbr.rel (%p1866) target = $region60
        $region59: #{tpu_custom_call.1} parent=47 // pred_region
          %s1870 = ssub.s32 64, 64
          %1871 = vsyncadd %s1845, %s1870
          %s1872 = sadd.s32 %s32, %s31
          %s1873 = smul.addr %s1872, 64
          %s1874 = scalar_lea.hbm %s9, %s1873
          %s1876 = sshll.u32 %s1848, 4
          %s1877 = int_to_ptr.vmem [resolvable:$true] %s1876
          %1879 = dma.vmem_to_hbm [thread:$0]  %s1877, 64, %s1874, %s1845
        $region60: #{tpu_custom_call.1} parent=47 // pred_fallthru
          _
      $region48: #{tpu_custom_call.1} parent=5 // pred_fallthru
        _
      %p1880 = scmp.le.s32.totalorder 2, %s22
      // Predicated region
      $region61: #{tpu_custom_call.1} parent=5 // pred_check
        %p1881 = pneg %p1880
      $region62: #{tpu_custom_call.1} parent=5 // pred_check_branch
        %1883 = sbr.rel (%p1881) target = $region64
      $region63: #{tpu_custom_call.1} parent=5 // pred_region
        %s1884 = ssub.s32 %s22, 2
        // Predicated region
        $region65: #{tpu_custom_call.1} parent=63 // pred_check
          %p1885 = pneg %p219
        $region66: #{tpu_custom_call.1} parent=63 // pred_check_branch
          %1887 = sbr.rel (%p1885) target = $region68
        $region67: #{tpu_custom_call.1} parent=63 // pred_region
          %p1888 = scmp.lt.s32.totalorder %s33, 1
          %s1889 = scalar_select %p1888, %s33, 1
          %p1890 = scmp.lt.s32.totalorder %s34, 0
          %s1891 = scalar_select %p1890, %s34, 0
          %s1892 = smul.addr %s1889, 2
          %s1893 = sadd.s32 %s1891, %s1892
          %s1894 = smul.addr %s1893, 8
          %s1895 = scalar_lea.vmem %s7, %s1894
        $region68: #{tpu_custom_call.1} parent=63 // pred_fallthru
          _
        // Predicated region
        $region69: #{tpu_custom_call.1} parent=63 // pred_check
          %p1896 = pneg %p247
        $region70: #{tpu_custom_call.1} parent=63 // pred_check_branch
          %1898 = sbr.rel (%p1896) target = $region72
        $region71: #{tpu_custom_call.1} parent=63 // pred_region
          %s1899 = sand.u32 %s232, 1
          %s1900 = scalar_lea.sflag [#allocation3], %s1899
          %s1901 = sand.u32 %s232, 1
          %s1902 = smul.addr %s1901, 4
          %s1903 = scalar_lea.vmem [#allocation2], %s1902
          %1904 = dma.done %s1900, 64
        $region72: #{tpu_custom_call.1} parent=63 // pred_fallthru
          _
        // Predicated region
        $region73: #{tpu_custom_call.1} parent=63 // pred_check
          %p1905 = pneg %p275
        $region74: #{tpu_custom_call.1} parent=63 // pred_check_branch
          %1907 = sbr.rel (%p1905) target = $region76
        $region75: #{tpu_custom_call.1} parent=63 // pred_region
          %s1908 = sand.u32 %s260, 1
          %s1909 = scalar_lea.sflag [#allocation5], %s1908
          %s1910 = sand.u32 %s260, 1
          %s1911 = smul.addr %s1910, 4
          %s1912 = scalar_lea.vmem [#allocation4], %s1911
          %1913 = dma.done %s1909, 64
        $region76: #{tpu_custom_call.1} parent=63 // pred_fallthru
          _
      $region64: #{tpu_custom_call.1} parent=5 // pred_fallthru
        _
    $region6: #{tpu_custom_call.1} parent=1 // loop_footer
      %s26 = sadd.s32 1, %s22
    $region7: #{tpu_custom_call.1} parent=1 // loop_footer_branch
      %21 = sbr.rel target = $region3
    $region8: #{tpu_custom_call.1} parent=1 // loop_exit
      _
    %1914 = vsyncpa [#allocation3], 1
    %s1915 = scalar_lea.sflag [#allocation3], 1
    %1916 = vsyncpa %s1915, 1
    %1917 = vsyncpa [#allocation5], 1
    %s1918 = scalar_lea.sflag [#allocation5], 1
    %1919 = vsyncpa %s1918, 1

// kernel: tpu_custom_call.1
$region0: #{tpu_custom_call.1}
  #allocation0 [shape = 'u32[]', space=smem, size = 0x4, offset = 0x4, fixed_abs, tag = 'smem constant byte address 0x4 - core index']
  #allocation1 [shape = 'u32[144,128]{1,0:T(1,128)}', space=vmem, size = 0x12000, scoped, tag = 'internal scratch']
  %s0 = inlined_call_operand.vmem [shape: bf16[2,1,21,128], index: 0, kind: input, shape index: {}]
  %s1 = inlined_call_operand.vmem [shape: bf16[400,128], index: 1, kind: input, shape index: {}]
  %s2 = inlined_call_operand.vmem [shape: bf16[460,64], index: 2, kind: input, shape index: {}]
  %s3 = inlined_call_operand.vmem [shape: bf16[580,32], index: 3, kind: input, shape index: {}]
  %s4 = inlined_call_operand.vmem [shape: f32[1,128], index: 4, kind: input, shape index: {}]
  %s5 = inlined_call_operand.vmem [shape: f32[1,64], index: 5, kind: input, shape index: {}]
  %s6 = inlined_call_operand.vmem [shape: f32[1,32], index: 6, kind: input, shape index: {}]
  %s7 = inlined_call_operand.vmem [shape: f32[2,9,128], index: 7, kind: output, shape index: {0}]
  %s8 = inlined_call_operand.hbm [shape: f32[2,4,64], index: 8, kind: output, shape index: {1}]
  %s9 = inlined_call_operand.hbm [shape: f32[2,4,32], index: 9, kind: output, shape index: {2}]
  %10 = xla_tuple %s7, %s8, %s9
  %s11 = sld [smem:[#allocation0]]
  $region77: #{tpu_custom_call.1} parent=0
    _
  %s13 = ssub.s32 1, %s11
  %s14 = scalar_select 0, %s13, %s11
  $region1: #{tpu_custom_call.1} parent=0
    #allocation2 [shape = 'u8[4096]{0}', space=vmem, size = 0x1000, scoped, tag = 'output window, operand 1']
    #allocation3 [shape = 's32[2]{0}', space=sflag, size = 0x8, scoped, tag = 'scoped memory for tpu_custom_call.1']
    #allocation4 [shape = 'u8[4096]{0}', space=vmem, size = 0x1000, scoped, tag = 'output window, operand 2']
    #allocation5 [shape = 's32[2]{0}', space=sflag, size = 0x8, scoped, tag = 'scoped memory for tpu_custom_call.1']
    %15 = vsyncpa [#allocation3], 0
    %s16 = scalar_lea.sflag [#allocation3], 1
    %17 = vsyncpa %s16, 0
    %18 = vsyncpa [#allocation5], 0
    %s19 = scalar_lea.sflag [#allocation5], 1
    %20 = vsyncpa %s19, 0
    loop: start=0, step=1, limit=4
    $region2: #{tpu_custom_call.1} parent=1 // loop_pre_header
      _
    $region3: #{tpu_custom_call.1} parent=1 // loop_header
      %s22 = sphi 0, %s26
      %p23 = scmp.ge.s32.totalorder %s22, 4
      %s29 = sphi 0, %s41
      %s30 = sphi 0, %s37
      %s31 = sphi 0, %s29
      %s32 = sphi 0, %s30
      %s33 = sphi 0, %s31
      %s34 = sphi 0, %s32
      %s46 = sphi 0, %s48
      %s49 = sphi 0, %s46
      %s50 = sphi 0, %s49
      %s66 = sphi 0, %s50
      %s70 = sphi 0, %s70
      %s72 = sphi 0, %s70
      %s73 = sphi 0, %s72
      %s87 = sphi 0, %s73
      %s91 = sphi 0, %s91
      %s93 = sphi 0, %s91
      %s94 = sphi 0, %s93
      %s108 = sphi 0, %s94
      %s112 = sphi 0, %s112
      %s114 = sphi 0, %s112
      %s115 = sphi 0, %s114
      %s129 = sphi 0, %s115
      %s133 = sphi 0, %s133
      %s135 = sphi 0, %s133
      %s136 = sphi 0, %s135
      %s150 = sphi 0, %s136
      %s154 = sphi 0, %s154
      %s156 = sphi 0, %s154
      %s157 = sphi 0, %s156
      %s171 = sphi 0, %s157
      %s175 = sphi 0, %s175
      %s177 = sphi 0, %s175
      %s178 = sphi 0, %s177
      %s192 = sphi 0, %s178
      %s200 = sphi 0, %s202
      %s203 = sphi 0, %s200
      %s204 = sphi 0, %s203
      %s220 = sphi 0, %s204
      %s228 = sphi 0, %s230
      %s231 = sphi 0, %s228
      %s232 = sphi 0, %s231
      %s248 = sphi 0, %s232
      %s256 = sphi 0, %s258
      %s259 = sphi 0, %s256
      %s260 = sphi 0, %s259
      %s276 = sphi 0, %s260
    $region4: #{tpu_custom_call.1} parent=1 // loop_header_branch
      %25 = sbr.rel (%p23) target = $region8
    $region5: #{tpu_custom_call.1} parent=1 // loop_body
      %s27 = ssub.s32 %s22, 1
      %s28 = ssub.s32 %s22, 2
      %s35 = sadd.s32 1, %s30
      %p36 = scmp.ge.s32.totalorder %s35, 1
      %s37 = scalar_select %p36, 0, %s35
      %s38 = sadd.s32 1, %s29
      %s39 = scalar_select %p36, %s38, %s29
      %p40 = scmp.ge.s32.totalorder %s39, 2
      %s41 = scalar_select %p40, 0, %s39
      %s42 = ssub.s32 %s29, %s41
      %s43 = ssub.s32 %s30, %s37
      %s44 = sor.u32 %s42, %s43
      %p45 = scmp.eq.s32.totalorder %s44, 0
      %s47 = sadd.s32 %s46, 1
      %s48 = scalar_select %p45, %s46, %s47
      %p51 = pneg %p45
      %p52 = scmp.eq.s32.totalorder %s22, 1
      %p53 = por %p51, %p52
      %p54 = scmp.ne.s32.totalorder %s46, %s49
      %p55 = scmp.eq.s32.totalorder %s22, 0
      %p56 = por %p54, %p55
      %p57 = scmp.ne.s32.totalorder %s46, %s49
      %p58 = scmp.eq.s32.totalorder %s27, 1
      %p59 = por %p57, %p58
      %p60 = scmp.ne.s32.totalorder %s49, %s50
      %p61 = scmp.eq.s32.totalorder %s27, 0
      %p62 = por %p60, %p61
      %p63 = scmp.ne.s32.totalorder %s49, %s50
      %p64 = scmp.eq.s32.totalorder %s28, 1
      %p65 = por %p63, %p64
      %p67 = scmp.ne.s32.totalorder %s50, %s66
      %p68 = scmp.eq.s32.totalorder %s28, 0
      %p69 = por %p67, %p68
      %s71 = sadd.s32 %s70, 1
      %p74 = scmp.eq.s32.totalorder %s22, 1
      %p75 = scmp.ne.s32.totalorder %s70, %s72
      %p76 = scmp.eq.s32.totalorder %s22, 0
      %p77 = por %p75, %p76
      %p78 = scmp.ne.s32.totalorder %s70, %s72
      %p79 = scmp.eq.s32.totalorder %s27, 1
      %p80 = por %p78, %p79
      %p81 = scmp.ne.s32.totalorder %s72, %s73
      %p82 = scmp.eq.s32.totalorder %s27, 0
      %p83 = por %p81, %p82
      %p84 = scmp.ne.s32.totalorder %s72, %s73
      %p85 = scmp.eq.s32.totalorder %s28, 1
      %p86 = por %p84, %p85
      %p88 = scmp.ne.s32.totalorder %s73, %s87
      %p89 = scmp.eq.s32.totalorder %s28, 0
      %p90 = por %p88, %p89
      %s92 = sadd.s32 %s91, 1
      %p95 = scmp.eq.s32.totalorder %s22, 1
      %p96 = scmp.ne.s32.totalorder %s91, %s93
      %p97 = scmp.eq.s32.totalorder %s22, 0
      %p98 = por %p96, %p97
      %p99 = scmp.ne.s32.totalorder %s91, %s93
      %p100 = scmp.eq.s32.totalorder %s27, 1
      %p101 = por %p99, %p100
      %p102 = scmp.ne.s32.totalorder %s93, %s94
      %p103 = scmp.eq.s32.totalorder %s27, 0
      %p104 = por %p102, %p103
      %p105 = scmp.ne.s32.totalorder %s93, %s94
      %p106 = scmp.eq.s32.totalorder %s28, 1
      %p107 = por %p105, %p106
      %p109 = scmp.ne.s32.totalorder %s94, %s108
      %p110 = scmp.eq.s32.totalorder %s28, 0
      %p111 = por %p109, %p110
      %s113 = sadd.s32 %s112, 1
      %p116 = scmp.eq.s32.totalorder %s22, 1
      %p117 = scmp.ne.s32.totalorder %s112, %s114
      %p118 = scmp.eq.s32.totalorder %s22, 0
      %p119 = por %p117, %p118
      %p120 = scmp.ne.s32.totalorder %s112, %s114
      %p121 = scmp.eq.s32.totalorder %s27, 1
      %p122 = por %p120, %p121
      %p123 = scmp.ne.s32.totalorder %s114, %s115
      %p124 = scmp.eq.s32.totalorder %s27, 0
      %p125 = por %p123, %p124
      %p126 = scmp.ne.s32.totalorder %s114, %s115
      %p127 = scmp.eq.s32.totalorder %s28, 1
      %p128 = por %p126, %p127
      %p130 = scmp.ne.s32.totalorder %s115, %s129
      %p131 = scmp.eq.s32.totalorder %s28, 0
      %p132 = por %p130, %p131
      %s134 = sadd.s32 %s133, 1
      %p137 = scmp.eq.s32.totalorder %s22, 1
      %p138 = scmp.ne.s32.totalorder %s133, %s135
      %p139 = scmp.eq.s32.totalorder %s22, 0
      %p140 = por %p138, %p139
      %p141 = scmp.ne.s32.totalorder %s133, %s135
      %p142 = scmp.eq.s32.totalorder %s27, 1
      %p143 = por %p141, %p142
      %p144 = scmp.ne.s32.totalorder %s135, %s136
      %p145 = scmp.eq.s32.totalorder %s27, 0
      %p146 = por %p144, %p145
      %p147 = scmp.ne.s32.totalorder %s135, %s136
      %p148 = scmp.eq.s32.totalorder %s28, 1
      %p149 = por %p147, %p148
      %p151 = scmp.ne.s32.totalorder %s136, %s150
      %p152 = scmp.eq.s32.totalorder %s28, 0
      %p153 = por %p151, %p152
      %s155 = sadd.s32 %s154, 1
      %p158 = scmp.eq.s32.totalorder %s22, 1
      %p159 = scmp.ne.s32.totalorder %s154, %s156
      %p160 = scmp.eq.s32.totalorder %s22, 0
      %p161 = por %p159, %p160
      %p162 = scmp.ne.s32.totalorder %s154, %s156
      %p163 = scmp.eq.s32.totalorder %s27, 1
      %p164 = por %p162, %p163
      %p165 = scmp.ne.s32.totalorder %s156, %s157
      %p166 = scmp.eq.s32.totalorder %s27, 0
      %p167 = por %p165, %p166
      %p168 = scmp.ne.s32.totalorder %s156, %s157
      %p169 = scmp.eq.s32.totalorder %s28, 1
      %p170 = por %p168, %p169
      %p172 = scmp.ne.s32.totalorder %s157, %s171
      %p173 = scmp.eq.s32.totalorder %s28, 0
      %p174 = por %p172, %p173
      %s176 = sadd.s32 %s175, 1
      %p179 = scmp.eq.s32.totalorder %s22, 1
      %p180 = scmp.ne.s32.totalorder %s175, %s177
      %p181 = scmp.eq.s32.totalorder %s22, 0
      %p182 = por %p180, %p181
      %p183 = scmp.ne.s32.totalorder %s175, %s177
      %p184 = scmp.eq.s32.totalorder %s27, 1
      %p185 = por %p183, %p184
      %p186 = scmp.ne.s32.totalorder %s177, %s178
      %p187 = scmp.eq.s32.totalorder %s27, 0
      %p188 = por %p186, %p187
      %p189 = scmp.ne.s32.totalorder %s177, %s178
      %p190 = scmp.eq.s32.totalorder %s28, 1
      %p191 = por %p189, %p190
      %p193 = scmp.ne.s32.totalorder %s178, %s192
      %p194 = scmp.eq.s32.totalorder %s28, 0
      %p195 = por %p193, %p194
      %s196 = ssub.s32 %s29, %s41
      %s197 = ssub.s32 %s30, %s37
      %s198 = sor.u32 %s196, %s197
      %p199 = scmp.eq.s32.totalorder %s198, 0
      %s201 = sadd.s32 %s200, 1
      %s202 = scalar_select %p199, %s200, %s201
      %p205 = pneg %p199
      %p206 = scmp.eq.s32.totalorder %s22, 1
      %p207 = por %p205, %p206
      %p208 = scmp.ne.s32.totalorder %s200, %s203
      %p209 = scmp.eq.s32.totalorder %s22, 0
      %p210 = por %p208, %p209
      %p211 = scmp.ne.s32.totalorder %s200, %s203
      %p212 = scmp.eq.s32.totalorder %s27, 1
      %p213 = por %p211, %p212
      %p214 = scmp.ne.s32.totalorder %s203, %s204
      %p215 = scmp.eq.s32.totalorder %s27, 0
      %p216 = por %p214, %p215
      %p217 = scmp.ne.s32.totalorder %s203, %s204
      %p218 = scmp.eq.s32.totalorder %s28, 1
      %p219 = por %p217, %p218
      %p221 = scmp.ne.s32.totalorder %s204, %s220
      %p222 = scmp.eq.s32.totalorder %s28, 0
      %p223 = por %p221, %p222
      %s224 = ssub.s32 %s29, %s41
      %s225 = ssub.s32 %s30, %s37
      %s226 = sor.u32 %s224, %s225
      %p227 = scmp.eq.s32.totalorder %s226, 0
      %s229 = sadd.s32 %s228, 1
      %s230 = scalar_select %p227, %s228, %s229
      %p233 = pneg %p227
      %p234 = scmp.eq.s32.totalorder %s22, 1
      %p235 = por %p233, %p234
      %p236 = scmp.ne.s32.totalorder %s228, %s231
      %p237 = scmp.eq.s32.totalorder %s22, 0
      %p238 = por %p236, %p237
      %p239 = scmp.ne.s32.totalorder %s228, %s231
      %p240 = scmp.eq.s32.totalorder %s27, 1
      %p241 = por %p239, %p240
      %p242 = scmp.ne.s32.totalorder %s231, %s232
      %p243 = scmp.eq.s32.totalorder %s27, 0
      %p244 = por %p242, %p243
      %p245 = scmp.ne.s32.totalorder %s231, %s232
      %p246 = scmp.eq.s32.totalorder %s28, 1
      %p247 = por %p245, %p246
      %p249 = scmp.ne.s32.totalorder %s232, %s248
      %p250 = scmp.eq.s32.totalorder %s28, 0
      %p251 = por %p249, %p250
      %s252 = ssub.s32 %s29, %s41
      %s253 = ssub.s32 %s30, %s37
      %s254 = sor.u32 %s252, %s253
      %p255 = scmp.eq.s32.totalorder %s254, 0
      %s257 = sadd.s32 %s256, 1
      %s258 = scalar_select %p255, %s256, %s257
      %p261 = pneg %p255
      %p262 = scmp.eq.s32.totalorder %s22, 1
      %p263 = por %p261, %p262
      %p264 = scmp.ne.s32.totalorder %s256, %s259
      %p265 = scmp.eq.s32.totalorder %s22, 0
      %p266 = por %p264, %p265
      %p267 = scmp.ne.s32.totalorder %s256, %s259
      %p268 = scmp.eq.s32.totalorder %s27, 1
      %p269 = por %p267, %p268
      %p270 = scmp.ne.s32.totalorder %s259, %s260
      %p271 = scmp.eq.s32.totalorder %s27, 0
      %p272 = por %p270, %p271
      %p273 = scmp.ne.s32.totalorder %s259, %s260
      %p274 = scmp.eq.s32.totalorder %s28, 1
      %p275 = por %p273, %p274
      %p277 = scmp.ne.s32.totalorder %s260, %s276
      %p278 = scmp.eq.s32.totalorder %s28, 0
      %p279 = por %p277, %p278
      %p280 = scmp.le.s32.totalorder 1, %s22
      %p281 = scmp.lt.s32.totalorder %s22, 3
      %p282 = pnand %p280, %p281
      %p283 = pneg %p282
      // Predicated region
      $region9: #{tpu_custom_call.1} parent=5 // pred_check
        _
      $region10: #{tpu_custom_call.1} parent=5 // pred_check_branch
        %285 = sbr.rel (%p282) target = $region12
      $region11: #{tpu_custom_call.1} parent=5 // pred_region
        %s286 = ssub.s32 %s22, 1
        // Predicated region
        $region13: #{tpu_custom_call.1} parent=11 // pred_check
          %p287 = pneg %p83
        $region14: #{tpu_custom_call.1} parent=11 // pred_check_branch
          %289 = sbr.rel (%p287) target = $region16
        $region15: #{tpu_custom_call.1} parent=11 // pred_region
          _
        $region16: #{tpu_custom_call.1} parent=11 // pred_fallthru
          _
        // Predicated region
        $region17: #{tpu_custom_call.1} parent=11 // pred_check
          %p290 = pneg %p104
        $region18: #{tpu_custom_call.1} parent=11 // pred_check_branch
          %292 = sbr.rel (%p290) target = $region20
        $region19: #{tpu_custom_call.1} parent=11 // pred_region
          _
        $region20: #{tpu_custom_call.1} parent=11 // pred_fallthru
          _
        // Predicated region
        $region21: #{tpu_custom_call.1} parent=11 // pred_check
          %p293 = pneg %p125
        $region22: #{tpu_custom_call.1} parent=11 // pred_check_branch
          %295 = sbr.rel (%p293) target = $region24
        $region23: #{tpu_custom_call.1} parent=11 // pred_region
          _
        $region24: #{tpu_custom_call.1} parent=11 // pred_fallthru
          _
        // Predicated region
        $region25: #{tpu_custom_call.1} parent=11 // pred_check
          %p296 = pneg %p146
        $region26: #{tpu_custom_call.1} parent=11 // pred_check_branch
          %298 = sbr.rel (%p296) target = $region28
        $region27: #{tpu_custom_call.1} parent=11 // pred_region
          _
        $region28: #{tpu_custom_call.1} parent=11 // pred_fallthru
          _
        // Predicated region
        $region29: #{tpu_custom_call.1} parent=11 // pred_check
          %p299 = pneg %p167
        $region30: #{tpu_custom_call.1} parent=11 // pred_check_branch
          %301 = sbr.rel (%p299) target = $region32
        $region31: #{tpu_custom_call.1} parent=11 // pred_region
          _
        $region32: #{tpu_custom_call.1} parent=11 // pred_fallthru
          _
        // Predicated region
        $region33: #{tpu_custom_call.1} parent=11 // pred_check
          %p302 = pneg %p188
        $region34: #{tpu_custom_call.1} parent=11 // pred_check_branch
          %304 = sbr.rel (%p302) target = $region36
        $region35: #{tpu_custom_call.1} parent=11 // pred_region
          _
        $region36: #{tpu_custom_call.1} parent=11 // pred_fallthru
          _
      $region12: #{tpu_custom_call.1} parent=5 // pred_fallthru
        _
      %p305 = scmp.lt.s32.totalorder %s22, 2
      // Predicated region
      $region37: #{tpu_custom_call.1} parent=5 // pred_check
        %p306 = pneg %p305
      $region38: #{tpu_custom_call.1} parent=5 // pred_check_branch
        %308 = sbr.rel (%p306) target = $region40
      $region39: #{tpu_custom_call.1} parent=5 // pred_region
        // Predicated region
        $region41: #{tpu_custom_call.1} parent=39 // pred_check
          %p309 = pneg %p56
        $region42: #{tpu_custom_call.1} parent=39 // pred_check_branch
          %311 = sbr.rel (%p309) target = $region44
        $region43: #{tpu_custom_call.1} parent=39 // pred_region
          %p312 = scmp.lt.s32.totalorder %s29, 1
          %s313 = scalar_select %p312, %s29, 1
          %p314 = scmp.lt.s32.totalorder %s30, 0
          %s315 = scalar_select %p314, %s30, 0
          %s316 = smul.addr %s315, 3
          %s317 = smul.addr %s313, 3
          %s318 = sadd.s32 %s316, %s317
          %s319 = smul.addr %s318, 4
          %s320 = scalar_lea.vmem %s0, %s319
        $region44: #{tpu_custom_call.1} parent=39 // pred_fallthru
          _
      $region40: #{tpu_custom_call.1} parent=5 // pred_fallthru
        _
      %p321 = scmp.le.s32.totalorder 1, %s22
      %p322 = scmp.lt.s32.totalorder %s22, 3
      %p323 = pnand %p321, %p322
      %p324 = pneg %p323
      // Predicated region
      $region45: #{tpu_custom_call.1} parent=5 // pred_check
        _
      $region46: #{tpu_custom_call.1} parent=5 // pred_check_branch
        %326 = sbr.rel (%p323) target = $region48
      $region47: #{tpu_custom_call.1} parent=5 // pred_region
        %s327 = ssub.s32 %s22, 1
        %p328 = scmp.lt.s32.totalorder %s31, 1
        %s329 = scalar_select %p328, %s31, 1
        %p330 = scmp.lt.s32.totalorder %s32, 0
        %s331 = scalar_select %p330, %s32, 0
        %s332 = smul.addr %s331, 3
        %s333 = smul.addr %s329, 3
        %s334 = sadd.s32 %s332, %s333
        %s335 = smul.addr %s334, 4
        %s336 = scalar_lea.vmem %s0, %s335
        %p337 = pneg %p62
        %p338 = pneg %p59
        %p339 = pneg %p83
        %p340 = pneg %p80
        %p341 = pneg %p104
        %p342 = pneg %p101
        %p343 = pneg %p125
        %p344 = pneg %p122
        %p345 = pneg %p146
        %p346 = pneg %p143
        %p347 = pneg %p167
        %p348 = pneg %p164
        %p349 = pneg %p188
        %p350 = pneg %p185
        %p351 = pneg %p216
        %p352 = pneg %p213
        %p353 = scmp.lt.s32.totalorder %s31, 1
        %s354 = scalar_select %p353, %s31, 1
        %p355 = scmp.lt.s32.totalorder %s32, 0
        %s356 = scalar_select %p355, %s32, 0
        %s357 = smul.addr %s354, 2
        %s358 = sadd.s32 %s356, %s357
        %s359 = smul.addr %s358, 8
        %s360 = scalar_lea.vmem %s7, %s359
        %p361 = pneg %p244
        %p362 = pneg %p241
        %s363 = sand.u32 %s231, 1
        %s364 = scalar_lea.sflag [#allocation3], %s363
        %s365 = sand.u32 %s231, 1
        %s366 = smul.addr %s365, 4
        %s367 = scalar_lea.vmem [#allocation2], %s366
        %p368 = pneg %p272
        %p369 = pneg %p269
        %s370 = sand.u32 %s259, 1
        %s371 = scalar_lea.sflag [#allocation5], %s370
        %s372 = sand.u32 %s259, 1
        %s373 = smul.addr %s372, 4
        %s374 = scalar_lea.vmem [#allocation4], %s373
        %p375 = scmp.lt.s32.totalorder %s31, 1
        %s376 = scalar_select %p375, %s31, 1
        %p377 = scmp.lt.s32.totalorder %s32, 0
        %s378 = scalar_select %p377, %s32, 0
        %s379 = smul.addr %s378, 3
        %s380 = smul.addr %s376, 3
        %s381 = sadd.s32 %s379, %s380
        %s382 = smul.addr %s381, 4
        %s383 = scalar_lea.vmem %s0, %s382
        %p384 = scmp.lt.s32.totalorder %s31, 1
        %s385 = scalar_select %p384, %s31, 1
        %p386 = scmp.lt.s32.totalorder %s32, 0
        %s387 = scalar_select %p386, %s32, 0
        %s388 = smul.addr %s385, 2
        %s389 = sadd.s32 %s387, %s388
        %s390 = smul.addr %s389, 8
        %s391 = scalar_lea.vmem %s7, %s390
        %v393 = vld [vmem:[%s383] sm:$0xc]
        %v394 = vld [vmem:[%s383 + $0x4] sm:$0x7]
        %v395 = vld [vmem:[%s383] sm:$0x8]
        %v396 = vld [vmem:[%s383 + $0x4] sm:$0xf]
        %v397 = vld [vmem:[%s383 + $0x8] sm:$0x1]
        %v400 = vunpack.c.l.b16 %v393
        %v401 = vunpack.c.l.b16 %v394
        %v402 = vpack.c.b16 %v401, %v400
        %403 = vrot.lane.b32.xlu0 %v402, 104
        %v404 = vpop.permute.xlu0 %403
        %v406 = vshrl.u32 %v402, 16
        %v408 = vshll.u32 %v402, 16
        %v410 = vrot.slane %v408, 1
        %v411 = vor.u32 %v406, %v410
        %412 = vrot.lane.b32.xlu0 %v411, 56
        %v413 = vpop.permute.xlu0 %412
        %v416 = vunpack.c.l.b16 %v395
        %v417 = vunpack.c.l.b16 %v396
        %v418 = vpack.c.b16 %v417, %v416
        %v419 = vrot.slane %v418, 1
        %420 = vrot.lane.b32.xlu0 %v419, 8
        %v421 = vpop.permute.xlu0 %420
        %v423 = vshrl.u32 %v418, 16
        %v425 = vrot.slane %v423, 1
        %v426 = vshll.u32 %v418, 16
        %v428 = vrot.slane %v426, 2
        %v429 = vor.u32 %v425, %v428
        %430 = vrot.lane.b32.xlu0 %v429, 88
        %v431 = vpop.permute.xlu0 %430
        %v433 = vunpack.c.l.b16 %v397
        %v434 = vpack.c.b16 %v433, %v417
        %v435 = vrot.slane %v434, 6
        %436 = vrot.lane.b32.xlu0 %v435, 40
        %v437 = vpop.permute.xlu0 %436
        %vm438 = vcmask 654336
        %v441 = vsel %vm438, %v404, %v413
        %vm442 = vcmask 261120
        %v444 = vsel %vm442, %v413, %v421
        %vm445 = vcmask 916480
        %v447 = vsel %vm445, %v444, %v431
        %vm448 = vcmask 523264
        %v450 = vsel %vm448, %v431, %v437
        %v451 = vld [vmem:[%s1] sm:$0xf]
        %v452 = vld [vmem:[%s1 + $0x4] sm:$0xf]
        %v453 = vld [vmem:[%s1 + $0x8] sm:$0xf]
        %v454 = vld [vmem:[%s1 + $0xc] sm:$0xf]
        %v455 = vld [vmem:[%s1 + $0x10] sm:$0xf]
        %v456 = vld [vmem:[%s1 + $0x14] sm:$0xf]
        %v457 = vld [vmem:[%s1 + $0x18] sm:$0xf]
        %v458 = vld [vmem:[%s1 + $0x1c] sm:$0xf]
        %v459 = vld [vmem:[%s1 + $0x20] sm:$0xf]
        %v460 = vld [vmem:[%s1 + $0x24] sm:$0xf]
        %v461 = vld [vmem:[%s1 + $0x28] sm:$0xf]
        %v462 = vld [vmem:[%s1 + $0x2c] sm:$0xf]
        %v463 = vld [vmem:[%s1 + $0x30] sm:$0xf]
        %v464 = vld [vmem:[%s1 + $0x34] sm:$0xf]
        %v465 = vld [vmem:[%s1 + $0x38] sm:$0xf]
        %v466 = vld [vmem:[%s1 + $0x3c] sm:$0xf]
        %v467 = vld [vmem:[%s1 + $0x40] sm:$0xf]
        %v468 = vld [vmem:[%s1 + $0x44] sm:$0xf]
        %v469 = vld [vmem:[%s1 + $0x48] sm:$0xf]
        %v470 = vld [vmem:[%s1 + $0x4c] sm:$0xf]
        %v471 = vld [vmem:[%s1 + $0x50] sm:$0xf]
        %v472 = vld [vmem:[%s1 + $0x54] sm:$0xf]
        %v473 = vld [vmem:[%s1 + $0x58] sm:$0xf]
        %v474 = vld [vmem:[%s1 + $0x5c] sm:$0xf]
        %v475 = vld [vmem:[%s1 + $0x60] sm:$0xf]
        %v476 = vld [vmem:[%s1 + $0x64] sm:$0xf]
        %v477 = vld [vmem:[%s1 + $0x68] sm:$0xf]
        %v478 = vld [vmem:[%s1 + $0x6c] sm:$0xf]
        %v479 = vld [vmem:[%s1 + $0x70] sm:$0xf]
        %v480 = vld [vmem:[%s1 + $0x74] sm:$0xf]
        %v481 = vld [vmem:[%s1 + $0x78] sm:$0xf]
        %v482 = vld [vmem:[%s1 + $0x7c] sm:$0xf]
        %v483 = vld [vmem:[%s1 + $0x80] sm:$0xf]
        %v484 = vld [vmem:[%s1 + $0x84] sm:$0xf]
        %v485 = vld [vmem:[%s1 + $0x88] sm:$0xf]
        %v486 = vld [vmem:[%s1 + $0x8c] sm:$0xf]
        %v487 = vld [vmem:[%s1 + $0x90] sm:$0xf]
        %v488 = vld [vmem:[%s1 + $0x94] sm:$0xf]
        %v489 = vld [vmem:[%s1 + $0x98] sm:$0xf]
        %v490 = vld [vmem:[%s1 + $0x9c] sm:$0xf]
        %v491 = vld [vmem:[%s1 + $0xa0] sm:$0xf]
        %v492 = vld [vmem:[%s1 + $0xa4] sm:$0xf]
        %v493 = vld [vmem:[%s1 + $0xa8] sm:$0xf]
        %v494 = vld [vmem:[%s1 + $0xac] sm:$0xf]
        %v495 = vld [vmem:[%s1 + $0xb0] sm:$0xf]
        %v496 = vld [vmem:[%s1 + $0xb4] sm:$0xf]
        %v497 = vld [vmem:[%s1 + $0xb8] sm:$0xf]
        %v498 = vld [vmem:[%s1 + $0xbc] sm:$0xf]
        %v499 = vld [vmem:[%s1 + $0xc0] sm:$0xf]
        %v500 = vld [vmem:[%s1 + $0xc4] sm:$0xf]
        %v501 = vld [vmem:[%s4] sm:$0x1]
        %v503 = vlaneseq
        %v504 = vshrl.u32 %v503, 7
        %v505 = vsub.s32 0, %v504
        %v506 = vrot.slane %v501, %v505
        %v511 = vrot.slane %v441, 2
        %v512 = vrot.slane %v447, 2
        %v513 = vrot.slane %v450, 2
        %v514 = vrot.slane %v437, 2
        %v568 = vunpack.c.l.b16 %v451
        %v569 = vunpack.c.l.b16 %v452
        %v570 = vunpack.c.l.b16 %v453
        %v571 = vunpack.c.l.b16 %v454
        %v572 = vunpack.c.l.b16 %v455
        %v573 = vunpack.c.l.b16 %v456
        %v574 = vunpack.c.l.b16 %v457
        %v575 = vunpack.c.l.b16 %v458
        %v576 = vunpack.c.l.b16 %v459
        %v577 = vunpack.c.l.b16 %v460
        %v578 = vunpack.c.l.b16 %v461
        %v579 = vunpack.c.l.b16 %v462
        %v580 = vunpack.c.l.b16 %v463
        %v581 = vunpack.c.l.b16 %v464
        %v582 = vunpack.c.l.b16 %v465
        %v583 = vunpack.c.l.b16 %v466
        %v584 = vunpack.c.l.b16 %v467
        %v585 = vunpack.c.l.b16 %v468
        %v586 = vunpack.c.l.b16 %v469
        %v587 = vunpack.c.l.b16 %v470
        %v588 = vunpack.c.l.b16 %v471
        %v589 = vunpack.c.l.b16 %v472
        %v590 = vunpack.c.l.b16 %v473
        %v591 = vunpack.c.l.b16 %v474
        %v592 = vunpack.c.l.b16 %v475
        %v593 = vunpack.c.l.b16 %v476
        %v594 = vunpack.c.l.b16 %v477
        %v595 = vunpack.c.l.b16 %v478
        %v596 = vunpack.c.l.b16 %v479
        %v597 = vunpack.c.l.b16 %v480
        %v598 = vunpack.c.l.b16 %v481
        %v599 = vunpack.c.l.b16 %v482
        %v600 = vunpack.c.l.b16 %v483
        %v601 = vunpack.c.l.b16 %v484
        %v602 = vunpack.c.l.b16 %v485
        %v603 = vunpack.c.l.b16 %v486
        %v604 = vunpack.c.l.b16 %v487
        %v605 = vunpack.c.l.b16 %v488
        %v606 = vunpack.c.l.b16 %v489
        %v607 = vunpack.c.l.b16 %v490
        %v608 = vunpack.c.l.b16 %v491
        %v609 = vunpack.c.l.b16 %v492
        %v610 = vunpack.c.l.b16 %v493
        %v611 = vunpack.c.l.b16 %v494
        %v612 = vunpack.c.l.b16 %v495
        %v613 = vunpack.c.l.b16 %v496
        %v614 = vunpack.c.l.b16 %v497
        %v615 = vunpack.c.l.b16 %v498
        %v616 = vunpack.c.l.b16 %v499
        %v617 = vunpack.c.l.b16 %v500
        %v618 = vpack.c.b16 %v569, %v568
        %v619 = vpack.c.b16 %v571, %v570
        %v620 = vpack.c.b16 %v573, %v572
        %v621 = vpack.c.b16 %v575, %v574
        %v622 = vpack.c.b16 %v577, %v576
        %v623 = vpack.c.b16 %v579, %v578
        %v624 = vpack.c.b16 %v581, %v580
        %v625 = vpack.c.b16 %v583, %v582
        %v626 = vpack.c.b16 %v585, %v584
        %v627 = vpack.c.b16 %v587, %v586
        %v628 = vpack.c.b16 %v589, %v588
        %v629 = vpack.c.b16 %v591, %v590
        %v630 = vpack.c.b16 %v593, %v592
        %v631 = vpack.c.b16 %v595, %v594
        %v632 = vpack.c.b16 %v597, %v596
        %v633 = vpack.c.b16 %v599, %v598
        %v634 = vpack.c.b16 %v601, %v600
        %v635 = vpack.c.b16 %v603, %v602
        %v636 = vpack.c.b16 %v605, %v604
        %v637 = vpack.c.b16 %v607, %v606
        %v638 = vpack.c.b16 %v609, %v608
        %v639 = vpack.c.b16 %v611, %v610
        %v640 = vpack.c.b16 %v613, %v612
        %v641 = vpack.c.b16 %v615, %v614
        %v642 = vpack.c.b16 %v617, %v616
        %vm668 = vcmask 130048
        %v670 = vsel %vm668, %v514, 0
        %672 = vmatprep.subr.bf16.mxu0 0
        %673 = vmatpush1.bf16.msra.mxu0 %v625
        %674 = vmatprep.subr.bf16.mxu0 0
        %675 = vmatpush1.bf16.msra.mxu0 %v624
        %676 = vmatprep.subr.bf16.mxu0 0
        %677 = vmatpush1.bf16.msra.mxu0 %v623
        %678 = vmatprep.subr.bf16.mxu0 0
        %679 = vmatpush1.bf16.msra.mxu0 %v622
        %680 = vmatprep.subr.bf16.mxu0 0
        %681 = vmatpush1.bf16.msra.mxu0 %v621
        %682 = vmatprep.subr.bf16.mxu0 0
        %683 = vmatpush1.bf16.msra.mxu0 %v620
        %684 = vmatprep.subr.bf16.mxu0 0
        %685 = vmatpush1.bf16.msra.mxu0 %v619
        %686 = vmatprep.subr.bf16.mxu0 0
        %687 = vmatpush1.bf16.msra.mxu0 %v618
        %688 = vmatprep.subr.bf16.mxu0 0
        %689 = vmatpush2.bf16.msra.mxu0 %v633
        %690 = vmatprep.subr.bf16.mxu0 0
        %691 = vmatpush2.bf16.msra.mxu0 %v632
        %692 = vmatprep.subr.bf16.mxu0 0
        %693 = vmatpush2.bf16.msra.mxu0 %v631
        %694 = vmatprep.subr.bf16.mxu0 0
        %695 = vmatpush2.bf16.msra.mxu0 %v630
        %696 = vmatprep.subr.bf16.mxu0 0
        %697 = vmatpush2.bf16.msra.mxu0 %v629
        %698 = vmatprep.subr.bf16.mxu0 0
        %699 = vmatpush2.bf16.msra.mxu0 %v628
        %700 = vmatprep.subr.bf16.mxu0 0
        %701 = vmatpush2.bf16.msra.mxu0 %v627
        %702 = vmatprep.subr.bf16.mxu0 0
        %703 = vmatpush2.bf16.msra.mxu0 %v626
        %704 = vmatprep.mubr.bf16.mxu0 %v512
        %705 = vmatmul.mubr.bf16.gmra.mxu0 %v511
        %v706 = vpop.f32.mrf.mxu0
        %v707 = vadd.f32 %v506, %v706
        %v708 = vpop.f32.mrf.mxu0
        %v709 = vpop.f32.mrf.mxu0
        %v710 = vadd.f32 %v506, %v709
        %v711 = vpop.f32.mrf.mxu0
        %712 = vdwg.mxu0
        %713 = vmatprep.subr.bf16.mxu0 0
        %714 = vmatpush1.bf16.msra.mxu0 %v641
        %715 = vmatprep.subr.bf16.mxu0 0
        %716 = vmatpush1.bf16.msra.mxu0 %v640
        %717 = vmatprep.subr.bf16.mxu0 0
        %718 = vmatpush1.bf16.msra.mxu0 %v639
        %719 = vmatprep.subr.bf16.mxu0 0
        %720 = vmatpush1.bf16.msra.mxu0 %v638
        %721 = vmatprep.subr.bf16.mxu0 0
        %722 = vmatpush1.bf16.msra.mxu0 %v637
        %723 = vmatprep.subr.bf16.mxu0 0
        %724 = vmatpush1.bf16.msra.mxu0 %v636
        %725 = vmatprep.subr.bf16.mxu0 0
        %726 = vmatpush1.bf16.msra.mxu0 %v635
        %727 = vmatprep.subr.bf16.mxu0 0
        %728 = vmatpush1.bf16.msra.mxu0 %v634
        %729 = vmatprep.subr.bf16.mxu0 0
        %730 = vmatpush2.bf16.msra.mxu0 0
        %731 = vmatprep.subr.bf16.mxu0 0
        %732 = vmatpush2.bf16.msra.mxu0 0
        %733 = vmatprep.subr.bf16.mxu0 0
        %734 = vmatpush2.bf16.msra.mxu0 0
        %735 = vmatprep.subr.bf16.mxu0 0
        %736 = vmatpush2.bf16.msra.mxu0 0
        %737 = vmatprep.subr.bf16.mxu0 0
        %738 = vmatpush2.bf16.msra.mxu0 0
        %739 = vmatprep.subr.bf16.mxu0 0
        %740 = vmatpush2.bf16.msra.mxu0 0
        %741 = vmatprep.subr.bf16.mxu0 0
        %742 = vmatpush2.bf16.msra.mxu0 0
        %743 = vmatprep.subr.bf16.mxu0 0
        %744 = vmatpush2.bf16.msra.mxu0 %v642
        %745 = vmatprep.mubr.bf16.mxu0 %v670
        %746 = vmatmul.mubr.bf16.gmra.mxu0 %v513
        %v747 = vpop.f32.mrf.mxu0
        %v748 = vadd.f32 %v707, %v747
        %v749 = vpop.f32.mrf.mxu0
        %v750 = vpop.f32.mrf.mxu0
        %v751 = vadd.f32 %v710, %v750
        %v752 = vpop.f32.mrf.mxu0
        %753 = vdwg.mxu0
        %754 = vst [vmem:[%s391] sm:$0xff] %v748
        %755 = vst [vmem:[%s391 + $0x8] sm:$0x1] %v751
        %v756 = vld [vmem:[%s383] sm:$0x2]
        %v757 = vld [vmem:[%s383] sm:$0x6]
        %v758 = vld [vmem:[%s383] sm:$0x4]
        %v759 = vld [vmem:[%s383] sm:$0xc]
        %v760 = vld [vmem:[%s383] sm:$0x8]
        %v762 = vunpack.c.l.b16 %v756
        %v763 = vpack.c.b16 %v762, %v762
        %764 = vrot.lane.b32.xlu0 %v763, 112
        %v765 = vpop.permute.xlu0 %764
        %v767 = vunpack.c.l.b16 %v757
        %v768 = vpack.c.b16 %v767, %v767
        %v770 = vshrl.u32 %v768, 16
        %v772 = vshll.u32 %v768, 16
        %v774 = vrot.slane %v772, 1
        %v775 = vor.u32 %v770, %v774
        %776 = vrot.lane.b32.xlu0 %v775, 76
        %v777 = vpop.permute.xlu0 %776
        %v779 = vunpack.c.l.b16 %v758
        %v780 = vpack.c.b16 %v779, %v779
        %v781 = vrot.slane %v780, 1
        %782 = vrot.lane.b32.xlu0 %v781, 40
        %v783 = vpop.permute.xlu0 %782
        %v785 = vunpack.c.l.b16 %v759
        %v786 = vpack.c.b16 %v785, %v785
        %v788 = vshrl.u32 %v786, 16
        %v790 = vrot.slane %v788, 1
        %v791 = vshll.u32 %v786, 16
        %v793 = vrot.slane %v791, 2
        %v794 = vor.u32 %v790, %v793
        %795 = vrot.lane.b32.xlu0 %v794, 4
        %v796 = vpop.permute.xlu0 %795
        %v798 = vunpack.c.l.b16 %v760
        %v799 = vpack.c.b16 %v798, %v798
        %v800 = vrot.slane %v799, 2
        %801 = vrot.lane.b32.xlu0 %v800, 96
        %v802 = vpop.permute.xlu0 %801
        %vm803 = vcmask 752640
        %v806 = vsel %vm803, %v765, %v777
        %vm807 = vcmask 457728
        %v809 = vsel %vm807, %v777, %v783
        %vm810 = vcmask 162816
        %v812 = vsel %vm810, %v783, %v796
        %v814 = vsel %vm445, %v812, %v802
        %v815 = vld [vmem:[%s383 + $0x4] sm:$0xc]
        %v816 = vld [vmem:[%s383 + $0x4] sm:$0x8]
        %v817 = vld [vmem:[%s383 + $0x8] sm:$0x1]
        %v818 = vld [vmem:[%s383 + $0x8] sm:$0x3]
        %v820 = vunpack.c.l.b16 %v815
        %v821 = vpack.c.b16 %v820, %v820
        %822 = vrot.lane.b32.xlu0 %v821, 112
        %v823 = vpop.permute.xlu0 %822
        %v825 = vunpack.c.l.b16 %v816
        %v826 = vpack.c.b16 %v825, %v825
        %v828 = vshrl.u32 %v826, 16
        %v830 = vshll.u32 %v826, 16
        %v832 = vrot.slane %v830, 1
        %v833 = vor.u32 %v828, %v832
        %834 = vrot.lane.b32.xlu0 %v833, 76
        %v835 = vpop.permute.xlu0 %834
        %v837 = vunpack.c.l.b16 %v817
        %v838 = vpack.c.b16 %v837, %v825
        %v839 = vrot.slane %v838, 1
        %840 = vrot.lane.b32.xlu0 %v839, 40
        %v841 = vpop.permute.xlu0 %840
        %v842 = vpack.c.b16 %v837, %v837
        %v844 = vshrl.u32 %v842, 16
        %v846 = vrot.slane %v844, 5
        %v847 = vshll.u32 %v842, 16
        %v849 = vrot.slane %v847, 6
        %v850 = vor.u32 %v846, %v849
        %851 = vrot.lane.b32.xlu0 %v850, 4
        %v852 = vpop.permute.xlu0 %851
        %v854 = vunpack.c.l.b16 %v818
        %v855 = vpack.c.b16 %v854, %v854
        %v856 = vrot.slane %v855, 6
        %857 = vrot.lane.b32.xlu0 %v856, 96
        %v858 = vpop.permute.xlu0 %857
        %v861 = vsel %vm803, %v823, %v835
        %v863 = vsel %vm807, %v835, %v841
        %v865 = vsel %vm810, %v841, %v852
        %v867 = vsel %vm445, %v865, %v858
        %v871 = vrot.slane %v806, 1
        %v872 = vrot.slane %v809, 1
        %v873 = vrot.slane %v814, 1
        %v874 = vrot.slane %v802, 1
        %v875 = vshrl.u32 %v861, 16
        %v877 = vrot.slane %v875, 1
        %v878 = vshll.u32 %v861, 16
        %v880 = vrot.slane %v878, 2
        %v881 = vor.u32 %v877, %v880
        %v882 = vshrl.u32 %v863, 16
        %v884 = vrot.slane %v882, 1
        %v885 = vshll.u32 %v863, 16
        %v887 = vrot.slane %v885, 2
        %v888 = vor.u32 %v884, %v887
        %v889 = vshrl.u32 %v867, 16
        %v891 = vrot.slane %v889, 1
        %v892 = vshll.u32 %v867, 16
        %v894 = vrot.slane %v892, 2
        %v895 = vor.u32 %v891, %v894
        %v896 = vshrl.u32 %v858, 16
        %v898 = vrot.slane %v896, 1
        %v899 = vshll.u32 %v858, 16
        %v901 = vrot.slane %v899, 2
        %v902 = vor.u32 %v898, %v901
        %vm903 = vcmask 1040384
        %v906 = vsel %vm903, %v871, %v881
        %v910 = vsel %vm903, %v872, %v888
        %v914 = vsel %vm903, %v873, %v895
        %v918 = vsel %vm903, %v874, %v902
        %v919 = vld [vmem:[%s2] sm:$0xf]
        %v920 = vld [vmem:[%s2 + $0x4] sm:$0xf]
        %v921 = vld [vmem:[%s2 + $0x8] sm:$0xf]
        %v922 = vld [vmem:[%s2 + $0xc] sm:$0xf]
        %v923 = vld [vmem:[%s2 + $0x10] sm:$0xf]
        %v924 = vld [vmem:[%s2 + $0x14] sm:$0xf]
        %v925 = vld [vmem:[%s2 + $0x18] sm:$0xf]
        %v926 = vld [vmem:[%s2 + $0x1c] sm:$0xf]
        %v927 = vld [vmem:[%s2 + $0x20] sm:$0xf]
        %v928 = vld [vmem:[%s2 + $0x24] sm:$0xf]
        %v929 = vld [vmem:[%s2 + $0x28] sm:$0xf]
        %v930 = vld [vmem:[%s2 + $0x2c] sm:$0xf]
        %v931 = vld [vmem:[%s2 + $0x30] sm:$0xf]
        %v932 = vld [vmem:[%s2 + $0x34] sm:$0xf]
        %v933 = vld [vmem:[%s2 + $0x38] sm:$0xf]
        %v934 = vld [vmem:[%s2 + $0x3c] sm:$0xf]
        %v935 = vld [vmem:[%s2 + $0x40] sm:$0xf]
        %v936 = vld [vmem:[%s2 + $0x44] sm:$0xf]
        %v937 = vld [vmem:[%s2 + $0x48] sm:$0xf]
        %v938 = vld [vmem:[%s2 + $0x4c] sm:$0xf]
        %v939 = vld [vmem:[%s2 + $0x50] sm:$0xf]
        %v940 = vld [vmem:[%s2 + $0x54] sm:$0xf]
        %v941 = vld [vmem:[%s2 + $0x58] sm:$0xf]
        %v942 = vld [vmem:[%s2 + $0x5c] sm:$0xf]
        %v943 = vld [vmem:[%s2 + $0x60] sm:$0xf]
        %v944 = vld [vmem:[%s2 + $0x64] sm:$0xf]
        %v945 = vld [vmem:[%s2 + $0x68] sm:$0xf]
        %v946 = vld [vmem:[%s2 + $0x6c] sm:$0xf]
        %v947 = vld [vmem:[%s2 + $0x70] sm:$0xf]
        %v948 = vld [vmem:[%s2 + $0x74] sm:$0xf]
        %v949 = vld [vmem:[%s2 + $0x78] sm:$0xf]
        %v950 = vld [vmem:[%s2 + $0x7c] sm:$0xf]
        %v951 = vld [vmem:[%s2 + $0x80] sm:$0xf]
        %v952 = vld [vmem:[%s2 + $0x84] sm:$0xf]
        %v953 = vld [vmem:[%s2 + $0x88] sm:$0xf]
        %v954 = vld [vmem:[%s2 + $0x8c] sm:$0xf]
        %v955 = vld [vmem:[%s2 + $0x90] sm:$0xf]
        %v956 = vld [vmem:[%s2 + $0x94] sm:$0xf]
        %v957 = vld [vmem:[%s2 + $0x98] sm:$0xf]
        %v958 = vld [vmem:[%s2 + $0x9c] sm:$0xf]
        %v959 = vld [vmem:[%s2 + $0xa0] sm:$0xf]
        %v960 = vld [vmem:[%s2 + $0xa4] sm:$0xf]
        %v961 = vld [vmem:[%s2 + $0xa8] sm:$0xf]
        %v962 = vld [vmem:[%s2 + $0xac] sm:$0xf]
        %v963 = vld [vmem:[%s2 + $0xb0] sm:$0xf]
        %v964 = vld [vmem:[%s2 + $0xb4] sm:$0xf]
        %v965 = vld [vmem:[%s2 + $0xb8] sm:$0xf]
        %v966 = vld [vmem:[%s2 + $0xbc] sm:$0xf]
        %v967 = vld [vmem:[%s2 + $0xc0] sm:$0xf]
        %v968 = vld [vmem:[%s2 + $0xc4] sm:$0xf]
        %v969 = vld [vmem:[%s2 + $0xc8] sm:$0xf]
        %v970 = vld [vmem:[%s2 + $0xcc] sm:$0xf]
        %v971 = vld [vmem:[%s2 + $0xd0] sm:$0xf]
        %v972 = vld [vmem:[%s2 + $0xd4] sm:$0xf]
        %v973 = vld [vmem:[%s2 + $0xd8] sm:$0xf]
        %v974 = vld [vmem:[%s2 + $0xdc] sm:$0xf]
        %v975 = vld [vmem:[%s2 + $0xe0] sm:$0xf]
        %v976 = vld [vmem:[%s2 + $0xe4] sm:$0x3]
        %v977 = vld [vmem:[%s5] sm:$0x1]
        %v979 = vlaneseq
        %v980 = vshrl.u32 %v979, 7
        %v981 = vsub.s32 0, %v980
        %v982 = vrot.slane %v977, %v981
        %v1042 = vunpack.c.l.b16 %v919
        %v1043 = vunpack.c.l.b16 %v920
        %v1044 = vunpack.c.l.b16 %v921
        %v1045 = vunpack.c.l.b16 %v922
        %v1046 = vunpack.c.l.b16 %v923
        %v1047 = vunpack.c.l.b16 %v924
        %v1048 = vunpack.c.l.b16 %v925
        %v1049 = vunpack.c.l.b16 %v926
        %v1050 = vunpack.c.l.b16 %v927
        %v1051 = vunpack.c.l.b16 %v928
        %v1052 = vunpack.c.l.b16 %v929
        %v1053 = vunpack.c.l.b16 %v930
        %v1054 = vunpack.c.l.b16 %v931
        %v1055 = vunpack.c.l.b16 %v932
        %v1056 = vunpack.c.l.b16 %v933
        %v1057 = vunpack.c.l.b16 %v934
        %v1058 = vunpack.c.l.b16 %v935
        %v1059 = vunpack.c.l.b16 %v936
        %v1060 = vunpack.c.l.b16 %v937
        %v1061 = vunpack.c.l.b16 %v938
        %v1062 = vunpack.c.l.b16 %v939
        %v1063 = vunpack.c.l.b16 %v940
        %v1064 = vunpack.c.l.b16 %v941
        %v1065 = vunpack.c.l.b16 %v942
        %v1066 = vunpack.c.l.b16 %v943
        %v1067 = vunpack.c.l.b16 %v944
        %v1068 = vunpack.c.l.b16 %v945
        %v1069 = vunpack.c.l.b16 %v946
        %v1070 = vunpack.c.l.b16 %v947
        %v1071 = vunpack.c.l.b16 %v948
        %v1072 = vunpack.c.l.b16 %v949
        %v1073 = vunpack.c.l.b16 %v950
        %v1074 = vunpack.c.l.b16 %v951
        %v1075 = vunpack.c.l.b16 %v952
        %v1076 = vunpack.c.l.b16 %v953
        %v1077 = vunpack.c.l.b16 %v954
        %v1078 = vunpack.c.l.b16 %v955
        %v1079 = vunpack.c.l.b16 %v956
        %v1080 = vunpack.c.l.b16 %v957
        %v1081 = vunpack.c.l.b16 %v958
        %v1082 = vunpack.c.l.b16 %v959
        %v1083 = vunpack.c.l.b16 %v960
        %v1084 = vunpack.c.l.b16 %v961
        %v1085 = vunpack.c.l.b16 %v962
        %v1086 = vunpack.c.l.b16 %v963
        %v1087 = vunpack.c.l.b16 %v964
        %v1088 = vunpack.c.l.b16 %v965
        %v1089 = vunpack.c.l.b16 %v966
        %v1090 = vunpack.c.l.b16 %v967
        %v1091 = vunpack.c.l.b16 %v968
        %v1092 = vunpack.c.l.b16 %v969
        %v1093 = vunpack.c.l.b16 %v970
        %v1094 = vunpack.c.l.b16 %v971
        %v1095 = vunpack.c.l.b16 %v972
        %v1096 = vunpack.c.l.b16 %v973
        %v1097 = vunpack.c.l.b16 %v974
        %v1098 = vunpack.c.l.b16 %v975
        %v1099 = vunpack.c.l.b16 %v976
        %v1100 = vpack.c.b16 %v1043, %v1042
        %v1101 = vpack.c.b16 %v1045, %v1044
        %v1102 = vpack.c.b16 %v1047, %v1046
        %v1103 = vpack.c.b16 %v1049, %v1048
        %v1104 = vpack.c.b16 %v1051, %v1050
        %v1105 = vpack.c.b16 %v1053, %v1052
        %v1106 = vpack.c.b16 %v1055, %v1054
        %v1107 = vpack.c.b16 %v1057, %v1056
        %v1108 = vpack.c.b16 %v1059, %v1058
        %v1109 = vpack.c.b16 %v1061, %v1060
        %v1110 = vpack.c.b16 %v1063, %v1062
        %v1111 = vpack.c.b16 %v1065, %v1064
        %v1112 = vpack.c.b16 %v1067, %v1066
        %v1113 = vpack.c.b16 %v1069, %v1068
        %v1114 = vpack.c.b16 %v1071, %v1070
        %v1115 = vpack.c.b16 %v1073, %v1072
        %v1116 = vpack.c.b16 %v1075, %v1074
        %v1117 = vpack.c.b16 %v1077, %v1076
        %v1118 = vpack.c.b16 %v1079, %v1078
        %v1119 = vpack.c.b16 %v1081, %v1080
        %v1120 = vpack.c.b16 %v1083, %v1082
        %v1121 = vpack.c.b16 %v1085, %v1084
        %v1122 = vpack.c.b16 %v1087, %v1086
        %v1123 = vpack.c.b16 %v1089, %v1088
        %v1124 = vpack.c.b16 %v1091, %v1090
        %v1125 = vpack.c.b16 %v1093, %v1092
        %v1126 = vpack.c.b16 %v1095, %v1094
        %v1127 = vpack.c.b16 %v1097, %v1096
        %v1128 = vpack.c.b16 %v1099, %v1098
        %vm1157 = vcmask 621568
        %v1158 = vsel %vm1157, %v918, 0
        %vm1160 = vcmask 1045504
        %v1162 = vsel %vm1160, %v1128, 0
        %1164 = vmatprep.subr.bf16.mxu0 0
        %1165 = vmatpush1.bf16.msra.mxu0 %v1107
        %1166 = vmatprep.subr.bf16.mxu0 0
        %1167 = vmatpush1.bf16.msra.mxu0 %v1106
        %1168 = vmatprep.subr.bf16.mxu0 0
        %1169 = vmatpush1.bf16.msra.mxu0 %v1105
        %1170 = vmatprep.subr.bf16.mxu0 0
        %1171 = vmatpush1.bf16.msra.mxu0 %v1104
        %1172 = vmatprep.subr.bf16.mxu0 0
        %1173 = vmatpush1.bf16.msra.mxu0 %v1103
        %1174 = vmatprep.subr.bf16.mxu0 0
        %1175 = vmatpush1.bf16.msra.mxu0 %v1102
        %1176 = vmatprep.subr.bf16.mxu0 0
        %1177 = vmatpush1.bf16.msra.mxu0 %v1101
        %1178 = vmatprep.subr.bf16.mxu0 0
        %1179 = vmatpush1.bf16.msra.mxu0 %v1100
        %1180 = vmatprep.subr.bf16.mxu0 0
        %1181 = vmatpush2.bf16.msra.mxu0 %v1115
        %1182 = vmatprep.subr.bf16.mxu0 0
        %1183 = vmatpush2.bf16.msra.mxu0 %v1114
        %1184 = vmatprep.subr.bf16.mxu0 0
        %1185 = vmatpush2.bf16.msra.mxu0 %v1113
        %1186 = vmatprep.subr.bf16.mxu0 0
        %1187 = vmatpush2.bf16.msra.mxu0 %v1112
        %1188 = vmatprep.subr.bf16.mxu0 0
        %1189 = vmatpush2.bf16.msra.mxu0 %v1111
        %1190 = vmatprep.subr.bf16.mxu0 0
        %1191 = vmatpush2.bf16.msra.mxu0 %v1110
        %1192 = vmatprep.subr.bf16.mxu0 0
        %1193 = vmatpush2.bf16.msra.mxu0 %v1109
        %1194 = vmatprep.subr.bf16.mxu0 0
        %1195 = vmatpush2.bf16.msra.mxu0 %v1108
        %1196 = vmatprep.mubr.bf16.mxu0 %v910
        %1197 = vmatmul.mubr.bf16.gmra.mxu0 %v906
        %v1198 = vpop.f32.mrf.mxu0
        %v1199 = vadd.f32 %v982, %v1198
        %v1200 = vpop.f32.mrf.mxu0
        %v1201 = vpop.f32.mrf.mxu0
        %v1202 = vpop.f32.mrf.mxu0
        %1203 = vdwg.mxu0
        %1204 = vmatprep.subr.bf16.mxu0 0
        %1205 = vmatpush1.bf16.msra.mxu0 %v1123
        %1206 = vmatprep.subr.bf16.mxu0 0
        %1207 = vmatpush1.bf16.msra.mxu0 %v1122
        %1208 = vmatprep.subr.bf16.mxu0 0
        %1209 = vmatpush1.bf16.msra.mxu0 %v1121
        %1210 = vmatprep.subr.bf16.mxu0 0
        %1211 = vmatpush1.bf16.msra.mxu0 %v1120
        %1212 = vmatprep.subr.bf16.mxu0 0
        %1213 = vmatpush1.bf16.msra.mxu0 %v1119
        %1214 = vmatprep.subr.bf16.mxu0 0
        %1215 = vmatpush1.bf16.msra.mxu0 %v1118
        %1216 = vmatprep.subr.bf16.mxu0 0
        %1217 = vmatpush1.bf16.msra.mxu0 %v1117
        %1218 = vmatprep.subr.bf16.mxu0 0
        %1219 = vmatpush1.bf16.msra.mxu0 %v1116
        %1220 = vmatprep.subr.bf16.mxu0 0
        %1221 = vmatpush2.bf16.msra.mxu0 0
        %1222 = vmatprep.subr.bf16.mxu0 0
        %1223 = vmatpush2.bf16.msra.mxu0 0
        %1224 = vmatprep.subr.bf16.mxu0 0
        %1225 = vmatpush2.bf16.msra.mxu0 0
        %1226 = vmatprep.subr.bf16.mxu0 0
        %1227 = vmatpush2.bf16.msra.mxu0 %v1162
        %1228 = vmatprep.subr.bf16.mxu0 0
        %1229 = vmatpush2.bf16.msra.mxu0 %v1127
        %1230 = vmatprep.subr.bf16.mxu0 0
        %1231 = vmatpush2.bf16.msra.mxu0 %v1126
        %1232 = vmatprep.subr.bf16.mxu0 0
        %1233 = vmatpush2.bf16.msra.mxu0 %v1125
        %1234 = vmatprep.subr.bf16.mxu0 0
        %1235 = vmatpush2.bf16.msra.mxu0 %v1124
        %1236 = vmatprep.mubr.bf16.mxu0 %v1158
        %1237 = vmatmul.mubr.bf16.gmra.mxu0 %v914
        %v1238 = vpop.f32.mrf.mxu0
        %v1239 = vadd.f32 %v1199, %v1238
        %v1240 = vpop.f32.mrf.mxu0
        %v1241 = vpop.f32.mrf.mxu0
        %v1242 = vpop.f32.mrf.mxu0
        %1243 = vdwg.mxu0
        %vm1244 = vcmask 519168
        %1245 = vst.msk [vmem:[%s367] sm:$0xf] %vm1244, %v1239
        %v1246 = vld [vmem:[%s383] sm:$0x1]
        %v1247 = vld [vmem:[%s383] sm:$0x3]
        %v1248 = vld [vmem:[%s383] sm:$0x2]
        %v1249 = vld [vmem:[%s383] sm:$0x6]
        %v1250 = vld [vmem:[%s383] sm:$0x4]
        %v1252 = vunpack.c.l.b16 %v1247
        %v1253 = vpack.c.b16 %v1252, %v1252
        %v1255 = vshrl.u32 %v1253, 16
        %v1257 = vshll.u32 %v1253, 16
        %v1259 = vrot.slane %v1257, 1
        %v1260 = vor.u32 %v1255, %v1259
        %1261 = vrot.lane.b32.xlu0 %v1260, 116
        %v1262 = vpop.permute.xlu0 %1261
        %v1264 = vunpack.c.l.b16 %v1248
        %v1265 = vpack.c.b16 %v1264, %v1264
        %v1266 = vrot.slane %v1265, 1
        %1267 = vrot.lane.b32.xlu0 %v1266, 104
        %v1268 = vpop.permute.xlu0 %1267
        %v1270 = vunpack.c.l.b16 %v1249
        %v1271 = vpack.c.b16 %v1270, %v1270
        %v1273 = vshrl.u32 %v1271, 16
        %v1275 = vrot.slane %v1273, 1
        %v1276 = vshll.u32 %v1271, 16
        %v1278 = vrot.slane %v1276, 2
        %v1279 = vor.u32 %v1275, %v1278
        %1280 = vrot.lane.b32.xlu0 %v1279, 92
        %v1281 = vpop.permute.xlu0 %1280
        %v1283 = vunpack.c.l.b16 %v1250
        %v1284 = vpack.c.b16 %v1283, %v1283
        %v1285 = vrot.slane %v1284, 2
        %1286 = vrot.lane.b32.xlu0 %v1285, 80
        %v1287 = vpop.permute.xlu0 %1286
        %vm1288 = vcmask 949248
        %v1291 = vsel %vm1288, %v1246, %v1262
        %vm1292 = vcmask 850944
        %v1294 = vsel %vm1292, %v1262, %v1268
        %v1296 = vsel %vm803, %v1268, %v1281
        %v1298 = vsel %vm438, %v1281, %v1287
        %v1299 = vld [vmem:[%s383 + $0x4] sm:$0x8]
        %v1300 = vld [vmem:[%s383 + $0x8] sm:$0x1]
        %v1301 = vld [vmem:[%s383 + $0x8] sm:$0x3]
        %v1302 = vld [vmem:[%s383 + $0x8] sm:$0x2]
        %v1303 = vld [vmem:[%s383 + $0x8] sm:$0x6]
        %v1306 = vunpack.c.l.b16 %v1299
        %v1307 = vunpack.c.l.b16 %v1300
        %v1308 = vpack.c.b16 %v1307, %v1306
        %v1309 = vpack.c.b16 %v1307, %v1307
        %v1311 = vshrl.u32 %v1309, 16
        %v1313 = vrot.slane %v1311, 4
        %v1314 = vshll.u32 %v1309, 16
        %v1316 = vrot.slane %v1314, 5
        %v1317 = vor.u32 %v1313, %v1316
        %1318 = vrot.lane.b32.xlu0 %v1317, 116
        %v1319 = vpop.permute.xlu0 %1318
        %v1321 = vunpack.c.l.b16 %v1301
        %v1322 = vpack.c.b16 %v1321, %v1321
        %v1323 = vrot.slane %v1322, 5
        %1324 = vrot.lane.b32.xlu0 %v1323, 104
        %v1325 = vpop.permute.xlu0 %1324
        %v1327 = vunpack.c.l.b16 %v1302
        %v1328 = vpack.c.b16 %v1327, %v1327
        %v1330 = vshrl.u32 %v1328, 16
        %v1332 = vrot.slane %v1330, 5
        %v1333 = vshll.u32 %v1328, 16
        %v1335 = vrot.slane %v1333, 6
        %v1336 = vor.u32 %v1332, %v1335
        %1337 = vrot.lane.b32.xlu0 %v1336, 92
        %v1338 = vpop.permute.xlu0 %1337
        %v1340 = vunpack.c.l.b16 %v1303
        %v1341 = vpack.c.b16 %v1340, %v1340
        %v1342 = vrot.slane %v1341, 6
        %1343 = vrot.lane.b32.xlu0 %v1342, 80
        %v1344 = vpop.permute.xlu0 %1343
        %v1347 = vsel %vm1288, %v1308, %v1319
        %v1349 = vsel %vm1292, %v1319, %v1325
        %v1351 = vsel %vm803, %v1325, %v1338
        %v1353 = vsel %vm438, %v1338, %v1344
        %v1354 = vshrl.u32 %v1347, 16
        %v1356 = vrot.slane %v1354, 2
        %v1357 = vshll.u32 %v1347, 16
        %v1359 = vrot.slane %v1357, 3
        %v1360 = vor.u32 %v1356, %v1359
        %v1361 = vshrl.u32 %v1349, 16
        %v1363 = vrot.slane %v1361, 2
        %v1364 = vshll.u32 %v1349, 16
        %v1366 = vrot.slane %v1364, 3
        %v1367 = vor.u32 %v1363, %v1366
        %v1368 = vshrl.u32 %v1351, 16
        %v1370 = vrot.slane %v1368, 2
        %v1371 = vshll.u32 %v1351, 16
        %v1373 = vrot.slane %v1371, 3
        %v1374 = vor.u32 %v1370, %v1373
        %v1375 = vshrl.u32 %v1353, 16
        %v1377 = vrot.slane %v1375, 2
        %v1378 = vshll.u32 %v1353, 16
        %v1380 = vrot.slane %v1378, 3
        %v1381 = vor.u32 %v1377, %v1380
        %v1382 = vshrl.u32 %v1344, 16
        %v1384 = vrot.slane %v1382, 2
        %v1385 = vshll.u32 %v1344, 16
        %v1387 = vrot.slane %v1385, 3
        %v1388 = vor.u32 %v1384, %v1387
        %v1390 = vsel %vm903, %v1291, %v1360
        %v1393 = vsel %vm903, %v1294, %v1367
        %v1396 = vsel %vm903, %v1296, %v1374
        %v1399 = vsel %vm903, %v1298, %v1381
        %v1402 = vsel %vm903, %v1287, %v1388
        %v1403 = vld [vmem:[%s3] sm:$0xf]
        %v1404 = vld [vmem:[%s3 + $0x4] sm:$0xf]
        %v1405 = vld [vmem:[%s3 + $0x8] sm:$0xf]
        %v1406 = vld [vmem:[%s3 + $0xc] sm:$0xf]
        %v1407 = vld [vmem:[%s3 + $0x10] sm:$0xf]
        %v1408 = vld [vmem:[%s3 + $0x14] sm:$0xf]
        %v1409 = vld [vmem:[%s3 + $0x18] sm:$0xf]
        %v1410 = vld [vmem:[%s3 + $0x1c] sm:$0xf]
        %v1411 = vld [vmem:[%s3 + $0x20] sm:$0xf]
        %v1412 = vld [vmem:[%s3 + $0x24] sm:$0xf]
        %v1413 = vld [vmem:[%s3 + $0x28] sm:$0xf]
        %v1414 = vld [vmem:[%s3 + $0x2c] sm:$0xf]
        %v1415 = vld [vmem:[%s3 + $0x30] sm:$0xf]
        %v1416 = vld [vmem:[%s3 + $0x34] sm:$0xf]
        %v1417 = vld [vmem:[%s3 + $0x38] sm:$0xf]
        %v1418 = vld [vmem:[%s3 + $0x3c] sm:$0xf]
        %v1419 = vld [vmem:[%s3 + $0x40] sm:$0xf]
        %v1420 = vld [vmem:[%s3 + $0x44] sm:$0xf]
        %v1421 = vld [vmem:[%s3 + $0x48] sm:$0xf]
        %v1422 = vld [vmem:[%s3 + $0x4c] sm:$0xf]
        %v1423 = vld [vmem:[%s3 + $0x50] sm:$0xf]
        %v1424 = vld [vmem:[%s3 + $0x54] sm:$0xf]
        %v1425 = vld [vmem:[%s3 + $0x58] sm:$0xf]
        %v1426 = vld [vmem:[%s3 + $0x5c] sm:$0xf]
        %v1427 = vld [vmem:[%s3 + $0x60] sm:$0xf]
        %v1428 = vld [vmem:[%s3 + $0x64] sm:$0xf]
        %v1429 = vld [vmem:[%s3 + $0x68] sm:$0xf]
        %v1430 = vld [vmem:[%s3 + $0x6c] sm:$0xf]
        %v1431 = vld [vmem:[%s3 + $0x70] sm:$0xf]
        %v1432 = vld [vmem:[%s3 + $0x74] sm:$0xf]
        %v1433 = vld [vmem:[%s3 + $0x78] sm:$0xf]
        %v1434 = vld [vmem:[%s3 + $0x7c] sm:$0xf]
        %v1435 = vld [vmem:[%s3 + $0x80] sm:$0xf]
        %v1436 = vld [vmem:[%s3 + $0x84] sm:$0xf]
        %v1437 = vld [vmem:[%s3 + $0x88] sm:$0xf]
        %v1438 = vld [vmem:[%s3 + $0x8c] sm:$0xf]
        %v1439 = vld [vmem:[%s3 + $0x90] sm:$0xf]
        %v1440 = vld [vmem:[%s3 + $0x94] sm:$0xf]
        %v1441 = vld [vmem:[%s3 + $0x98] sm:$0xf]
        %v1442 = vld [vmem:[%s3 + $0x9c] sm:$0xf]
        %v1443 = vld [vmem:[%s3 + $0xa0] sm:$0xf]
        %v1444 = vld [vmem:[%s3 + $0xa4] sm:$0xf]
        %v1445 = vld [vmem:[%s3 + $0xa8] sm:$0xf]
        %v1446 = vld [vmem:[%s3 + $0xac] sm:$0xf]
        %v1447 = vld [vmem:[%s3 + $0xb0] sm:$0xf]
        %v1448 = vld [vmem:[%s3 + $0xb4] sm:$0xf]
        %v1449 = vld [vmem:[%s3 + $0xb8] sm:$0xf]
        %v1450 = vld [vmem:[%s3 + $0xbc] sm:$0xf]
        %v1451 = vld [vmem:[%s3 + $0xc0] sm:$0xf]
        %v1452 = vld [vmem:[%s3 + $0xc4] sm:$0xf]
        %v1453 = vld [vmem:[%s3 + $0xc8] sm:$0xf]
        %v1454 = vld [vmem:[%s3 + $0xcc] sm:$0xf]
        %v1455 = vld [vmem:[%s3 + $0xd0] sm:$0xf]
        %v1456 = vld [vmem:[%s3 + $0xd4] sm:$0xf]
        %v1457 = vld [vmem:[%s3 + $0xd8] sm:$0xf]
        %v1458 = vld [vmem:[%s3 + $0xdc] sm:$0xf]
        %v1459 = vld [vmem:[%s3 + $0xe0] sm:$0xf]
        %v1460 = vld [vmem:[%s3 + $0xe4] sm:$0xf]
        %v1461 = vld [vmem:[%s3 + $0xe8] sm:$0xf]
        %v1462 = vld [vmem:[%s3 + $0xec] sm:$0xf]
        %v1463 = vld [vmem:[%s3 + $0xf0] sm:$0xf]
        %v1464 = vld [vmem:[%s3 + $0xf4] sm:$0xf]
        %v1465 = vld [vmem:[%s3 + $0xf8] sm:$0xf]
        %v1466 = vld [vmem:[%s3 + $0xfc] sm:$0xf]
        %v1467 = vld [vmem:[%s3 + $0x100] sm:$0xf]
        %v1468 = vld [vmem:[%s3 + $0x104] sm:$0xf]
        %v1469 = vld [vmem:[%s3 + $0x108] sm:$0xf]
        %v1470 = vld [vmem:[%s3 + $0x10c] sm:$0xf]
        %v1471 = vld [vmem:[%s3 + $0x110] sm:$0xf]
        %v1472 = vld [vmem:[%s3 + $0x114] sm:$0xf]
        %v1473 = vld [vmem:[%s3 + $0x118] sm:$0xf]
        %v1474 = vld [vmem:[%s3 + $0x11c] sm:$0xf]
        %v1475 = vld [vmem:[%s3 + $0x120] sm:$0x3]
        %v1476 = vld [vmem:[%s6] sm:$0x1]
        %v1478 = vlaneseq
        %v1479 = vshrl.u32 %v1478, 7
        %v1480 = vsub.s32 0, %v1479
        %v1481 = vrot.slane %v1476, %v1480
        %v1556 = vunpack.c.l.b16 %v1403
        %v1557 = vunpack.c.l.b16 %v1404
        %v1558 = vunpack.c.l.b16 %v1405
        %v1559 = vunpack.c.l.b16 %v1406
        %v1560 = vunpack.c.l.b16 %v1407
        %v1561 = vunpack.c.l.b16 %v1408
        %v1562 = vunpack.c.l.b16 %v1409
        %v1563 = vunpack.c.l.b16 %v1410
        %v1564 = vunpack.c.l.b16 %v1411
        %v1565 = vunpack.c.l.b16 %v1412
        %v1566 = vunpack.c.l.b16 %v1413
        %v1567 = vunpack.c.l.b16 %v1414
        %v1568 = vunpack.c.l.b16 %v1415
        %v1569 = vunpack.c.l.b16 %v1416
        %v1570 = vunpack.c.l.b16 %v1417
        %v1571 = vunpack.c.l.b16 %v1418
        %v1572 = vunpack.c.l.b16 %v1419
        %v1573 = vunpack.c.l.b16 %v1420
        %v1574 = vunpack.c.l.b16 %v1421
        %v1575 = vunpack.c.l.b16 %v1422
        %v1576 = vunpack.c.l.b16 %v1423
        %v1577 = vunpack.c.l.b16 %v1424
        %v1578 = vunpack.c.l.b16 %v1425
        %v1579 = vunpack.c.l.b16 %v1426
        %v1580 = vunpack.c.l.b16 %v1427
        %v1581 = vunpack.c.l.b16 %v1428
        %v1582 = vunpack.c.l.b16 %v1429
        %v1583 = vunpack.c.l.b16 %v1430
        %v1584 = vunpack.c.l.b16 %v1431
        %v1585 = vunpack.c.l.b16 %v1432
        %v1586 = vunpack.c.l.b16 %v1433
        %v1587 = vunpack.c.l.b16 %v1434
        %v1588 = vunpack.c.l.b16 %v1435
        %v1589 = vunpack.c.l.b16 %v1436
        %v1590 = vunpack.c.l.b16 %v1437
        %v1591 = vunpack.c.l.b16 %v1438
        %v1592 = vunpack.c.l.b16 %v1439
        %v1593 = vunpack.c.l.b16 %v1440
        %v1594 = vunpack.c.l.b16 %v1441
        %v1595 = vunpack.c.l.b16 %v1442
        %v1596 = vunpack.c.l.b16 %v1443
        %v1597 = vunpack.c.l.b16 %v1444
        %v1598 = vunpack.c.l.b16 %v1445
        %v1599 = vunpack.c.l.b16 %v1446
        %v1600 = vunpack.c.l.b16 %v1447
        %v1601 = vunpack.c.l.b16 %v1448
        %v1602 = vunpack.c.l.b16 %v1449
        %v1603 = vunpack.c.l.b16 %v1450
        %v1604 = vunpack.c.l.b16 %v1451
        %v1605 = vunpack.c.l.b16 %v1452
        %v1606 = vunpack.c.l.b16 %v1453
        %v1607 = vunpack.c.l.b16 %v1454
        %v1608 = vunpack.c.l.b16 %v1455
        %v1609 = vunpack.c.l.b16 %v1456
        %v1610 = vunpack.c.l.b16 %v1457
        %v1611 = vunpack.c.l.b16 %v1458
        %v1612 = vunpack.c.l.b16 %v1459
        %v1613 = vunpack.c.l.b16 %v1460
        %v1614 = vunpack.c.l.b16 %v1461
        %v1615 = vunpack.c.l.b16 %v1462
        %v1616 = vunpack.c.l.b16 %v1463
        %v1617 = vunpack.c.l.b16 %v1464
        %v1618 = vunpack.c.l.b16 %v1465
        %v1619 = vunpack.c.l.b16 %v1466
        %v1620 = vunpack.c.l.b16 %v1467
        %v1621 = vunpack.c.l.b16 %v1468
        %v1622 = vunpack.c.l.b16 %v1469
        %v1623 = vunpack.c.l.b16 %v1470
        %v1624 = vunpack.c.l.b16 %v1471
        %v1625 = vunpack.c.l.b16 %v1472
        %v1626 = vunpack.c.l.b16 %v1473
        %v1627 = vunpack.c.l.b16 %v1474
        %v1628 = vunpack.c.l.b16 %v1475
        %v1629 = vpack.c.b16 %v1557, %v1556
        %v1630 = vpack.c.b16 %v1559, %v1558
        %v1631 = vpack.c.b16 %v1561, %v1560
        %v1632 = vpack.c.b16 %v1563, %v1562
        %v1633 = vpack.c.b16 %v1565, %v1564
        %v1634 = vpack.c.b16 %v1567, %v1566
        %v1635 = vpack.c.b16 %v1569, %v1568
        %v1636 = vpack.c.b16 %v1571, %v1570
        %v1637 = vpack.c.b16 %v1573, %v1572
        %v1638 = vpack.c.b16 %v1575, %v1574
        %v1639 = vpack.c.b16 %v1577, %v1576
        %v1640 = vpack.c.b16 %v1579, %v1578
        %v1641 = vpack.c.b16 %v1581, %v1580
        %v1642 = vpack.c.b16 %v1583, %v1582
        %v1643 = vpack.c.b16 %v1585, %v1584
        %v1644 = vpack.c.b16 %v1587, %v1586
        %v1645 = vpack.c.b16 %v1589, %v1588
        %v1646 = vpack.c.b16 %v1591, %v1590
        %v1647 = vpack.c.b16 %v1593, %v1592
        %v1648 = vpack.c.b16 %v1595, %v1594
        %v1649 = vpack.c.b16 %v1597, %v1596
        %v1650 = vpack.c.b16 %v1599, %v1598
        %v1651 = vpack.c.b16 %v1601, %v1600
        %v1652 = vpack.c.b16 %v1603, %v1602
        %v1653 = vpack.c.b16 %v1605, %v1604
        %v1654 = vpack.c.b16 %v1607, %v1606
        %v1655 = vpack.c.b16 %v1609, %v1608
        %v1656 = vpack.c.b16 %v1611, %v1610
        %v1657 = vpack.c.b16 %v1613, %v1612
        %v1658 = vpack.c.b16 %v1615, %v1614
        %v1659 = vpack.c.b16 %v1617, %v1616
        %v1660 = vpack.c.b16 %v1619, %v1618
        %v1661 = vpack.c.b16 %v1621, %v1620
        %v1662 = vpack.c.b16 %v1623, %v1622
        %v1663 = vpack.c.b16 %v1625, %v1624
        %v1664 = vpack.c.b16 %v1627, %v1626
        %v1665 = vpack.c.b16 %v1628, %v1628
        %vm1702 = vcmask 556032
        %v1703 = vsel %vm1702, %v1402, 0
        %vm1705 = vcmask 1041408
        %v1707 = vsel %vm1705, %v1665, 0
        %1709 = vmatprep.subr.bf16.mxu0 0
        %1710 = vmatpush1.bf16.msra.mxu0 %v1636
        %1711 = vmatprep.subr.bf16.mxu0 0
        %1712 = vmatpush1.bf16.msra.mxu0 %v1635
        %1713 = vmatprep.subr.bf16.mxu0 0
        %1714 = vmatpush1.bf16.msra.mxu0 %v1634
        %1715 = vmatprep.subr.bf16.mxu0 0
        %1716 = vmatpush1.bf16.msra.mxu0 %v1633
        %1717 = vmatprep.subr.bf16.mxu0 0
        %1718 = vmatpush1.bf16.msra.mxu0 %v1632
        %1719 = vmatprep.subr.bf16.mxu0 0
        %1720 = vmatpush1.bf16.msra.mxu0 %v1631
        %1721 = vmatprep.subr.bf16.mxu0 0
        %1722 = vmatpush1.bf16.msra.mxu0 %v1630
        %1723 = vmatprep.subr.bf16.mxu0 0
        %1724 = vmatpush1.bf16.msra.mxu0 %v1629
        %1725 = vmatprep.subr.bf16.mxu0 0
        %1726 = vmatpush2.bf16.msra.mxu0 %v1644
        %1727 = vmatprep.subr.bf16.mxu0 0
        %1728 = vmatpush2.bf16.msra.mxu0 %v1643
        %1729 = vmatprep.subr.bf16.mxu0 0
        %1730 = vmatpush2.bf16.msra.mxu0 %v1642
        %1731 = vmatprep.subr.bf16.mxu0 0
        %1732 = vmatpush2.bf16.msra.mxu0 %v1641
        %1733 = vmatprep.subr.bf16.mxu0 0
        %1734 = vmatpush2.bf16.msra.mxu0 %v1640
        %1735 = vmatprep.subr.bf16.mxu0 0
        %1736 = vmatpush2.bf16.msra.mxu0 %v1639
        %1737 = vmatprep.subr.bf16.mxu0 0
        %1738 = vmatpush2.bf16.msra.mxu0 %v1638
        %1739 = vmatprep.subr.bf16.mxu0 0
        %1740 = vmatpush2.bf16.msra.mxu0 %v1637
        %1741 = vmatprep.mubr.bf16.mxu0 %v1393
        %1742 = vmatmul.mubr.bf16.gmra.mxu0 %v1390
        %v1743 = vpop.f32.mrf.mxu0
        %v1744 = vadd.f32 %v1481, %v1743
        %v1745 = vpop.f32.mrf.mxu0
        %v1746 = vpop.f32.mrf.mxu0
        %v1747 = vpop.f32.mrf.mxu0
        %1748 = vdwg.mxu0
        %1749 = vmatprep.subr.bf16.mxu0 0
        %1750 = vmatpush1.bf16.msra.mxu0 %v1652
        %1751 = vmatprep.subr.bf16.mxu0 0
        %1752 = vmatpush1.bf16.msra.mxu0 %v1651
        %1753 = vmatprep.subr.bf16.mxu0 0
        %1754 = vmatpush1.bf16.msra.mxu0 %v1650
        %1755 = vmatprep.subr.bf16.mxu0 0
        %1756 = vmatpush1.bf16.msra.mxu0 %v1649
        %1757 = vmatprep.subr.bf16.mxu0 0
        %1758 = vmatpush1.bf16.msra.mxu0 %v1648
        %1759 = vmatprep.subr.bf16.mxu0 0
        %1760 = vmatpush1.bf16.msra.mxu0 %v1647
        %1761 = vmatprep.subr.bf16.mxu0 0
        %1762 = vmatpush1.bf16.msra.mxu0 %v1646
        %1763 = vmatprep.subr.bf16.mxu0 0
        %1764 = vmatpush1.bf16.msra.mxu0 %v1645
        %1765 = vmatprep.subr.bf16.mxu0 0
        %1766 = vmatpush2.bf16.msra.mxu0 %v1660
        %1767 = vmatprep.subr.bf16.mxu0 0
        %1768 = vmatpush2.bf16.msra.mxu0 %v1659
        %1769 = vmatprep.subr.bf16.mxu0 0
        %1770 = vmatpush2.bf16.msra.mxu0 %v1658
        %1771 = vmatprep.subr.bf16.mxu0 0
        %1772 = vmatpush2.bf16.msra.mxu0 %v1657
        %1773 = vmatprep.subr.bf16.mxu0 0
        %1774 = vmatpush2.bf16.msra.mxu0 %v1656
        %1775 = vmatprep.subr.bf16.mxu0 0
        %1776 = vmatpush2.bf16.msra.mxu0 %v1655
        %1777 = vmatprep.subr.bf16.mxu0 0
        %1778 = vmatpush2.bf16.msra.mxu0 %v1654
        %1779 = vmatprep.subr.bf16.mxu0 0
        %1780 = vmatpush2.bf16.msra.mxu0 %v1653
        %1781 = vmatprep.mubr.bf16.mxu0 %v1399
        %1782 = vmatmul.mubr.bf16.gmra.mxu0 %v1396
        %v1783 = vpop.f32.mrf.mxu0
        %v1784 = vadd.f32 %v1744, %v1783
        %v1785 = vpop.f32.mrf.mxu0
        %v1786 = vpop.f32.mrf.mxu0
        %v1787 = vpop.f32.mrf.mxu0
        %1788 = vdwg.mxu0
        %1789 = vmatprep.subr.bf16.mxu0 0
        %1790 = vmatpush1.bf16.msra.mxu0 0
        %1791 = vmatprep.subr.bf16.mxu0 0
        %1792 = vmatpush1.bf16.msra.mxu0 0
        %1793 = vmatprep.subr.bf16.mxu0 0
        %1794 = vmatpush1.bf16.msra.mxu0 0
        %1795 = vmatprep.subr.bf16.mxu0 0
        %1796 = vmatpush1.bf16.msra.mxu0 %v1707
        %1797 = vmatprep.subr.bf16.mxu0 0
        %1798 = vmatpush1.bf16.msra.mxu0 %v1664
        %1799 = vmatprep.subr.bf16.mxu0 0
        %1800 = vmatpush1.bf16.msra.mxu0 %v1663
        %1801 = vmatprep.subr.bf16.mxu0 0
        %1802 = vmatpush1.bf16.msra.mxu0 %v1662
        %1803 = vmatprep.subr.bf16.mxu0 0
        %1804 = vmatpush1.bf16.msra.mxu0 %v1661
        %1805 = vmatprep.subr.bf16.mxu0 0
        %1806 = vmatpush2.bf16.msra.mxu0 0
        %1807 = vmatprep.subr.bf16.mxu0 0
        %1808 = vmatpush2.bf16.msra.mxu0 0
        %1809 = vmatprep.subr.bf16.mxu0 0
        %1810 = vmatpush2.bf16.msra.mxu0 0
        %1811 = vmatprep.subr.bf16.mxu0 0
        %1812 = vmatpush2.bf16.msra.mxu0 0
        %1813 = vmatprep.subr.bf16.mxu0 0
        %1814 = vmatpush2.bf16.msra.mxu0 0
        %1815 = vmatprep.subr.bf16.mxu0 0
        %1816 = vmatpush2.bf16.msra.mxu0 0
        %1817 = vmatprep.subr.bf16.mxu0 0
        %1818 = vmatpush2.bf16.msra.mxu0 0
        %1819 = vmatprep.subr.bf16.mxu0 0
        %1820 = vmatpush2.bf16.msra.mxu0 0
        %1821 = vmatprep.mubr.bf16.mxu0 0
        %1822 = vmatmul.mubr.bf16.gmra.mxu0 %v1703
        %v1823 = vpop.f32.mrf.mxu0
        %v1824 = vadd.f32 %v1784, %v1823
        %v1825 = vpop.f32.mrf.mxu0
        %v1826 = vpop.f32.mrf.mxu0
        %v1827 = vpop.f32.mrf.mxu0
        %1828 = vdwg.mxu0
        %vm1829 = vcmask 257024
        %1830 = vst.msk [vmem:[%s374] sm:$0xf] %vm1829, %v1824
        %p1831 = scmp.lt.s32.totalorder %s31, 1
        %s1832 = scalar_select %p1831, %s31, 1
        %p1833 = scmp.lt.s32.totalorder %s32, 0
        %s1834 = scalar_select %p1833, %s32, 0
        %s1835 = smul.addr %s1832, 2
        %s1836 = sadd.s32 %s1834, %s1835
        %s1837 = smul.addr %s1836, 8
        %s1838 = scalar_lea.vmem %s7, %s1837
        %s1839 = sand.u32 %s231, 1
        %s1840 = scalar_lea.sflag [#allocation3], %s1839
        %s1841 = sand.u32 %s231, 1
        %s1842 = smul.addr %s1841, 4
        %s1843 = scalar_lea.vmem [#allocation2], %s1842
        %s1844 = sand.u32 %s259, 1
        %s1845 = scalar_lea.sflag [#allocation5], %s1844
        %s1846 = sand.u32 %s259, 1
        %s1847 = smul.addr %s1846, 4
        %s1848 = scalar_lea.vmem [#allocation4], %s1847
        // Predicated region
        $region49: #{tpu_custom_call.1} parent=47 // pred_check
          %p1849 = pneg %p213
        $region50: #{tpu_custom_call.1} parent=47 // pred_check_branch
          %1851 = sbr.rel (%p1849) target = $region52
        $region51: #{tpu_custom_call.1} parent=47 // pred_region
          _
        $region52: #{tpu_custom_call.1} parent=47 // pred_fallthru
          _
        // Predicated region
        $region53: #{tpu_custom_call.1} parent=47 // pred_check
          %p1852 = pneg %p241
        $region54: #{tpu_custom_call.1} parent=47 // pred_check_branch
          %1854 = sbr.rel (%p1852) target = $region56
        $region55: #{tpu_custom_call.1} parent=47 // pred_region
          %s1856 = ssub.s32 64, 64
          %1857 = vsyncadd %s1840, %s1856
          %s1858 = sadd.s32 %s32, %s31
          %s1859 = smul.addr %s1858, 64
          %s1860 = scalar_lea.hbm %s8, %s1859
          %s1862 = sshll.u32 %s1843, 4
          %s1863 = int_to_ptr.vmem [resolvable:$true] %s1862
          %1865 = dma.vmem_to_hbm [thread:$0]  %s1863, 64, %s1860, %s1840
        $region56: #{tpu_custom_call.1} parent=47 // pred_fallthru
          _
        // Predicated region
        $region57: #{tpu_custom_call.1} parent=47 // pred_check
          %p1866 = pneg %p269
        $region58: #{tpu_custom_call.1} parent=47 // pred_check_branch
          %1868 = sbr.rel (%p1866) target = $region60
        $region59: #{tpu_custom_call.1} parent=47 // pred_region
          %s1870 = ssub.s32 64, 64
          %1871 = vsyncadd %s1845, %s1870
          %s1872 = sadd.s32 %s32, %s31
          %s1873 = smul.addr %s1872, 64
          %s1874 = scalar_lea.hbm %s9, %s1873
          %s1876 = sshll.u32 %s1848, 4
          %s1877 = int_to_ptr.vmem [resolvable:$true] %s1876
          %1879 = dma.vmem_to_hbm [thread:$0]  %s1877, 64, %s1874, %s1845
        $region60: #{tpu_custom_call.1} parent=47 // pred_fallthru
          _
      $region48: #{tpu_custom_call.1} parent=5 // pred_fallthru
        _
      %p1880 = scmp.le.s32.totalorder 2, %s22
      // Predicated region
      $region61: #{tpu_custom_call.1} parent=5 // pred_check
        %p1881 = pneg %p1880
      $region62: #{tpu_custom_call.1} parent=5 // pred_check_branch
        %1883 = sbr.rel (%p1881) target = $region64
      $region63: #{tpu_custom_call.1} parent=5 // pred_region
        %s1884 = ssub.s32 %s22, 2
        // Predicated region
        $region65: #{tpu_custom_call.1} parent=63 // pred_check
          %p1885 = pneg %p219
        $region66: #{tpu_custom_call.1} parent=63 // pred_check_branch
          %1887 = sbr.rel (%p1885) target = $region68
        $region67: #{tpu_custom_call.1} parent=63 // pred_region
          %p1888 = scmp.lt.s32.totalorder %s33, 1
          %s1889 = scalar_select %p1888, %s33, 1
          %p1890 = scmp.lt.s32.totalorder %s34, 0
          %s1891 = scalar_select %p1890, %s34, 0
          %s1892 = smul.addr %s1889, 2
          %s1893 = sadd.s32 %s1891, %s1892
          %s1894 = smul.addr %s1893, 8
          %s1895 = scalar_lea.vmem %s7, %s1894
        $region68: #{tpu_custom_call.1} parent=63 // pred_fallthru
          _
        // Predicated region
        $region69: #{tpu_custom_call.1} parent=63 // pred_check
          %p1896 = pneg %p247
        $region70: #{tpu_custom_call.1} parent=63 // pred_check_branch
          %1898 = sbr.rel (%p1896) target = $region72
        $region71: #{tpu_custom_call.1} parent=63 // pred_region
          %s1899 = sand.u32 %s232, 1
          %s1900 = scalar_lea.sflag [#allocation3], %s1899
          %s1901 = sand.u32 %s232, 1
          %s1902 = smul.addr %s1901, 4
          %s1903 = scalar_lea.vmem [#allocation2], %s1902
          %1904 = dma.done %s1900, 64
        $region72: #{tpu_custom_call.1} parent=63 // pred_fallthru
          _
        // Predicated region
        $region73: #{tpu_custom_call.1} parent=63 // pred_check
          %p1905 = pneg %p275
        $region74: #{tpu_custom_call.1} parent=63 // pred_check_branch
          %1907 = sbr.rel (%p1905) target = $region76
        $region75: #{tpu_custom_call.1} parent=63 // pred_region
          %s1908 = sand.u32 %s260, 1
          %s1909 = scalar_lea.sflag [#allocation5], %s1908
          %s1910 = sand.u32 %s260, 1
          %s1911 = smul.addr %s1910, 4
          %s1912 = scalar_lea.vmem [#allocation4], %s1911
          %1913 = dma.done %s1909, 64
        $region76: #{tpu_custom_call.1} parent=63 // pred_fallthru
          _
      $region64: #{tpu_custom_call.1} parent=5 // pred_fallthru
        _
    $region6: #{tpu_custom_call.1} parent=1 // loop_footer
      %s26 = sadd.s32 1, %s22
    $region7: #{tpu_custom_call.1} parent=1 // loop_footer_branch
      %21 = sbr.rel target = $region3
    $region8: #{tpu_custom_call.1} parent=1 // loop_exit
      _
    %1914 = vsyncpa [#allocation3], 1
    %s1915 = scalar_lea.sflag [#allocation3], 1
    %1916 = vsyncpa %s1915, 1
    %1917 = vsyncpa [#allocation5], 1
    %s1918 = scalar_lea.sflag [#allocation5], 1
    %1919 = vsyncpa %s1918, 1

</llo_original>
